<compile_context>
chip_gen: v6e
topology: v6e:2x2x1
jax: 0.10.0
libtpu: 0.0.40
codegen_flags: <defaults>
</compile_context>

<pallas_src>
import jax
import jax.numpy as jnp
from jax import lax
from jax.experimental import pallas as pl
from jax.experimental.pallas import tpu as pltpu


def _elu(x):
    # nn.ELU(alpha=1.0): x if x > 0 else exp(x) - 1
    return jnp.where(x > 0, x, jnp.exp(x) - 1.0)


def _strided_cols(xp, tap, stride, t_out):
    """Columns tap, tap+stride, ..., tap+(t_out-1)*stride of xp (C, L_pad)."""
    if t_out == 1:
        return xp[:, tap:tap + 1]                       # static slice (fast path)
    # General strided subsample via a tiny selection-matrix matmul (only
    # traced when t_out > 1, which PyTorch's own add would reject anyway).
    l_pad = xp.shape[1]
    rows = lax.broadcasted_iota(jnp.int32, (l_pad, t_out), 0)
    cols = lax.broadcasted_iota(jnp.int32, (l_pad, t_out), 1)
    sel = (rows == tap + stride * cols).astype(jnp.float32)
    return jnp.dot(xp, sel, preferred_element_type=jnp.float32)


def _make_encoder_block_kernel(stride, t_in, t_ds):
    k_ds = 2 * stride
    pad_ds = stride // 2

    def kernel(x_ref, w1_ref, b1_ref, w2_ref, b2_ref, wd_ref, bd_ref,
               v_ref, g_ref, bn_ref, out_ref):
        c_in = x_ref.shape[1]
        c_out = out_ref.shape[1]
        x = x_ref[0].astype(jnp.float32)                         # (Cin, T)

        # ---- residual branch: Conv1d(k=3, p=1) -> ELU -> Conv1d(k=3, p=1) --
        zin = jnp.zeros((c_in, 1), jnp.float32)
        xp = jnp.concatenate([zin, x, zin], axis=1)              # (Cin, T+2)
        h = jnp.zeros((c_out, t_in), jnp.float32) + b1_ref[...].astype(jnp.float32)
        for k in range(3):                                       # static unroll
            h = h + jnp.dot(w1_ref[k].astype(jnp.float32), xp[:, k:k + t_in],
                            preferred_element_type=jnp.float32)
        h = _elu(h)

        zout = jnp.zeros((c_out, 1), jnp.float32)
        hp = jnp.concatenate([zout, h, zout], axis=1)            # (Cout, T+2)
        res = jnp.zeros((c_out, t_in), jnp.float32) + b2_ref[...].astype(jnp.float32)
        for k in range(3):
            res = res + jnp.dot(w2_ref[k].astype(jnp.float32), hp[:, k:k + t_in],
                                preferred_element_type=jnp.float32)

        # ---- shortcut branch: Conv1d(k=2s, stride=s, pad=s//2) -------------
        if pad_ds > 0:
            zpad = jnp.zeros((c_in, pad_ds), jnp.float32)
            xpd = jnp.concatenate([zpad, x, zpad], axis=1)       # (Cin, T+2*pad)
        else:
            xpd = x
        sc = jnp.zeros((c_out, t_ds), jnp.float32) + bd_ref[...].astype(jnp.float32)
        for k in range(k_ds):                                    # static unroll
            cols = _strided_cols(xpd, k, stride, t_ds)           # (Cin, t_ds)
            sc = sc + jnp.dot(wd_ref[k].astype(jnp.float32), cols,
                              preferred_element_type=jnp.float32)

        # ---- add (PyTorch broadcasting), weight-norm 1x1 conv, ELU ---------
        added = res + sc                                         # (Cout, t_out)

        v = v_ref[...].astype(jnp.float32)                       # (Cout, Cout)
        g = g_ref[...].astype(jnp.float32)                       # (Cout, 1)
        norm = jnp.sqrt(jnp.sum(v * v, axis=1, keepdims=True))   # (Cout, 1)
        w_n = v * (g / norm)                                     # weight_norm, dim=0
        y = jnp.dot(w_n, added, preferred_element_type=jnp.float32)
        y = y + bn_ref[...].astype(jnp.float32)
        out_ref[0] = _elu(y).astype(out_ref.dtype)

    return kernel


def encoder_block_forward(x, params, stride):
    """x: (B, Cin, T) 'NCT' layout (time on lanes). params use PyTorch layouts."""
    b, c_in, t_in = x.shape
    w1, b1 = params["w1"], params["b1"]                  # (Cout, Cin, 3), (Cout,)
    w2, b2 = params["w2"], params["b2"]                  # (Cout, Cout, 3), (Cout,)
    wd, bd = params["wd"], params["bd"]                  # (Cout, Cin, 2*stride), (Cout,)
    v, g, bn = params["v"], params["g"], params["bn"]    # (Cout, Cout, 1), (Cout,), (Cout,)
    c_out = w1.shape[0]

    k_ds = 2 * stride
    pad_ds = stride // 2
    t_ds = (t_in + 2 * pad_ds - k_ds) // stride + 1
    if t_ds < 1:
        raise ValueError("input time length too short for the downsample conv")
    if not (t_ds == t_in or t_ds == 1 or t_in == 1):
        # Mirrors PyTorch: `residual + shortcut` would raise for these shapes.
        raise ValueError(
            f"residual length {t_in} and downsample length {t_ds} are not "
            "broadcast-compatible; the PyTorch module would raise here too.")
    t_out = max(t_in, t_ds)

    # Layout plumbing in the wrapper: tap-major conv weights so each tap is a
    # 2-D (Cout, C) matmul operand; biases as (Cout, 1) columns.
    w1_t = jnp.transpose(w1, (2, 0, 1))                  # (3, Cout, Cin)
    w2_t = jnp.transpose(w2, (2, 0, 1))                  # (3, Cout, Cout)
    wd_t = jnp.transpose(wd, (2, 0, 1))                  # (2s, Cout, Cin)
    v2 = v[:, :, 0]                                      # (Cout, Cout)
    col = lambda a: a.reshape(c_out, 1)
    b1c, b2c, bdc, gc, bnc = col(b1), col(b2), col(bd), col(g), col(bn)

    kernel = _make_encoder_block_kernel(stride, t_in, t_ds)

    grid_spec = pltpu.PrefetchScalarGridSpec(
        num_scalar_prefetch=0,
        grid=(b,),
        in_specs=[
            pl.BlockSpec((1, c_in, t_in), lambda i: (i, 0, 0)),      # x
            pl.BlockSpec((3, c_out, c_in), lambda i: (0, 0, 0)),     # w1 (tap-major)
            pl.BlockSpec((c_out, 1), lambda i: (0, 0)),              # b1
            pl.BlockSpec((3, c_out, c_out), lambda i: (0, 0, 0)),    # w2
            pl.BlockSpec((c_out, 1), lambda i: (0, 0)),              # b2
            pl.BlockSpec((k_ds, c_out, c_in), lambda i: (0, 0, 0)),  # wd
            pl.BlockSpec((c_out, 1), lambda i: (0, 0)),              # bd
            pl.BlockSpec((c_out, c_out), lambda i: (0, 0)),          # weight_norm v
            pl.BlockSpec((c_out, 1), lambda i: (0, 0)),              # weight_norm g
            pl.BlockSpec((c_out, 1), lambda i: (0, 0)),              # norm-conv bias
        ],
        out_specs=pl.BlockSpec((1, c_out, t_out), lambda i: (i, 0, 0)),
    )

    flops = 2 * b * (c_out * c_in * 3 * t_in + c_out * c_out * 3 * t_in
                     + c_out * c_in * k_ds * t_ds + c_out * c_out * t_out)
    transcendentals = b * c_out * (t_in + t_out)         # two ELUs' exp
    arrays = (x, w1_t, b1c, w2_t, b2c, wd_t, bdc, v2, gc, bnc)
    bytes_accessed = sum(int(a.size) * a.dtype.itemsize for a in arrays)
    bytes_accessed += b * c_out * t_out * x.dtype.itemsize

    return pl.pallas_call(
        kernel,
        out_shape=jax.ShapeDtypeStruct((b, c_out, t_out), x.dtype),
        grid_spec=grid_spec,
        compiler_params=pltpu.CompilerParams(
            dimension_semantics=("parallel",)),
        cost_estimate=pl.CostEstimate(flops=int(flops),
                                      transcendentals=int(transcendentals),
                                      bytes_accessed=int(bytes_accessed)),
    )(x, w1_t, b1c, w2_t, b2c, wd_t, bdc, v2, gc, bnc)


def reference_forward(x, params, stride):
    """Pure-JAX reference mirroring the PyTorch forward exactly."""
    def conv1d(h, w, bias, s=1, p=0):
        y = lax.conv_general_dilated(
            h, w, window_strides=(s,), padding=[(p, p)],
            dimension_numbers=("NCH", "OIH", "NCH"),
            precision=lax.Precision.HIGHEST)
        return y + bias[None, :, None]

    r = conv1d(x, params["w1"], params["b1"], 1, 1)
    r = jnp.where(r > 0, r, jnp.exp(r) - 1.0)
    r = conv1d(r, params["w2"], params["b2"], 1, 1)
    sc = conv1d(x, params["wd"], params["bd"], stride, stride // 2)
    h = r + sc                                           # same broadcasting as torch
    v, g = params["v"], params["g"]
    norm = jnp.sqrt(jnp.sum(v * v, axis=(1, 2), keepdims=True))
    w_n = g[:, None, None] * v / norm
    y = conv1d(h, w_n, params["bn"], 1, 0)
    return jnp.where(y > 0, y, jnp.exp(y) - 1.0)


if __name__ == "__main__":
    # Small shapes consistent with the module's forward.  Note: the PyTorch
    # forward only type-checks when the downsample output broadcasts against
    # the residual (length 1), so stride=8 with T=8 gives T_d=1.
    B, C_IN, C_OUT, T, STRIDE = 2, 4, 32, 8, 8

    key = jax.random.PRNGKey(0)
    ks = jax.random.split(key, 10)

    def w(k, shape, scale=0.1):
        return scale * jax.random.normal(k, shape, dtype=jnp.float32)

    params = {
        "w1": w(ks[0], (C_OUT, C_IN, 3)),
        "b1": w(ks[1], (C_OUT,)),
        "w2": w(ks[2], (C_OUT, C_OUT, 3)),
        "b2": w(ks[3], (C_OUT,)),
        "wd": w(ks[4], (C_OUT, C_IN, 2 * STRIDE)),
        "bd": w(ks[5], (C_OUT,)),
        "v":  w(ks[6], (C_OUT, C_OUT, 1)),      # weight_norm direction
        "g":  1.0 + w(ks[7], (C_OUT,)),         # weight_norm gain
        "bn": w(ks[8], (C_OUT,)),
    }
    x = jax.random.normal(ks[9], (B, C_IN, T), dtype=jnp.float32)

    out = jax.block_until_ready(encoder_block_forward(x, params, STRIDE))
    ref = jax.block_until_ready(reference_forward(x, params, STRIDE))

    assert out.shape == ref.shape == (B, C_OUT, T), (out.shape, ref.shape)
    max_err = float(jnp.max(jnp.abs(out - ref)))
    assert jnp.allclose(out, ref, atol=1e-3, rtol=1e-3), f"mismatch vs reference: {max_err}"
    print("KERNEL_OK")
</pallas_src>

<mosaic_0001>
module attributes {stable_mosaic.version = 11 : i64} {
  func.func @kernel(%arg0: i32, %arg1: memref<1x4x8xf32, #tpu.memory_space<vmem>>, %arg2: memref<3x32x4xf32, #tpu.memory_space<vmem>>, %arg3: memref<32x1xf32, #tpu.memory_space<vmem>>, %arg4: memref<3x32x32xf32, #tpu.memory_space<vmem>>, %arg5: memref<32x1xf32, #tpu.memory_space<vmem>>, %arg6: memref<16x32x4xf32, #tpu.memory_space<vmem>>, %arg7: memref<32x1xf32, #tpu.memory_space<vmem>>, %arg8: memref<32x32xf32, #tpu.memory_space<vmem>>, %arg9: memref<32x1xf32, #tpu.memory_space<vmem>>, %arg10: memref<32x1xf32, #tpu.memory_space<vmem>>, %arg11: memref<1x32x8xf32, #tpu.memory_space<vmem>>) attributes {dimension_semantics = [#tpu.dimension_semantics<parallel>], iteration_bounds = array<i64: 2>, scalar_prefetch = 0 : i64, scratch_operands = 0 : i64, tpu.core_type = #tpu.core_type<tc>, window_params = [{transform_indices = @transform_0, window_bounds = array<i64: 1, 4, 8>}, {pipeline_mode = #tpu.pipeline_mode<synchronous>, transform_indices = @transform_1, window_bounds = array<i64: 3, 32, 4>}, {pipeline_mode = #tpu.pipeline_mode<synchronous>, transform_indices = @transform_2, window_bounds = array<i64: 32, 1>}, {pipeline_mode = #tpu.pipeline_mode<synchronous>, transform_indices = @transform_3, window_bounds = array<i64: 3, 32, 32>}, {pipeline_mode = #tpu.pipeline_mode<synchronous>, transform_indices = @transform_4, window_bounds = array<i64: 32, 1>}, {pipeline_mode = #tpu.pipeline_mode<synchronous>, transform_indices = @transform_5, window_bounds = array<i64: 16, 32, 4>}, {pipeline_mode = #tpu.pipeline_mode<synchronous>, transform_indices = @transform_6, window_bounds = array<i64: 32, 1>}, {pipeline_mode = #tpu.pipeline_mode<synchronous>, transform_indices = @transform_7, window_bounds = array<i64: 32, 32>}, {pipeline_mode = #tpu.pipeline_mode<synchronous>, transform_indices = @transform_8, window_bounds = array<i64: 32, 1>}, {pipeline_mode = #tpu.pipeline_mode<synchronous>, transform_indices = @transform_9, window_bounds = array<i64: 32, 1>}, {transform_indices = @transform_10, window_bounds = array<i64: 1, 32, 8>}]} {
    %c0 = arith.constant 0 : index
    %c0_0 = arith.constant 0 : index
    %c0_1 = arith.constant 0 : index
    %0 = vector.load %arg1[%c0, %c0_0, %c0_1] : memref<1x4x8xf32, #tpu.memory_space<vmem>>, vector<1x4x8xf32>
    %1 = vector.shape_cast %0 : vector<1x4x8xf32> to vector<4x8xf32>
    %cst = arith.constant 0.000000e+00 : f32
    %2 = vector.broadcast %cst : f32 to vector<4x1xf32>
    %3 = tpu.concatenate %2, %1, %2 in 1 : vector<4x1xf32>, vector<4x8xf32>, vector<4x1xf32> -> vector<4x10xf32>
    %cst_2 = arith.constant 0.000000e+00 : f32
    %4 = vector.broadcast %cst_2 : f32 to vector<32x8xf32>
    %c0_3 = arith.constant 0 : index
    %c0_4 = arith.constant 0 : index
    %5 = vector.load %arg3[%c0_3, %c0_4] : memref<32x1xf32, #tpu.memory_space<vmem>>, vector<32x1xf32>
    %6 = vector.broadcast %5 : vector<32x1xf32> to vector<32x8xf32>
    %7 = arith.addf %4, %6 : vector<32x8xf32>
    %c0_5 = arith.constant 0 : index
    %c0_6 = arith.constant 0 : index
    %c0_7 = arith.constant 0 : index
    %8 = vector.load %arg2[%c0_5, %c0_6, %c0_7] : memref<3x32x4xf32, #tpu.memory_space<vmem>>, vector<1x32x4xf32>
    %9 = vector.shape_cast %8 : vector<1x32x4xf32> to vector<32x4xf32>
    %10 = vector.extract_strided_slice %3 {offsets = [0, 0], sizes = [4, 8], strides = [1, 1]} : vector<4x10xf32> to vector<4x8xf32>
    %cst_8 = arith.constant dense<0.000000e+00> : vector<32x8xf32>
    %11 = tpu.matmul %9, %10, %cst_8 {dimension_numbers = #tpu.dot_dimension_numbers<[1], [0], [0], [1], [0, 0, 1, 1], [], []>} : vector<32x4xf32>, vector<4x8xf32>, vector<32x8xf32> -> vector<32x8xf32>
    %12 = arith.addf %7, %11 : vector<32x8xf32>
    %c1 = arith.constant 1 : index
    %c0_9 = arith.constant 0 : index
    %c0_10 = arith.constant 0 : index
    %13 = vector.load %arg2[%c1, %c0_9, %c0_10] : memref<3x32x4xf32, #tpu.memory_space<vmem>>, vector<1x32x4xf32>
    %14 = vector.shape_cast %13 : vector<1x32x4xf32> to vector<32x4xf32>
    %15 = vector.extract_strided_slice %3 {offsets = [0, 1], sizes = [4, 8], strides = [1, 1]} : vector<4x10xf32> to vector<4x8xf32>
    %cst_11 = arith.constant dense<0.000000e+00> : vector<32x8xf32>
    %16 = tpu.matmul %14, %15, %cst_11 {dimension_numbers = #tpu.dot_dimension_numbers<[1], [0], [0], [1], [0, 0, 1, 1], [], []>} : vector<32x4xf32>, vector<4x8xf32>, vector<32x8xf32> -> vector<32x8xf32>
    %17 = arith.addf %12, %16 : vector<32x8xf32>
    %c2 = arith.constant 2 : index
    %c0_12 = arith.constant 0 : index
    %c0_13 = arith.constant 0 : index
    %18 = vector.load %arg2[%c2, %c0_12, %c0_13] : memref<3x32x4xf32, #tpu.memory_space<vmem>>, vector<1x32x4xf32>
    %19 = vector.shape_cast %18 : vector<1x32x4xf32> to vector<32x4xf32>
    %20 = vector.extract_strided_slice %3 {offsets = [0, 2], sizes = [4, 8], strides = [1, 1]} : vector<4x10xf32> to vector<4x8xf32>
    %cst_14 = arith.constant dense<0.000000e+00> : vector<32x8xf32>
    %21 = tpu.matmul %19, %20, %cst_14 {dimension_numbers = #tpu.dot_dimension_numbers<[1], [0], [0], [1], [0, 0, 1, 1], [], []>} : vector<32x4xf32>, vector<4x8xf32>, vector<32x8xf32> -> vector<32x8xf32>
    %22 = arith.addf %17, %21 : vector<32x8xf32>
    %cst_15 = arith.constant 0.000000e+00 : f32
    %23 = vector.broadcast %cst_15 : f32 to vector<32x8xf32>
    %24 = arith.cmpf ogt, %22, %23 : vector<32x8xf32>
    %25 = math.exp %22 : vector<32x8xf32>
    %cst_16 = arith.constant 1.000000e+00 : f32
    %26 = vector.broadcast %cst_16 : f32 to vector<32x8xf32>
    %27 = arith.subf %25, %26 : vector<32x8xf32>
    %28 = arith.select %24, %22, %27 : vector<32x8xi1>, vector<32x8xf32>
    %cst_17 = arith.constant 0.000000e+00 : f32
    %29 = vector.broadcast %cst_17 : f32 to vector<32x1xf32>
    %30 = tpu.concatenate %29, %28, %29 in 1 : vector<32x1xf32>, vector<32x8xf32>, vector<32x1xf32> -> vector<32x10xf32>
    %cst_18 = arith.constant 0.000000e+00 : f32
    %31 = vector.broadcast %cst_18 : f32 to vector<32x8xf32>
    %c0_19 = arith.constant 0 : index
    %c0_20 = arith.constant 0 : index
    %32 = vector.load %arg5[%c0_19, %c0_20] : memref<32x1xf32, #tpu.memory_space<vmem>>, vector<32x1xf32>
    %33 = vector.broadcast %32 : vector<32x1xf32> to vector<32x8xf32>
    %34 = arith.addf %31, %33 : vector<32x8xf32>
    %c0_21 = arith.constant 0 : index
    %c0_22 = arith.constant 0 : index
    %c0_23 = arith.constant 0 : index
    %35 = vector.load %arg4[%c0_21, %c0_22, %c0_23] : memref<3x32x32xf32, #tpu.memory_space<vmem>>, vector<1x32x32xf32>
    %36 = vector.shape_cast %35 : vector<1x32x32xf32> to vector<32x32xf32>
    %37 = vector.extract_strided_slice %30 {offsets = [0, 0], sizes = [32, 8], strides = [1, 1]} : vector<32x10xf32> to vector<32x8xf32>
    %cst_24 = arith.constant dense<0.000000e+00> : vector<32x8xf32>
    %38 = tpu.matmul %36, %37, %cst_24 {dimension_numbers = #tpu.dot_dimension_numbers<[1], [0], [0], [1], [0, 0, 1, 1], [], []>} : vector<32x32xf32>, vector<32x8xf32>, vector<32x8xf32> -> vector<32x8xf32>
    %39 = arith.addf %34, %38 : vector<32x8xf32>
    %c1_25 = arith.constant 1 : index
    %c0_26 = arith.constant 0 : index
    %c0_27 = arith.constant 0 : index
    %40 = vector.load %arg4[%c1_25, %c0_26, %c0_27] : memref<3x32x32xf32, #tpu.memory_space<vmem>>, vector<1x32x32xf32>
    %41 = vector.shape_cast %40 : vector<1x32x32xf32> to vector<32x32xf32>
    %42 = vector.extract_strided_slice %30 {offsets = [0, 1], sizes = [32, 8], strides = [1, 1]} : vector<32x10xf32> to vector<32x8xf32>
    %cst_28 = arith.constant dense<0.000000e+00> : vector<32x8xf32>
    %43 = tpu.matmul %41, %42, %cst_28 {dimension_numbers = #tpu.dot_dimension_numbers<[1], [0], [0], [1], [0, 0, 1, 1], [], []>} : vector<32x32xf32>, vector<32x8xf32>, vector<32x8xf32> -> vector<32x8xf32>
    %44 = arith.addf %39, %43 : vector<32x8xf32>
    %c2_29 = arith.constant 2 : index
    %c0_30 = arith.constant 0 : index
    %c0_31 = arith.constant 0 : index
    %45 = vector.load %arg4[%c2_29, %c0_30, %c0_31] : memref<3x32x32xf32, #tpu.memory_space<vmem>>, vector<1x32x32xf32>
    %46 = vector.shape_cast %45 : vector<1x32x32xf32> to vector<32x32xf32>
    %47 = vector.extract_strided_slice %30 {offsets = [0, 2], sizes = [32, 8], strides = [1, 1]} : vector<32x10xf32> to vector<32x8xf32>
    %cst_32 = arith.constant dense<0.000000e+00> : vector<32x8xf32>
    %48 = tpu.matmul %46, %47, %cst_32 {dimension_numbers = #tpu.dot_dimension_numbers<[1], [0], [0], [1], [0, 0, 1, 1], [], []>} : vector<32x32xf32>, vector<32x8xf32>, vector<32x8xf32> -> vector<32x8xf32>
    %49 = arith.addf %44, %48 : vector<32x8xf32>
    %cst_33 = arith.constant 0.000000e+00 : f32
    %50 = vector.broadcast %cst_33 : f32 to vector<4x4xf32>
    %51 = tpu.concatenate %50, %1, %50 in 1 : vector<4x4xf32>, vector<4x8xf32>, vector<4x4xf32> -> vector<4x16xf32>
    %cst_34 = arith.constant 0.000000e+00 : f32
    %52 = vector.broadcast %cst_34 : f32 to vector<32x1xf32>
    %c0_35 = arith.constant 0 : index
    %c0_36 = arith.constant 0 : index
    %53 = vector.load %arg7[%c0_35, %c0_36] : memref<32x1xf32, #tpu.memory_space<vmem>>, vector<32x1xf32>
    %54 = arith.addf %52, %53 : vector<32x1xf32>
    %55 = vector.extract_strided_slice %51 {offsets = [0, 0], sizes = [4, 1], strides = [1, 1]} : vector<4x16xf32> to vector<4x1xf32>
    %c0_37 = arith.constant 0 : index
    %c0_38 = arith.constant 0 : index
    %c0_39 = arith.constant 0 : index
    %56 = vector.load %arg6[%c0_37, %c0_38, %c0_39] : memref<16x32x4xf32, #tpu.memory_space<vmem>>, vector<1x32x4xf32>
    %57 = vector.shape_cast %56 : vector<1x32x4xf32> to vector<32x4xf32>
    %cst_40 = arith.constant dense<0.000000e+00> : vector<32x1xf32>
    %58 = tpu.matmul %57, %55, %cst_40 {dimension_numbers = #tpu.dot_dimension_numbers<[1], [0], [0], [1], [0, 0, 1, 1], [], []>} : vector<32x4xf32>, vector<4x1xf32>, vector<32x1xf32> -> vector<32x1xf32>
    %59 = arith.addf %54, %58 : vector<32x1xf32>
    %60 = vector.extract_strided_slice %51 {offsets = [0, 1], sizes = [4, 1], strides = [1, 1]} : vector<4x16xf32> to vector<4x1xf32>
    %c1_41 = arith.constant 1 : index
    %c0_42 = arith.constant 0 : index
    %c0_43 = arith.constant 0 : index
    %61 = vector.load %arg6[%c1_41, %c0_42, %c0_43] : memref<16x32x4xf32, #tpu.memory_space<vmem>>, vector<1x32x4xf32>
    %62 = vector.shape_cast %61 : vector<1x32x4xf32> to vector<32x4xf32>
    %cst_44 = arith.constant dense<0.000000e+00> : vector<32x1xf32>
    %63 = tpu.matmul %62, %60, %cst_44 {dimension_numbers = #tpu.dot_dimension_numbers<[1], [0], [0], [1], [0, 0, 1, 1], [], []>} : vector<32x4xf32>, vector<4x1xf32>, vector<32x1xf32> -> vector<32x1xf32>
    %64 = arith.addf %59, %63 : vector<32x1xf32>
    %65 = vector.extract_strided_slice %51 {offsets = [0, 2], sizes = [4, 1], strides = [1, 1]} : vector<4x16xf32> to vector<4x1xf32>
    %c2_45 = arith.constant 2 : index
    %c0_46 = arith.constant 0 : index
    %c0_47 = arith.constant 0 : index
    %66 = vector.load %arg6[%c2_45, %c0_46, %c0_47] : memref<16x32x4xf32, #tpu.memory_space<vmem>>, vector<1x32x4xf32>
    %67 = vector.shape_cast %66 : vector<1x32x4xf32> to vector<32x4xf32>
    %cst_48 = arith.constant dense<0.000000e+00> : vector<32x1xf32>
    %68 = tpu.matmul %67, %65, %cst_48 {dimension_numbers = #tpu.dot_dimension_numbers<[1], [0], [0], [1], [0, 0, 1, 1], [], []>} : vector<32x4xf32>, vector<4x1xf32>, vector<32x1xf32> -> vector<32x1xf32>
    %69 = arith.addf %64, %68 : vector<32x1xf32>
    %70 = vector.extract_strided_slice %51 {offsets = [0, 3], sizes = [4, 1], strides = [1, 1]} : vector<4x16xf32> to vector<4x1xf32>
    %c3 = arith.constant 3 : index
    %c0_49 = arith.constant 0 : index
    %c0_50 = arith.constant 0 : index
    %71 = vector.load %arg6[%c3, %c0_49, %c0_50] : memref<16x32x4xf32, #tpu.memory_space<vmem>>, vector<1x32x4xf32>
    %72 = vector.shape_cast %71 : vector<1x32x4xf32> to vector<32x4xf32>
    %cst_51 = arith.constant dense<0.000000e+00> : vector<32x1xf32>
    %73 = tpu.matmul %72, %70, %cst_51 {dimension_numbers = #tpu.dot_dimension_numbers<[1], [0], [0], [1], [0, 0, 1, 1], [], []>} : vector<32x4xf32>, vector<4x1xf32>, vector<32x1xf32> -> vector<32x1xf32>
    %74 = arith.addf %69, %73 : vector<32x1xf32>
    %75 = vector.extract_strided_slice %51 {offsets = [0, 4], sizes = [4, 1], strides = [1, 1]} : vector<4x16xf32> to vector<4x1xf32>
    %c4 = arith.constant 4 : index
    %c0_52 = arith.constant 0 : index
    %c0_53 = arith.constant 0 : index
    %76 = vector.load %arg6[%c4, %c0_52, %c0_53] : memref<16x32x4xf32, #tpu.memory_space<vmem>>, vector<1x32x4xf32>
    %77 = vector.shape_cast %76 : vector<1x32x4xf32> to vector<32x4xf32>
    %cst_54 = arith.constant dense<0.000000e+00> : vector<32x1xf32>
    %78 = tpu.matmul %77, %75, %cst_54 {dimension_numbers = #tpu.dot_dimension_numbers<[1], [0], [0], [1], [0, 0, 1, 1], [], []>} : vector<32x4xf32>, vector<4x1xf32>, vector<32x1xf32> -> vector<32x1xf32>
    %79 = arith.addf %74, %78 : vector<32x1xf32>
    %80 = vector.extract_strided_slice %51 {offsets = [0, 5], sizes = [4, 1], strides = [1, 1]} : vector<4x16xf32> to vector<4x1xf32>
    %c5 = arith.constant 5 : index
    %c0_55 = arith.constant 0 : index
    %c0_56 = arith.constant 0 : index
    %81 = vector.load %arg6[%c5, %c0_55, %c0_56] : memref<16x32x4xf32, #tpu.memory_space<vmem>>, vector<1x32x4xf32>
    %82 = vector.shape_cast %81 : vector<1x32x4xf32> to vector<32x4xf32>
    %cst_57 = arith.constant dense<0.000000e+00> : vector<32x1xf32>
    %83 = tpu.matmul %82, %80, %cst_57 {dimension_numbers = #tpu.dot_dimension_numbers<[1], [0], [0], [1], [0, 0, 1, 1], [], []>} : vector<32x4xf32>, vector<4x1xf32>, vector<32x1xf32> -> vector<32x1xf32>
    %84 = arith.addf %79, %83 : vector<32x1xf32>
    %85 = vector.extract_strided_slice %51 {offsets = [0, 6], sizes = [4, 1], strides = [1, 1]} : vector<4x16xf32> to vector<4x1xf32>
    %c6 = arith.constant 6 : index
    %c0_58 = arith.constant 0 : index
    %c0_59 = arith.constant 0 : index
    %86 = vector.load %arg6[%c6, %c0_58, %c0_59] : memref<16x32x4xf32, #tpu.memory_space<vmem>>, vector<1x32x4xf32>
    %87 = vector.shape_cast %86 : vector<1x32x4xf32> to vector<32x4xf32>
    %cst_60 = arith.constant dense<0.000000e+00> : vector<32x1xf32>
    %88 = tpu.matmul %87, %85, %cst_60 {dimension_numbers = #tpu.dot_dimension_numbers<[1], [0], [0], [1], [0, 0, 1, 1], [], []>} : vector<32x4xf32>, vector<4x1xf32>, vector<32x1xf32> -> vector<32x1xf32>
    %89 = arith.addf %84, %88 : vector<32x1xf32>
    %90 = vector.extract_strided_slice %51 {offsets = [0, 7], sizes = [4, 1], strides = [1, 1]} : vector<4x16xf32> to vector<4x1xf32>
    %c7 = arith.constant 7 : index
    %c0_61 = arith.constant 0 : index
    %c0_62 = arith.constant 0 : index
    %91 = vector.load %arg6[%c7, %c0_61, %c0_62] : memref<16x32x4xf32, #tpu.memory_space<vmem>>, vector<1x32x4xf32>
    %92 = vector.shape_cast %91 : vector<1x32x4xf32> to vector<32x4xf32>
    %cst_63 = arith.constant dense<0.000000e+00> : vector<32x1xf32>
    %93 = tpu.matmul %92, %90, %cst_63 {dimension_numbers = #tpu.dot_dimension_numbers<[1], [0], [0], [1], [0, 0, 1, 1], [], []>} : vector<32x4xf32>, vector<4x1xf32>, vector<32x1xf32> -> vector<32x1xf32>
    %94 = arith.addf %89, %93 : vector<32x1xf32>
    %95 = vector.extract_strided_slice %51 {offsets = [0, 8], sizes = [4, 1], strides = [1, 1]} : vector<4x16xf32> to vector<4x1xf32>
    %c8 = arith.constant 8 : index
    %c0_64 = arith.constant 0 : index
    %c0_65 = arith.constant 0 : index
    %96 = vector.load %arg6[%c8, %c0_64, %c0_65] : memref<16x32x4xf32, #tpu.memory_space<vmem>>, vector<1x32x4xf32>
    %97 = vector.shape_cast %96 : vector<1x32x4xf32> to vector<32x4xf32>
    %cst_66 = arith.constant dense<0.000000e+00> : vector<32x1xf32>
    %98 = tpu.matmul %97, %95, %cst_66 {dimension_numbers = #tpu.dot_dimension_numbers<[1], [0], [0], [1], [0, 0, 1, 1], [], []>} : vector<32x4xf32>, vector<4x1xf32>, vector<32x1xf32> -> vector<32x1xf32>
    %99 = arith.addf %94, %98 : vector<32x1xf32>
    %100 = vector.extract_strided_slice %51 {offsets = [0, 9], sizes = [4, 1], strides = [1, 1]} : vector<4x16xf32> to vector<4x1xf32>
    %c9 = arith.constant 9 : index
    %c0_67 = arith.constant 0 : index
    %c0_68 = arith.constant 0 : index
    %101 = vector.load %arg6[%c9, %c0_67, %c0_68] : memref<16x32x4xf32, #tpu.memory_space<vmem>>, vector<1x32x4xf32>
    %102 = vector.shape_cast %101 : vector<1x32x4xf32> to vector<32x4xf32>
    %cst_69 = arith.constant dense<0.000000e+00> : vector<32x1xf32>
    %103 = tpu.matmul %102, %100, %cst_69 {dimension_numbers = #tpu.dot_dimension_numbers<[1], [0], [0], [1], [0, 0, 1, 1], [], []>} : vector<32x4xf32>, vector<4x1xf32>, vector<32x1xf32> -> vector<32x1xf32>
    %104 = arith.addf %99, %103 : vector<32x1xf32>
    %105 = vector.extract_strided_slice %51 {offsets = [0, 10], sizes = [4, 1], strides = [1, 1]} : vector<4x16xf32> to vector<4x1xf32>
    %c10 = arith.constant 10 : index
    %c0_70 = arith.constant 0 : index
    %c0_71 = arith.constant 0 : index
    %106 = vector.load %arg6[%c10, %c0_70, %c0_71] : memref<16x32x4xf32, #tpu.memory_space<vmem>>, vector<1x32x4xf32>
    %107 = vector.shape_cast %106 : vector<1x32x4xf32> to vector<32x4xf32>
    %cst_72 = arith.constant dense<0.000000e+00> : vector<32x1xf32>
    %108 = tpu.matmul %107, %105, %cst_72 {dimension_numbers = #tpu.dot_dimension_numbers<[1], [0], [0], [1], [0, 0, 1, 1], [], []>} : vector<32x4xf32>, vector<4x1xf32>, vector<32x1xf32> -> vector<32x1xf32>
    %109 = arith.addf %104, %108 : vector<32x1xf32>
    %110 = vector.extract_strided_slice %51 {offsets = [0, 11], sizes = [4, 1], strides = [1, 1]} : vector<4x16xf32> to vector<4x1xf32>
    %c11 = arith.constant 11 : index
    %c0_73 = arith.constant 0 : index
    %c0_74 = arith.constant 0 : index
    %111 = vector.load %arg6[%c11, %c0_73, %c0_74] : memref<16x32x4xf32, #tpu.memory_space<vmem>>, vector<1x32x4xf32>
    %112 = vector.shape_cast %111 : vector<1x32x4xf32> to vector<32x4xf32>
    %cst_75 = arith.constant dense<0.000000e+00> : vector<32x1xf32>
    %113 = tpu.matmul %112, %110, %cst_75 {dimension_numbers = #tpu.dot_dimension_numbers<[1], [0], [0], [1], [0, 0, 1, 1], [], []>} : vector<32x4xf32>, vector<4x1xf32>, vector<32x1xf32> -> vector<32x1xf32>
    %114 = arith.addf %109, %113 : vector<32x1xf32>
    %115 = vector.extract_strided_slice %51 {offsets = [0, 12], sizes = [4, 1], strides = [1, 1]} : vector<4x16xf32> to vector<4x1xf32>
    %c12 = arith.constant 12 : index
    %c0_76 = arith.constant 0 : index
    %c0_77 = arith.constant 0 : index
    %116 = vector.load %arg6[%c12, %c0_76, %c0_77] : memref<16x32x4xf32, #tpu.memory_space<vmem>>, vector<1x32x4xf32>
    %117 = vector.shape_cast %116 : vector<1x32x4xf32> to vector<32x4xf32>
    %cst_78 = arith.constant dense<0.000000e+00> : vector<32x1xf32>
    %118 = tpu.matmul %117, %115, %cst_78 {dimension_numbers = #tpu.dot_dimension_numbers<[1], [0], [0], [1], [0, 0, 1, 1], [], []>} : vector<32x4xf32>, vector<4x1xf32>, vector<32x1xf32> -> vector<32x1xf32>
    %119 = arith.addf %114, %118 : vector<32x1xf32>
    %120 = vector.extract_strided_slice %51 {offsets = [0, 13], sizes = [4, 1], strides = [1, 1]} : vector<4x16xf32> to vector<4x1xf32>
    %c13 = arith.constant 13 : index
    %c0_79 = arith.constant 0 : index
    %c0_80 = arith.constant 0 : index
    %121 = vector.load %arg6[%c13, %c0_79, %c0_80] : memref<16x32x4xf32, #tpu.memory_space<vmem>>, vector<1x32x4xf32>
    %122 = vector.shape_cast %121 : vector<1x32x4xf32> to vector<32x4xf32>
    %cst_81 = arith.constant dense<0.000000e+00> : vector<32x1xf32>
    %123 = tpu.matmul %122, %120, %cst_81 {dimension_numbers = #tpu.dot_dimension_numbers<[1], [0], [0], [1], [0, 0, 1, 1], [], []>} : vector<32x4xf32>, vector<4x1xf32>, vector<32x1xf32> -> vector<32x1xf32>
    %124 = arith.addf %119, %123 : vector<32x1xf32>
    %125 = vector.extract_strided_slice %51 {offsets = [0, 14], sizes = [4, 1], strides = [1, 1]} : vector<4x16xf32> to vector<4x1xf32>
    %c14 = arith.constant 14 : index
    %c0_82 = arith.constant 0 : index
    %c0_83 = arith.constant 0 : index
    %126 = vector.load %arg6[%c14, %c0_82, %c0_83] : memref<16x32x4xf32, #tpu.memory_space<vmem>>, vector<1x32x4xf32>
    %127 = vector.shape_cast %126 : vector<1x32x4xf32> to vector<32x4xf32>
    %cst_84 = arith.constant dense<0.000000e+00> : vector<32x1xf32>
    %128 = tpu.matmul %127, %125, %cst_84 {dimension_numbers = #tpu.dot_dimension_numbers<[1], [0], [0], [1], [0, 0, 1, 1], [], []>} : vector<32x4xf32>, vector<4x1xf32>, vector<32x1xf32> -> vector<32x1xf32>
    %129 = arith.addf %124, %128 : vector<32x1xf32>
    %130 = vector.extract_strided_slice %51 {offsets = [0, 15], sizes = [4, 1], strides = [1, 1]} : vector<4x16xf32> to vector<4x1xf32>
    %c15 = arith.constant 15 : index
    %c0_85 = arith.constant 0 : index
    %c0_86 = arith.constant 0 : index
    %131 = vector.load %arg6[%c15, %c0_85, %c0_86] : memref<16x32x4xf32, #tpu.memory_space<vmem>>, vector<1x32x4xf32>
    %132 = vector.shape_cast %131 : vector<1x32x4xf32> to vector<32x4xf32>
    %cst_87 = arith.constant dense<0.000000e+00> : vector<32x1xf32>
    %133 = tpu.matmul %132, %130, %cst_87 {dimension_numbers = #tpu.dot_dimension_numbers<[1], [0], [0], [1], [0, 0, 1, 1], [], []>} : vector<32x4xf32>, vector<4x1xf32>, vector<32x1xf32> -> vector<32x1xf32>
    %134 = arith.addf %129, %133 : vector<32x1xf32>
    %135 = vector.broadcast %134 : vector<32x1xf32> to vector<32x8xf32>
    %136 = arith.addf %49, %135 : vector<32x8xf32>
    %c0_88 = arith.constant 0 : index
    %c0_89 = arith.constant 0 : index
    %137 = vector.load %arg8[%c0_88, %c0_89] : memref<32x32xf32, #tpu.memory_space<vmem>>, vector<32x32xf32>
    %c0_90 = arith.constant 0 : index
    %c0_91 = arith.constant 0 : index
    %138 = vector.load %arg9[%c0_90, %c0_91] : memref<32x1xf32, #tpu.memory_space<vmem>>, vector<32x1xf32>
    %139 = arith.mulf %137, %137 : vector<32x32xf32>
    %cst_92 = arith.constant dense<0.000000e+00> : vector<32xf32>
    %140 = vector.multi_reduction <add>, %139, %cst_92 [1] : vector<32x32xf32> to vector<32xf32>
    %141 = vector.shape_cast %140 : vector<32xf32> to vector<32x1xf32>
    %142 = math.sqrt %141 : vector<32x1xf32>
    %143 = arith.divf %138, %142 : vector<32x1xf32>
    %144 = vector.broadcast %143 : vector<32x1xf32> to vector<32x32xf32>
    %145 = arith.mulf %137, %144 : vector<32x32xf32>
    %cst_93 = arith.constant dense<0.000000e+00> : vector<32x8xf32>
    %146 = tpu.matmul %145, %136, %cst_93 {dimension_numbers = #tpu.dot_dimension_numbers<[1], [0], [0], [1], [0, 0, 1, 1], [], []>} : vector<32x32xf32>, vector<32x8xf32>, vector<32x8xf32> -> vector<32x8xf32>
    %c0_94 = arith.constant 0 : index
    %c0_95 = arith.constant 0 : index
    %147 = vector.load %arg10[%c0_94, %c0_95] : memref<32x1xf32, #tpu.memory_space<vmem>>, vector<32x1xf32>
    %148 = vector.broadcast %147 : vector<32x1xf32> to vector<32x8xf32>
    %149 = arith.addf %146, %148 : vector<32x8xf32>
    %cst_96 = arith.constant 0.000000e+00 : f32
    %150 = vector.broadcast %cst_96 : f32 to vector<32x8xf32>
    %151 = arith.cmpf ogt, %149, %150 : vector<32x8xf32>
    %152 = math.exp %149 : vector<32x8xf32>
    %cst_97 = arith.constant 1.000000e+00 : f32
    %153 = vector.broadcast %cst_97 : f32 to vector<32x8xf32>
    %154 = arith.subf %152, %153 : vector<32x8xf32>
    %155 = arith.select %151, %149, %154 : vector<32x8xi1>, vector<32x8xf32>
    %c0_98 = arith.constant 0 : index
    %c0_99 = arith.constant 0 : index
    %c0_100 = arith.constant 0 : index
    %156 = vector.load %arg11[%c0_98, %c0_99, %c0_100] : memref<1x32x8xf32, #tpu.memory_space<vmem>>, vector<1x32x8xf32>
    %157 = vector.shape_cast %156 : vector<1x32x8xf32> to vector<32x8xf32>
    %158 = vector.shape_cast %155 : vector<32x8xf32> to vector<1x32x8xf32>
    tpu.vector_store %arg11[%c0_98, %c0_99, %c0_100], %158 {strides = array<i32>} : memref<1x32x8xf32, #tpu.memory_space<vmem>>, vector<1x32x8xf32>,
    return
  }
  func.func @transform_0(%arg0: i32) -> (i32, i32, i32) {
    %c0_i32 = arith.constant 0 : i32
    %c0_i32_0 = arith.constant 0 : i32
    %c0_i32_1 = arith.constant 0 : i32
    return %arg0, %c0_i32, %c0_i32_0 : i32, i32, i32
  }
  func.func @transform_1(%arg0: i32) -> (i32, i32, i32) {
    %c0_i32 = arith.constant 0 : i32
    %c0_i32_0 = arith.constant 0 : i32
    %c0_i32_1 = arith.constant 0 : i32
    %c0_i32_2 = arith.constant 0 : i32
    return %c0_i32, %c0_i32_0, %c0_i32_1 : i32, i32, i32
  }
  func.func @transform_2(%arg0: i32) -> (i32, i32) {
    %c0_i32 = arith.constant 0 : i32
    %c0_i32_0 = arith.constant 0 : i32
    %c0_i32_1 = arith.constant 0 : i32
    return %c0_i32, %c0_i32_0 : i32, i32
  }
  func.func @transform_3(%arg0: i32) -> (i32, i32, i32) {
    %c0_i32 = arith.constant 0 : i32
    %c0_i32_0 = arith.constant 0 : i32
    %c0_i32_1 = arith.constant 0 : i32
    %c0_i32_2 = arith.constant 0 : i32
    return %c0_i32, %c0_i32_0, %c0_i32_1 : i32, i32, i32
  }
  func.func @transform_4(%arg0: i32) -> (i32, i32) {
    %c0_i32 = arith.constant 0 : i32
    %c0_i32_0 = arith.constant 0 : i32
    %c0_i32_1 = arith.constant 0 : i32
    return %c0_i32, %c0_i32_0 : i32, i32
  }
  func.func @transform_5(%arg0: i32) -> (i32, i32, i32) {
    %c0_i32 = arith.constant 0 : i32
    %c0_i32_0 = arith.constant 0 : i32
    %c0_i32_1 = arith.constant 0 : i32
    %c0_i32_2 = arith.constant 0 : i32
    return %c0_i32, %c0_i32_0, %c0_i32_1 : i32, i32, i32
  }
  func.func @transform_6(%arg0: i32) -> (i32, i32) {
    %c0_i32 = arith.constant 0 : i32
    %c0_i32_0 = arith.constant 0 : i32
    %c0_i32_1 = arith.constant 0 : i32
    return %c0_i32, %c0_i32_0 : i32, i32
  }
  func.func @transform_7(%arg0: i32) -> (i32, i32) {
    %c0_i32 = arith.constant 0 : i32
    %c0_i32_0 = arith.constant 0 : i32
    %c0_i32_1 = arith.constant 0 : i32
    return %c0_i32, %c0_i32_0 : i32, i32
  }
  func.func @transform_8(%arg0: i32) -> (i32, i32) {
    %c0_i32 = arith.constant 0 : i32
    %c0_i32_0 = arith.constant 0 : i32
    %c0_i32_1 = arith.constant 0 : i32
    return %c0_i32, %c0_i32_0 : i32, i32
  }
  func.func @transform_9(%arg0: i32) -> (i32, i32) {
    %c0_i32 = arith.constant 0 : i32
    %c0_i32_0 = arith.constant 0 : i32
    %c0_i32_1 = arith.constant 0 : i32
    return %c0_i32, %c0_i32_0 : i32, i32
  }
  func.func @transform_10(%arg0: i32) -> (i32, i32, i32) {
    %c0_i32 = arith.constant 0 : i32
    %c0_i32_0 = arith.constant 0 : i32
    %c0_i32_1 = arith.constant 0 : i32
    return %arg0, %c0_i32, %c0_i32_0 : i32, i32, i32
  }
}

</mosaic_0001>

<llo_original>
// kernel: tpu_custom_call.1
$region0: #{tpu_custom_call.1}
  #allocation0 [shape = 'u32[]', space=smem, size = 0x4, offset = 0x4, fixed_abs, tag = 'smem constant byte address 0x4 - core index']
  #allocation1 [shape = 'u32[144,128]{1,0:T(1,128)}', space=vmem, size = 0x12000, scoped, tag = 'internal scratch']
  %s0 = inlined_call_operand.vmem [shape: f32[2,4,8], index: 0, kind: input, shape index: {}]
  %s1 = inlined_call_operand.vmem [shape: f32[3,32,4], index: 1, kind: input, shape index: {}]
  %s2 = inlined_call_operand.vmem [shape: f32[32,1], index: 2, kind: input, shape index: {}]
  %s3 = inlined_call_operand.vmem [shape: f32[3,32,32], index: 3, kind: input, shape index: {}]
  %s4 = inlined_call_operand.vmem [shape: f32[32,1], index: 4, kind: input, shape index: {}]
  %s5 = inlined_call_operand.vmem [shape: f32[16,32,4], index: 5, kind: input, shape index: {}]
  %s6 = inlined_call_operand.vmem [shape: f32[32,1], index: 6, kind: input, shape index: {}]
  %s7 = inlined_call_operand.vmem [shape: f32[32,32], index: 7, kind: input, shape index: {}]
  %s8 = inlined_call_operand.vmem [shape: f32[32,1], index: 8, kind: input, shape index: {}]
  %s9 = inlined_call_operand.vmem [shape: f32[32,1], index: 9, kind: input, shape index: {}]
  %s10 = inlined_call_operand.vmem [shape: f32[2,32,8], index: 10, kind: output, shape index: {}]
  %s11 = sld [smem:[#allocation0]]
  $region73: #{tpu_custom_call.1} parent=0
    _
  %s13 = ssub.s32 1, %s11
  %s14 = scalar_select 0, %s13, %s11
  loop: start=0, step=1, limit=4
  $region2: #{tpu_custom_call.1} parent=0 // loop_pre_header
    _
  $region3: #{tpu_custom_call.1} parent=0 // loop_header
    %s16 = sphi 0, %s20
    %p17 = scmp.ge.s32.totalorder %s16, 4
    %s26 = sphi 0, %s28
    %s29 = sphi 0, %s26
    %s30 = sphi 0, %s29
    %s46 = sphi 0, %s30
    %s50 = sphi 0, %s50
    %s52 = sphi 0, %s50
    %s53 = sphi 0, %s52
    %s67 = sphi 0, %s53
    %s71 = sphi 0, %s71
    %s73 = sphi 0, %s71
    %s74 = sphi 0, %s73
    %s88 = sphi 0, %s74
    %s92 = sphi 0, %s92
    %s94 = sphi 0, %s92
    %s95 = sphi 0, %s94
    %s109 = sphi 0, %s95
    %s113 = sphi 0, %s113
    %s115 = sphi 0, %s113
    %s116 = sphi 0, %s115
    %s130 = sphi 0, %s116
    %s134 = sphi 0, %s134
    %s136 = sphi 0, %s134
    %s137 = sphi 0, %s136
    %s151 = sphi 0, %s137
    %s155 = sphi 0, %s155
    %s157 = sphi 0, %s155
    %s158 = sphi 0, %s157
    %s172 = sphi 0, %s158
    %s176 = sphi 0, %s176
    %s178 = sphi 0, %s176
    %s179 = sphi 0, %s178
    %s193 = sphi 0, %s179
    %s197 = sphi 0, %s197
    %s199 = sphi 0, %s197
    %s200 = sphi 0, %s199
    %s214 = sphi 0, %s200
    %s218 = sphi 0, %s218
    %s220 = sphi 0, %s218
    %s221 = sphi 0, %s220
    %s235 = sphi 0, %s221
    %s241 = sphi 0, %s243
    %s244 = sphi 0, %s241
    %s245 = sphi 0, %s244
    %s261 = sphi 0, %s245
  $region4: #{tpu_custom_call.1} parent=0 // loop_header_branch
    %19 = sbr.rel (%p17) target = $region8
  $region5: #{tpu_custom_call.1} parent=0 // loop_body
    %s21 = ssub.s32 %s16, 1
    %s22 = ssub.s32 %s16, 2
    %s23 = sadd.s32 %s16, 1
    %s24 = ssub.s32 %s16, %s23
    %p25 = scmp.eq.s32.totalorder %s24, 0
    %s27 = sadd.s32 %s26, 1
    %s28 = scalar_select %p25, %s26, %s27
    %p31 = pneg %p25
    %p32 = scmp.eq.s32.totalorder %s16, 1
    %p33 = por %p31, %p32
    %p34 = scmp.ne.s32.totalorder %s26, %s29
    %p35 = scmp.eq.s32.totalorder %s16, 0
    %p36 = por %p34, %p35
    %p37 = scmp.ne.s32.totalorder %s26, %s29
    %p38 = scmp.eq.s32.totalorder %s21, 1
    %p39 = por %p37, %p38
    %p40 = scmp.ne.s32.totalorder %s29, %s30
    %p41 = scmp.eq.s32.totalorder %s21, 0
    %p42 = por %p40, %p41
    %p43 = scmp.ne.s32.totalorder %s29, %s30
    %p44 = scmp.eq.s32.totalorder %s22, 1
    %p45 = por %p43, %p44
    %p47 = scmp.ne.s32.totalorder %s30, %s46
    %p48 = scmp.eq.s32.totalorder %s22, 0
    %p49 = por %p47, %p48
    %s51 = sadd.s32 %s50, 1
    %p54 = scmp.eq.s32.totalorder %s16, 1
    %p55 = scmp.ne.s32.totalorder %s50, %s52
    %p56 = scmp.eq.s32.totalorder %s16, 0
    %p57 = por %p55, %p56
    %p58 = scmp.ne.s32.totalorder %s50, %s52
    %p59 = scmp.eq.s32.totalorder %s21, 1
    %p60 = por %p58, %p59
    %p61 = scmp.ne.s32.totalorder %s52, %s53
    %p62 = scmp.eq.s32.totalorder %s21, 0
    %p63 = por %p61, %p62
    %p64 = scmp.ne.s32.totalorder %s52, %s53
    %p65 = scmp.eq.s32.totalorder %s22, 1
    %p66 = por %p64, %p65
    %p68 = scmp.ne.s32.totalorder %s53, %s67
    %p69 = scmp.eq.s32.totalorder %s22, 0
    %p70 = por %p68, %p69
    %s72 = sadd.s32 %s71, 1
    %p75 = scmp.eq.s32.totalorder %s16, 1
    %p76 = scmp.ne.s32.totalorder %s71, %s73
    %p77 = scmp.eq.s32.totalorder %s16, 0
    %p78 = por %p76, %p77
    %p79 = scmp.ne.s32.totalorder %s71, %s73
    %p80 = scmp.eq.s32.totalorder %s21, 1
    %p81 = por %p79, %p80
    %p82 = scmp.ne.s32.totalorder %s73, %s74
    %p83 = scmp.eq.s32.totalorder %s21, 0
    %p84 = por %p82, %p83
    %p85 = scmp.ne.s32.totalorder %s73, %s74
    %p86 = scmp.eq.s32.totalorder %s22, 1
    %p87 = por %p85, %p86
    %p89 = scmp.ne.s32.totalorder %s74, %s88
    %p90 = scmp.eq.s32.totalorder %s22, 0
    %p91 = por %p89, %p90
    %s93 = sadd.s32 %s92, 1
    %p96 = scmp.eq.s32.totalorder %s16, 1
    %p97 = scmp.ne.s32.totalorder %s92, %s94
    %p98 = scmp.eq.s32.totalorder %s16, 0
    %p99 = por %p97, %p98
    %p100 = scmp.ne.s32.totalorder %s92, %s94
    %p101 = scmp.eq.s32.totalorder %s21, 1
    %p102 = por %p100, %p101
    %p103 = scmp.ne.s32.totalorder %s94, %s95
    %p104 = scmp.eq.s32.totalorder %s21, 0
    %p105 = por %p103, %p104
    %p106 = scmp.ne.s32.totalorder %s94, %s95
    %p107 = scmp.eq.s32.totalorder %s22, 1
    %p108 = por %p106, %p107
    %p110 = scmp.ne.s32.totalorder %s95, %s109
    %p111 = scmp.eq.s32.totalorder %s22, 0
    %p112 = por %p110, %p111
    %s114 = sadd.s32 %s113, 1
    %p117 = scmp.eq.s32.totalorder %s16, 1
    %p118 = scmp.ne.s32.totalorder %s113, %s115
    %p119 = scmp.eq.s32.totalorder %s16, 0
    %p120 = por %p118, %p119
    %p121 = scmp.ne.s32.totalorder %s113, %s115
    %p122 = scmp.eq.s32.totalorder %s21, 1
    %p123 = por %p121, %p122
    %p124 = scmp.ne.s32.totalorder %s115, %s116
    %p125 = scmp.eq.s32.totalorder %s21, 0
    %p126 = por %p124, %p125
    %p127 = scmp.ne.s32.totalorder %s115, %s116
    %p128 = scmp.eq.s32.totalorder %s22, 1
    %p129 = por %p127, %p128
    %p131 = scmp.ne.s32.totalorder %s116, %s130
    %p132 = scmp.eq.s32.totalorder %s22, 0
    %p133 = por %p131, %p132
    %s135 = sadd.s32 %s134, 1
    %p138 = scmp.eq.s32.totalorder %s16, 1
    %p139 = scmp.ne.s32.totalorder %s134, %s136
    %p140 = scmp.eq.s32.totalorder %s16, 0
    %p141 = por %p139, %p140
    %p142 = scmp.ne.s32.totalorder %s134, %s136
    %p143 = scmp.eq.s32.totalorder %s21, 1
    %p144 = por %p142, %p143
    %p145 = scmp.ne.s32.totalorder %s136, %s137
    %p146 = scmp.eq.s32.totalorder %s21, 0
    %p147 = por %p145, %p146
    %p148 = scmp.ne.s32.totalorder %s136, %s137
    %p149 = scmp.eq.s32.totalorder %s22, 1
    %p150 = por %p148, %p149
    %p152 = scmp.ne.s32.totalorder %s137, %s151
    %p153 = scmp.eq.s32.totalorder %s22, 0
    %p154 = por %p152, %p153
    %s156 = sadd.s32 %s155, 1
    %p159 = scmp.eq.s32.totalorder %s16, 1
    %p160 = scmp.ne.s32.totalorder %s155, %s157
    %p161 = scmp.eq.s32.totalorder %s16, 0
    %p162 = por %p160, %p161
    %p163 = scmp.ne.s32.totalorder %s155, %s157
    %p164 = scmp.eq.s32.totalorder %s21, 1
    %p165 = por %p163, %p164
    %p166 = scmp.ne.s32.totalorder %s157, %s158
    %p167 = scmp.eq.s32.totalorder %s21, 0
    %p168 = por %p166, %p167
    %p169 = scmp.ne.s32.totalorder %s157, %s158
    %p170 = scmp.eq.s32.totalorder %s22, 1
    %p171 = por %p169, %p170
    %p173 = scmp.ne.s32.totalorder %s158, %s172
    %p174 = scmp.eq.s32.totalorder %s22, 0
    %p175 = por %p173, %p174
    %s177 = sadd.s32 %s176, 1
    %p180 = scmp.eq.s32.totalorder %s16, 1
    %p181 = scmp.ne.s32.totalorder %s176, %s178
    %p182 = scmp.eq.s32.totalorder %s16, 0
    %p183 = por %p181, %p182
    %p184 = scmp.ne.s32.totalorder %s176, %s178
    %p185 = scmp.eq.s32.totalorder %s21, 1
    %p186 = por %p184, %p185
    %p187 = scmp.ne.s32.totalorder %s178, %s179
    %p188 = scmp.eq.s32.totalorder %s21, 0
    %p189 = por %p187, %p188
    %p190 = scmp.ne.s32.totalorder %s178, %s179
    %p191 = scmp.eq.s32.totalorder %s22, 1
    %p192 = por %p190, %p191
    %p194 = scmp.ne.s32.totalorder %s179, %s193
    %p195 = scmp.eq.s32.totalorder %s22, 0
    %p196 = por %p194, %p195
    %s198 = sadd.s32 %s197, 1
    %p201 = scmp.eq.s32.totalorder %s16, 1
    %p202 = scmp.ne.s32.totalorder %s197, %s199
    %p203 = scmp.eq.s32.totalorder %s16, 0
    %p204 = por %p202, %p203
    %p205 = scmp.ne.s32.totalorder %s197, %s199
    %p206 = scmp.eq.s32.totalorder %s21, 1
    %p207 = por %p205, %p206
    %p208 = scmp.ne.s32.totalorder %s199, %s200
    %p209 = scmp.eq.s32.totalorder %s21, 0
    %p210 = por %p208, %p209
    %p211 = scmp.ne.s32.totalorder %s199, %s200
    %p212 = scmp.eq.s32.totalorder %s22, 1
    %p213 = por %p211, %p212
    %p215 = scmp.ne.s32.totalorder %s200, %s214
    %p216 = scmp.eq.s32.totalorder %s22, 0
    %p217 = por %p215, %p216
    %s219 = sadd.s32 %s218, 1
    %p222 = scmp.eq.s32.totalorder %s16, 1
    %p223 = scmp.ne.s32.totalorder %s218, %s220
    %p224 = scmp.eq.s32.totalorder %s16, 0
    %p225 = por %p223, %p224
    %p226 = scmp.ne.s32.totalorder %s218, %s220
    %p227 = scmp.eq.s32.totalorder %s21, 1
    %p228 = por %p226, %p227
    %p229 = scmp.ne.s32.totalorder %s220, %s221
    %p230 = scmp.eq.s32.totalorder %s21, 0
    %p231 = por %p229, %p230
    %p232 = scmp.ne.s32.totalorder %s220, %s221
    %p233 = scmp.eq.s32.totalorder %s22, 1
    %p234 = por %p232, %p233
    %p236 = scmp.ne.s32.totalorder %s221, %s235
    %p237 = scmp.eq.s32.totalorder %s22, 0
    %p238 = por %p236, %p237
    %s239 = ssub.s32 %s16, %s23
    %p240 = scmp.eq.s32.totalorder %s239, 0
    %s242 = sadd.s32 %s241, 1
    %s243 = scalar_select %p240, %s241, %s242
    %p246 = pneg %p240
    %p247 = scmp.eq.s32.totalorder %s16, 1
    %p248 = por %p246, %p247
    %p249 = scmp.ne.s32.totalorder %s241, %s244
    %p250 = scmp.eq.s32.totalorder %s16, 0
    %p251 = por %p249, %p250
    %p252 = scmp.ne.s32.totalorder %s241, %s244
    %p253 = scmp.eq.s32.totalorder %s21, 1
    %p254 = por %p252, %p253
    %p255 = scmp.ne.s32.totalorder %s244, %s245
    %p256 = scmp.eq.s32.totalorder %s21, 0
    %p257 = por %p255, %p256
    %p258 = scmp.ne.s32.totalorder %s244, %s245
    %p259 = scmp.eq.s32.totalorder %s22, 1
    %p260 = por %p258, %p259
    %p262 = scmp.ne.s32.totalorder %s245, %s261
    %p263 = scmp.eq.s32.totalorder %s22, 0
    %p264 = por %p262, %p263
    %p265 = scmp.le.s32.totalorder 1, %s16
    %p266 = scmp.lt.s32.totalorder %s16, 3
    %p267 = pnand %p265, %p266
    %p268 = pneg %p267
    // Predicated region
    $region9: #{tpu_custom_call.1} parent=5 // pred_check
      _
    $region10: #{tpu_custom_call.1} parent=5 // pred_check_branch
      %270 = sbr.rel (%p267) target = $region12
    $region11: #{tpu_custom_call.1} parent=5 // pred_region
      %s271 = ssub.s32 %s16, 1
      // Predicated region
      $region13: #{tpu_custom_call.1} parent=11 // pred_check
        %p272 = pneg %p63
      $region14: #{tpu_custom_call.1} parent=11 // pred_check_branch
        %274 = sbr.rel (%p272) target = $region16
      $region15: #{tpu_custom_call.1} parent=11 // pred_region
        _
      $region16: #{tpu_custom_call.1} parent=11 // pred_fallthru
        _
      // Predicated region
      $region17: #{tpu_custom_call.1} parent=11 // pred_check
        %p275 = pneg %p84
      $region18: #{tpu_custom_call.1} parent=11 // pred_check_branch
        %277 = sbr.rel (%p275) target = $region20
      $region19: #{tpu_custom_call.1} parent=11 // pred_region
        _
      $region20: #{tpu_custom_call.1} parent=11 // pred_fallthru
        _
      // Predicated region
      $region21: #{tpu_custom_call.1} parent=11 // pred_check
        %p278 = pneg %p105
      $region22: #{tpu_custom_call.1} parent=11 // pred_check_branch
        %280 = sbr.rel (%p278) target = $region24
      $region23: #{tpu_custom_call.1} parent=11 // pred_region
        _
      $region24: #{tpu_custom_call.1} parent=11 // pred_fallthru
        _
      // Predicated region
      $region25: #{tpu_custom_call.1} parent=11 // pred_check
        %p281 = pneg %p126
      $region26: #{tpu_custom_call.1} parent=11 // pred_check_branch
        %283 = sbr.rel (%p281) target = $region28
      $region27: #{tpu_custom_call.1} parent=11 // pred_region
        _
      $region28: #{tpu_custom_call.1} parent=11 // pred_fallthru
        _
      // Predicated region
      $region29: #{tpu_custom_call.1} parent=11 // pred_check
        %p284 = pneg %p147
      $region30: #{tpu_custom_call.1} parent=11 // pred_check_branch
        %286 = sbr.rel (%p284) target = $region32
      $region31: #{tpu_custom_call.1} parent=11 // pred_region
        _
      $region32: #{tpu_custom_call.1} parent=11 // pred_fallthru
        _
      // Predicated region
      $region33: #{tpu_custom_call.1} parent=11 // pred_check
        %p287 = pneg %p168
      $region34: #{tpu_custom_call.1} parent=11 // pred_check_branch
        %289 = sbr.rel (%p287) target = $region36
      $region35: #{tpu_custom_call.1} parent=11 // pred_region
        _
      $region36: #{tpu_custom_call.1} parent=11 // pred_fallthru
        _
      // Predicated region
      $region37: #{tpu_custom_call.1} parent=11 // pred_check
        %p290 = pneg %p189
      $region38: #{tpu_custom_call.1} parent=11 // pred_check_branch
        %292 = sbr.rel (%p290) target = $region40
      $region39: #{tpu_custom_call.1} parent=11 // pred_region
        _
      $region40: #{tpu_custom_call.1} parent=11 // pred_fallthru
        _
      // Predicated region
      $region41: #{tpu_custom_call.1} parent=11 // pred_check
        %p293 = pneg %p210
      $region42: #{tpu_custom_call.1} parent=11 // pred_check_branch
        %295 = sbr.rel (%p293) target = $region44
      $region43: #{tpu_custom_call.1} parent=11 // pred_region
        _
      $region44: #{tpu_custom_call.1} parent=11 // pred_fallthru
        _
      // Predicated region
      $region45: #{tpu_custom_call.1} parent=11 // pred_check
        %p296 = pneg %p231
      $region46: #{tpu_custom_call.1} parent=11 // pred_check_branch
        %298 = sbr.rel (%p296) target = $region48
      $region47: #{tpu_custom_call.1} parent=11 // pred_region
        _
      $region48: #{tpu_custom_call.1} parent=11 // pred_fallthru
        _
    $region12: #{tpu_custom_call.1} parent=5 // pred_fallthru
      _
    %p299 = scmp.lt.s32.totalorder %s16, 2
    // Predicated region
    $region49: #{tpu_custom_call.1} parent=5 // pred_check
      %p300 = pneg %p299
    $region50: #{tpu_custom_call.1} parent=5 // pred_check_branch
      %302 = sbr.rel (%p300) target = $region52
    $region51: #{tpu_custom_call.1} parent=5 // pred_region
      // Predicated region
      $region53: #{tpu_custom_call.1} parent=51 // pred_check
        %p303 = pneg %p36
      $region54: #{tpu_custom_call.1} parent=51 // pred_check_branch
        %305 = sbr.rel (%p303) target = $region56
      $region55: #{tpu_custom_call.1} parent=51 // pred_region
        %p306 = scmp.lt.s32.totalorder %s16, 1
        %s307 = scalar_select %p306, %s16, 1
        %s308 = smul.addr %s307, 4
        %s309 = scalar_lea.vmem %s0, %s308
      $region56: #{tpu_custom_call.1} parent=51 // pred_fallthru
        _
    $region52: #{tpu_custom_call.1} parent=5 // pred_fallthru
      _
    %p310 = scmp.le.s32.totalorder 1, %s16
    %p311 = scmp.lt.s32.totalorder %s16, 3
    %p312 = pnand %p310, %p311
    %p313 = pneg %p312
    // Predicated region
    $region57: #{tpu_custom_call.1} parent=5 // pred_check
      _
    $region58: #{tpu_custom_call.1} parent=5 // pred_check_branch
      %315 = sbr.rel (%p312) target = $region60
    $region59: #{tpu_custom_call.1} parent=5 // pred_region
      %s316 = ssub.s32 %s16, 1
      %p317 = scmp.lt.s32.totalorder %s21, 1
      %s318 = scalar_select %p317, %s21, 1
      %s319 = smul.addr %s318, 4
      %s320 = scalar_lea.vmem %s0, %s319
      %p321 = pneg %p42
      %p322 = pneg %p39
      %p323 = pneg %p63
      %p324 = pneg %p60
      %p325 = pneg %p84
      %p326 = pneg %p81
      %p327 = pneg %p105
      %p328 = pneg %p102
      %p329 = pneg %p126
      %p330 = pneg %p123
      %p331 = pneg %p147
      %p332 = pneg %p144
      %p333 = pneg %p168
      %p334 = pneg %p165
      %p335 = pneg %p189
      %p336 = pneg %p186
      %p337 = pneg %p210
      %p338 = pneg %p207
      %p339 = pneg %p231
      %p340 = pneg %p228
      %p341 = pneg %p257
      %p342 = pneg %p254
      %p343 = scmp.lt.s32.totalorder %s21, 1
      %s344 = scalar_select %p343, %s21, 1
      %s345 = smul.addr %s344, 4
      %s346 = smul.addr %s345, 8
      %s347 = scalar_lea.vmem %s10, %s346
      %p348 = scmp.lt.s32.totalorder %s21, 1
      %s349 = scalar_select %p348, %s21, 1
      %s350 = smul.addr %s349, 4
      %s351 = scalar_lea.vmem %s0, %s350
      %p352 = scmp.lt.s32.totalorder %s21, 1
      %s353 = scalar_select %p352, %s21, 1
      %s354 = smul.addr %s353, 4
      %s355 = smul.addr %s354, 8
      %s356 = scalar_lea.vmem %s10, %s355
      %v357 = vld [vmem:[%s351] sm:$0xf]
      %359 = vrot.lane.b32.xlu0 %v357, 1
      %v360 = vpop.permute.xlu0 %359
      %vm362 = vcmask 7168
      %v363 = vsel %vm362, 0.0, %v360
      %vm364 = vcmask 72704
      %v365 = vsel %vm364, %v363, 0.0
      %v366 = vld [vmem:[%s2] sm:$0xff]
      %v367 = vld [vmem:[%s2 + $0x8] sm:$0xff]
      %v368 = vld [vmem:[%s2 + $0x10] sm:$0xff]
      %v369 = vld [vmem:[%s2 + $0x18] sm:$0xff]
      %371 = vset.pattern.permute.xlu0 0
      %372 = vperm.xlu0 %371, %v366
      %v373 = vpop.permute.xlu0 %372
      %376 = vset.pattern.permute.xlu0 0
      %377 = vperm.xlu0 %376, %v367
      %v378 = vpop.permute.xlu0 %377
      %381 = vset.pattern.permute.xlu0 0
      %382 = vperm.xlu0 %381, %v368
      %v383 = vpop.permute.xlu0 %382
      %386 = vset.pattern.permute.xlu0 0
      %387 = vperm.xlu0 %386, %v369
      %v388 = vpop.permute.xlu0 %387
      %v390 = vadd.f32 %v373, 0.0
      %v391 = vadd.f32 %v378, 0.0
      %v392 = vadd.f32 %v383, 0.0
      %v393 = vadd.f32 %v388, 0.0
      %v394 = vld [vmem:[%s1] sm:$0xff]
      %v395 = vld [vmem:[%s1 + $0x8] sm:$0xff]
      %v396 = vld [vmem:[%s1 + $0x10] sm:$0xff]
      %v397 = vld [vmem:[%s1 + $0x18] sm:$0xff]
      %vm398 = vcmask 31744
      %v400 = vsel %vm398, %v394, 0
      %v403 = vsel %vm398, %v395, 0
      %v406 = vsel %vm398, %v396, 0
      %v409 = vsel %vm398, %v397, 0
      %vm411 = vcmask 1043456
      %v413 = vsel %vm411, %v365, 0
      %415 = vmatprep.subr.mxu0 0.0
      %416 = vmatpush1.msra.mxu0 0.0
      %417 = vmatprep.subr.mxu0 0.0
      %418 = vmatpush1.msra.mxu0 0.0
      %419 = vmatprep.subr.mxu0 0.0
      %420 = vmatpush1.msra.mxu0 0.0
      %421 = vmatprep.subr.mxu0 0.0
      %422 = vmatpush1.msra.mxu0 0.0
      %423 = vmatprep.subr.mxu0 0.0
      %424 = vmatpush1.msra.mxu0 0.0
      %425 = vmatprep.subr.mxu0 0.0
      %426 = vmatpush1.msra.mxu0 0.0
      %427 = vmatprep.subr.mxu0 0.0
      %428 = vmatpush1.msra.mxu0 0.0
      %429 = vmatprep.subr.mxu0 0.0
      %430 = vmatpush1.msra.mxu0 0.0
      %431 = vmatprep.subr.mxu0 0.0
      %432 = vmatpush1.msra.mxu0 0.0
      %433 = vmatprep.subr.mxu0 0.0
      %434 = vmatpush1.msra.mxu0 0.0
      %435 = vmatprep.subr.mxu0 0.0
      %436 = vmatpush1.msra.mxu0 0.0
      %437 = vmatprep.subr.mxu0 0.0
      %438 = vmatpush1.msra.mxu0 0.0
      %439 = vmatprep.subr.mxu0 0.0
      %440 = vmatpush1.msra.mxu0 0.0
      %441 = vmatprep.subr.mxu0 0.0
      %442 = vmatpush1.msra.mxu0 0.0
      %443 = vmatprep.subr.mxu0 0.0
      %444 = vmatpush1.msra.mxu0 0.0
      %445 = vmatprep.subr.mxu0 0.0
      %446 = vmatpush1.msra.mxu0 %v413
      %447 = vmatprep.subr.mxu0 0.0
      %448 = vmatpush2.msra.mxu0 0.0
      %449 = vmatprep.subr.mxu0 0.0
      %450 = vmatpush2.msra.mxu0 0.0
      %451 = vmatprep.subr.mxu0 0.0
      %452 = vmatpush2.msra.mxu0 0.0
      %453 = vmatprep.subr.mxu0 0.0
      %454 = vmatpush2.msra.mxu0 0.0
      %455 = vmatprep.subr.mxu0 0.0
      %456 = vmatpush2.msra.mxu0 0.0
      %457 = vmatprep.subr.mxu0 0.0
      %458 = vmatpush2.msra.mxu0 0.0
      %459 = vmatprep.subr.mxu0 0.0
      %460 = vmatpush2.msra.mxu0 0.0
      %461 = vmatprep.subr.mxu0 0.0
      %462 = vmatpush2.msra.mxu0 0.0
      %463 = vmatprep.subr.mxu0 0.0
      %464 = vmatpush2.msra.mxu0 0.0
      %465 = vmatprep.subr.mxu0 0.0
      %466 = vmatpush2.msra.mxu0 0.0
      %467 = vmatprep.subr.mxu0 0.0
      %468 = vmatpush2.msra.mxu0 0.0
      %469 = vmatprep.subr.mxu0 0.0
      %470 = vmatpush2.msra.mxu0 0.0
      %471 = vmatprep.subr.mxu0 0.0
      %472 = vmatpush2.msra.mxu0 0.0
      %473 = vmatprep.subr.mxu0 0.0
      %474 = vmatpush2.msra.mxu0 0.0
      %475 = vmatprep.subr.mxu0 0.0
      %476 = vmatpush2.msra.mxu0 0.0
      %477 = vmatprep.subr.mxu0 0.0
      %478 = vmatpush2.msra.mxu0 0.0
      %479 = vmatprep.mubr.f32.mxu0 0.0
      %480 = vmatmul.mubr.f32.gmra.mxu0 %v400
      %v481 = vpop.f32.mrf.mxu0
      %v482 = vadd.f32 0.0, %v481
      %v483 = vpop.f32.mrf.mxu0
      %484 = vmatprep.mubr.f32.mxu0 0.0
      %485 = vmatmul.mubr.f32.gmra.mxu0 %v403
      %v486 = vpop.f32.mrf.mxu0
      %v487 = vadd.f32 0.0, %v486
      %v488 = vpop.f32.mrf.mxu0
      %489 = vmatprep.mubr.f32.mxu0 0.0
      %490 = vmatmul.mubr.f32.gmra.mxu0 %v406
      %v491 = vpop.f32.mrf.mxu0
      %v492 = vadd.f32 0.0, %v491
      %v493 = vpop.f32.mrf.mxu0
      %494 = vmatprep.mubr.f32.mxu0 0.0
      %495 = vmatmul.mubr.f32.gmra.mxu0 %v409
      %v496 = vpop.f32.mrf.mxu0
      %v497 = vadd.f32 0.0, %v496
      %v498 = vpop.f32.mrf.mxu0
      %499 = vdwg.mxu0
      %v500 = vadd.f32 %v390, %v482
      %v501 = vadd.f32 %v391, %v487
      %v502 = vadd.f32 %v392, %v492
      %v503 = vadd.f32 %v393, %v497
      %s504 = scalar_lea.vmem %s1, 32
      %v505 = vld [vmem:[%s504] sm:$0xff]
      %v506 = vld [vmem:[%s504 + $0x8] sm:$0xff]
      %v507 = vld [vmem:[%s504 + $0x10] sm:$0xff]
      %v508 = vld [vmem:[%s504 + $0x18] sm:$0xff]
      %509 = vrot.lane.b32.xlu0 %v365, 127
      %v510 = vpop.permute.xlu0 %509
      %v512 = vsel %vm398, %v505, 0
      %v515 = vsel %vm398, %v506, 0
      %v518 = vsel %vm398, %v507, 0
      %v521 = vsel %vm398, %v508, 0
      %v523 = vsel %vm411, %v510, 0
      %525 = vmatprep.subr.mxu0 0.0
      %526 = vmatpush1.msra.mxu0 0.0
      %527 = vmatprep.subr.mxu0 0.0
      %528 = vmatpush1.msra.mxu0 0.0
      %529 = vmatprep.subr.mxu0 0.0
      %530 = vmatpush1.msra.mxu0 0.0
      %531 = vmatprep.subr.mxu0 0.0
      %532 = vmatpush1.msra.mxu0 0.0
      %533 = vmatprep.subr.mxu0 0.0
      %534 = vmatpush1.msra.mxu0 0.0
      %535 = vmatprep.subr.mxu0 0.0
      %536 = vmatpush1.msra.mxu0 0.0
      %537 = vmatprep.subr.mxu0 0.0
      %538 = vmatpush1.msra.mxu0 0.0
      %539 = vmatprep.subr.mxu0 0.0
      %540 = vmatpush1.msra.mxu0 0.0
      %541 = vmatprep.subr.mxu0 0.0
      %542 = vmatpush1.msra.mxu0 0.0
      %543 = vmatprep.subr.mxu0 0.0
      %544 = vmatpush1.msra.mxu0 0.0
      %545 = vmatprep.subr.mxu0 0.0
      %546 = vmatpush1.msra.mxu0 0.0
      %547 = vmatprep.subr.mxu0 0.0
      %548 = vmatpush1.msra.mxu0 0.0
      %549 = vmatprep.subr.mxu0 0.0
      %550 = vmatpush1.msra.mxu0 0.0
      %551 = vmatprep.subr.mxu0 0.0
      %552 = vmatpush1.msra.mxu0 0.0
      %553 = vmatprep.subr.mxu0 0.0
      %554 = vmatpush1.msra.mxu0 0.0
      %555 = vmatprep.subr.mxu0 0.0
      %556 = vmatpush1.msra.mxu0 %v523
      %557 = vmatprep.subr.mxu0 0.0
      %558 = vmatpush2.msra.mxu0 0.0
      %559 = vmatprep.subr.mxu0 0.0
      %560 = vmatpush2.msra.mxu0 0.0
      %561 = vmatprep.subr.mxu0 0.0
      %562 = vmatpush2.msra.mxu0 0.0
      %563 = vmatprep.subr.mxu0 0.0
      %564 = vmatpush2.msra.mxu0 0.0
      %565 = vmatprep.subr.mxu0 0.0
      %566 = vmatpush2.msra.mxu0 0.0
      %567 = vmatprep.subr.mxu0 0.0
      %568 = vmatpush2.msra.mxu0 0.0
      %569 = vmatprep.subr.mxu0 0.0
      %570 = vmatpush2.msra.mxu0 0.0
      %571 = vmatprep.subr.mxu0 0.0
      %572 = vmatpush2.msra.mxu0 0.0
      %573 = vmatprep.subr.mxu0 0.0
      %574 = vmatpush2.msra.mxu0 0.0
      %575 = vmatprep.subr.mxu0 0.0
      %576 = vmatpush2.msra.mxu0 0.0
      %577 = vmatprep.subr.mxu0 0.0
      %578 = vmatpush2.msra.mxu0 0.0
      %579 = vmatprep.subr.mxu0 0.0
      %580 = vmatpush2.msra.mxu0 0.0
      %581 = vmatprep.subr.mxu0 0.0
      %582 = vmatpush2.msra.mxu0 0.0
      %583 = vmatprep.subr.mxu0 0.0
      %584 = vmatpush2.msra.mxu0 0.0
      %585 = vmatprep.subr.mxu0 0.0
      %586 = vmatpush2.msra.mxu0 0.0
      %587 = vmatprep.subr.mxu0 0.0
      %588 = vmatpush2.msra.mxu0 0.0
      %589 = vmatprep.mubr.f32.mxu0 0.0
      %590 = vmatmul.mubr.f32.gmra.mxu0 %v512
      %v591 = vpop.f32.mrf.mxu0
      %v592 = vadd.f32 0.0, %v591
      %v593 = vpop.f32.mrf.mxu0
      %594 = vmatprep.mubr.f32.mxu0 0.0
      %595 = vmatmul.mubr.f32.gmra.mxu0 %v515
      %v596 = vpop.f32.mrf.mxu0
      %v597 = vadd.f32 0.0, %v596
      %v598 = vpop.f32.mrf.mxu0
      %599 = vmatprep.mubr.f32.mxu0 0.0
      %600 = vmatmul.mubr.f32.gmra.mxu0 %v518
      %v601 = vpop.f32.mrf.mxu0
      %v602 = vadd.f32 0.0, %v601
      %v603 = vpop.f32.mrf.mxu0
      %604 = vmatprep.mubr.f32.mxu0 0.0
      %605 = vmatmul.mubr.f32.gmra.mxu0 %v521
      %v606 = vpop.f32.mrf.mxu0
      %v607 = vadd.f32 0.0, %v606
      %v608 = vpop.f32.mrf.mxu0
      %609 = vdwg.mxu0
      %v610 = vadd.f32 %v500, %v592
      %v611 = vadd.f32 %v501, %v597
      %v612 = vadd.f32 %v502, %v602
      %v613 = vadd.f32 %v503, %v607
      %s614 = scalar_lea.vmem %s1, 64
      %v615 = vld [vmem:[%s614] sm:$0xff]
      %v616 = vld [vmem:[%s614 + $0x8] sm:$0xff]
      %v617 = vld [vmem:[%s614 + $0x10] sm:$0xff]
      %v618 = vld [vmem:[%s614 + $0x18] sm:$0xff]
      %619 = vrot.lane.b32.xlu0 %v365, 126
      %v620 = vpop.permute.xlu0 %619
      %v622 = vsel %vm398, %v615, 0
      %v625 = vsel %vm398, %v616, 0
      %v628 = vsel %vm398, %v617, 0
      %v631 = vsel %vm398, %v618, 0
      %v633 = vsel %vm411, %v620, 0
      %635 = vmatprep.subr.mxu0 0.0
      %636 = vmatpush1.msra.mxu0 0.0
      %637 = vmatprep.subr.mxu0 0.0
      %638 = vmatpush1.msra.mxu0 0.0
      %639 = vmatprep.subr.mxu0 0.0
      %640 = vmatpush1.msra.mxu0 0.0
      %641 = vmatprep.subr.mxu0 0.0
      %642 = vmatpush1.msra.mxu0 0.0
      %643 = vmatprep.subr.mxu0 0.0
      %644 = vmatpush1.msra.mxu0 0.0
      %645 = vmatprep.subr.mxu0 0.0
      %646 = vmatpush1.msra.mxu0 0.0
      %647 = vmatprep.subr.mxu0 0.0
      %648 = vmatpush1.msra.mxu0 0.0
      %649 = vmatprep.subr.mxu0 0.0
      %650 = vmatpush1.msra.mxu0 0.0
      %651 = vmatprep.subr.mxu0 0.0
      %652 = vmatpush1.msra.mxu0 0.0
      %653 = vmatprep.subr.mxu0 0.0
      %654 = vmatpush1.msra.mxu0 0.0
      %655 = vmatprep.subr.mxu0 0.0
      %656 = vmatpush1.msra.mxu0 0.0
      %657 = vmatprep.subr.mxu0 0.0
      %658 = vmatpush1.msra.mxu0 0.0
      %659 = vmatprep.subr.mxu0 0.0
      %660 = vmatpush1.msra.mxu0 0.0
      %661 = vmatprep.subr.mxu0 0.0
      %662 = vmatpush1.msra.mxu0 0.0
      %663 = vmatprep.subr.mxu0 0.0
      %664 = vmatpush1.msra.mxu0 0.0
      %665 = vmatprep.subr.mxu0 0.0
      %666 = vmatpush1.msra.mxu0 %v633
      %667 = vmatprep.subr.mxu0 0.0
      %668 = vmatpush2.msra.mxu0 0.0
      %669 = vmatprep.subr.mxu0 0.0
      %670 = vmatpush2.msra.mxu0 0.0
      %671 = vmatprep.subr.mxu0 0.0
      %672 = vmatpush2.msra.mxu0 0.0
      %673 = vmatprep.subr.mxu0 0.0
      %674 = vmatpush2.msra.mxu0 0.0
      %675 = vmatprep.subr.mxu0 0.0
      %676 = vmatpush2.msra.mxu0 0.0
      %677 = vmatprep.subr.mxu0 0.0
      %678 = vmatpush2.msra.mxu0 0.0
      %679 = vmatprep.subr.mxu0 0.0
      %680 = vmatpush2.msra.mxu0 0.0
      %681 = vmatprep.subr.mxu0 0.0
      %682 = vmatpush2.msra.mxu0 0.0
      %683 = vmatprep.subr.mxu0 0.0
      %684 = vmatpush2.msra.mxu0 0.0
      %685 = vmatprep.subr.mxu0 0.0
      %686 = vmatpush2.msra.mxu0 0.0
      %687 = vmatprep.subr.mxu0 0.0
      %688 = vmatpush2.msra.mxu0 0.0
      %689 = vmatprep.subr.mxu0 0.0
      %690 = vmatpush2.msra.mxu0 0.0
      %691 = vmatprep.subr.mxu0 0.0
      %692 = vmatpush2.msra.mxu0 0.0
      %693 = vmatprep.subr.mxu0 0.0
      %694 = vmatpush2.msra.mxu0 0.0
      %695 = vmatprep.subr.mxu0 0.0
      %696 = vmatpush2.msra.mxu0 0.0
      %697 = vmatprep.subr.mxu0 0.0
      %698 = vmatpush2.msra.mxu0 0.0
      %699 = vmatprep.mubr.f32.mxu0 0.0
      %700 = vmatmul.mubr.f32.gmra.mxu0 %v622
      %v701 = vpop.f32.mrf.mxu0
      %v702 = vadd.f32 0.0, %v701
      %v703 = vpop.f32.mrf.mxu0
      %704 = vmatprep.mubr.f32.mxu0 0.0
      %705 = vmatmul.mubr.f32.gmra.mxu0 %v625
      %v706 = vpop.f32.mrf.mxu0
      %v707 = vadd.f32 0.0, %v706
      %v708 = vpop.f32.mrf.mxu0
      %709 = vmatprep.mubr.f32.mxu0 0.0
      %710 = vmatmul.mubr.f32.gmra.mxu0 %v628
      %v711 = vpop.f32.mrf.mxu0
      %v712 = vadd.f32 0.0, %v711
      %v713 = vpop.f32.mrf.mxu0
      %714 = vmatprep.mubr.f32.mxu0 0.0
      %715 = vmatmul.mubr.f32.gmra.mxu0 %v631
      %v716 = vpop.f32.mrf.mxu0
      %v717 = vadd.f32 0.0, %v716
      %v718 = vpop.f32.mrf.mxu0
      %719 = vdwg.mxu0
      %v720 = vadd.f32 %v610, %v702
      %v721 = vadd.f32 %v611, %v707
      %v722 = vadd.f32 %v612, %v712
      %v723 = vadd.f32 %v613, %v717
      %vm724 = vcmp.gt.f32.partialorder %v720, 0.0
      %vm725 = vcmp.gt.f32.partialorder %v721, 0.0
      %vm726 = vcmp.gt.f32.partialorder %v722, 0.0
      %vm727 = vcmp.gt.f32.partialorder %v723, 0.0
      %v728 = vmul.f32 %v720, 1.442695
      %v729 = vpow.pop %v728
      %v730 = vmul.f32 %v721, 1.442695
      %v731 = vpow.pop %v730
      %v732 = vmul.f32 %v722, 1.442695
      %v733 = vpow.pop %v732
      %v734 = vmul.f32 %v723, 1.442695
      %v735 = vpow.pop %v734
      %v736 = vsub.f32 %v729, 1.0
      %v737 = vsub.f32 %v731, 1.0
      %v738 = vsub.f32 %v733, 1.0
      %v739 = vsub.f32 %v735, 1.0
      %v740 = vsel %vm724, %v720, %v736
      %v741 = vsel %vm725, %v721, %v737
      %v742 = vsel %vm726, %v722, %v738
      %v743 = vsel %vm727, %v723, %v739
      %748 = vrot.lane.b32.xlu0 %v740, 1
      %v749 = vpop.permute.xlu0 %748
      %750 = vrot.lane.b32.xlu0 %v741, 1
      %v751 = vpop.permute.xlu0 %750
      %752 = vrot.lane.b32.xlu0 %v742, 1
      %v753 = vpop.permute.xlu0 %752
      %754 = vrot.lane.b32.xlu0 %v743, 1
      %v755 = vpop.permute.xlu0 %754
      %v760 = vsel %vm362, 0.0, %v749
      %v761 = vsel %vm362, 0.0, %v751
      %v762 = vsel %vm362, 0.0, %v753
      %v763 = vsel %vm362, 0.0, %v755
      %v764 = vsel %vm364, %v760, 0.0
      %v765 = vsel %vm364, %v761, 0.0
      %v766 = vsel %vm364, %v762, 0.0
      %v767 = vsel %vm364, %v763, 0.0
      %v768 = vld [vmem:[%s4] sm:$0xff]
      %v769 = vld [vmem:[%s4 + $0x8] sm:$0xff]
      %v770 = vld [vmem:[%s4 + $0x10] sm:$0xff]
      %v771 = vld [vmem:[%s4 + $0x18] sm:$0xff]
      %773 = vset.pattern.permute.xlu0 0
      %774 = vperm.xlu0 %773, %v768
      %v775 = vpop.permute.xlu0 %774
      %778 = vset.pattern.permute.xlu0 0
      %779 = vperm.xlu0 %778, %v769
      %v780 = vpop.permute.xlu0 %779
      %783 = vset.pattern.permute.xlu0 0
      %784 = vperm.xlu0 %783, %v770
      %v785 = vpop.permute.xlu0 %784
      %788 = vset.pattern.permute.xlu0 0
      %789 = vperm.xlu0 %788, %v771
      %v790 = vpop.permute.xlu0 %789
      %v792 = vadd.f32 %v775, 0.0
      %v793 = vadd.f32 %v780, 0.0
      %v794 = vadd.f32 %v785, 0.0
      %v795 = vadd.f32 %v790, 0.0
      %v796 = vld [vmem:[%s3] sm:$0xff]
      %v797 = vld [vmem:[%s3 + $0x8] sm:$0xff]
      %v798 = vld [vmem:[%s3 + $0x10] sm:$0xff]
      %v799 = vld [vmem:[%s3 + $0x18] sm:$0xff]
      %vm800 = vcmask 261120
      %v802 = vsel %vm800, %v796, 0
      %v805 = vsel %vm800, %v797, 0
      %v808 = vsel %vm800, %v798, 0
      %v811 = vsel %vm800, %v799, 0
      %813 = vmatprep.subr.mxu0 0.0
      %814 = vmatpush1.msra.mxu0 0.0
      %815 = vmatprep.subr.mxu0 0.0
      %816 = vmatpush1.msra.mxu0 0.0
      %817 = vmatprep.subr.mxu0 0.0
      %818 = vmatpush1.msra.mxu0 0.0
      %819 = vmatprep.subr.mxu0 0.0
      %820 = vmatpush1.msra.mxu0 0.0
      %821 = vmatprep.subr.mxu0 0.0
      %822 = vmatpush1.msra.mxu0 0.0
      %823 = vmatprep.subr.mxu0 0.0
      %824 = vmatpush1.msra.mxu0 0.0
      %825 = vmatprep.subr.mxu0 0.0
      %826 = vmatpush1.msra.mxu0 0.0
      %827 = vmatprep.subr.mxu0 0.0
      %828 = vmatpush1.msra.mxu0 0.0
      %829 = vmatprep.subr.mxu0 0.0
      %830 = vmatpush1.msra.mxu0 0.0
      %831 = vmatprep.subr.mxu0 0.0
      %832 = vmatpush1.msra.mxu0 0.0
      %833 = vmatprep.subr.mxu0 0.0
      %834 = vmatpush1.msra.mxu0 0.0
      %835 = vmatprep.subr.mxu0 0.0
      %836 = vmatpush1.msra.mxu0 0.0
      %837 = vmatprep.subr.mxu0 0.0
      %838 = vmatpush1.msra.mxu0 %v767
      %839 = vmatprep.subr.mxu0 0.0
      %840 = vmatpush1.msra.mxu0 %v766
      %841 = vmatprep.subr.mxu0 0.0
      %842 = vmatpush1.msra.mxu0 %v765
      %843 = vmatprep.subr.mxu0 0.0
      %844 = vmatpush1.msra.mxu0 %v764
      %845 = vmatprep.subr.mxu0 0.0
      %846 = vmatpush2.msra.mxu0 0.0
      %847 = vmatprep.subr.mxu0 0.0
      %848 = vmatpush2.msra.mxu0 0.0
      %849 = vmatprep.subr.mxu0 0.0
      %850 = vmatpush2.msra.mxu0 0.0
      %851 = vmatprep.subr.mxu0 0.0
      %852 = vmatpush2.msra.mxu0 0.0
      %853 = vmatprep.subr.mxu0 0.0
      %854 = vmatpush2.msra.mxu0 0.0
      %855 = vmatprep.subr.mxu0 0.0
      %856 = vmatpush2.msra.mxu0 0.0
      %857 = vmatprep.subr.mxu0 0.0
      %858 = vmatpush2.msra.mxu0 0.0
      %859 = vmatprep.subr.mxu0 0.0
      %860 = vmatpush2.msra.mxu0 0.0
      %861 = vmatprep.subr.mxu0 0.0
      %862 = vmatpush2.msra.mxu0 0.0
      %863 = vmatprep.subr.mxu0 0.0
      %864 = vmatpush2.msra.mxu0 0.0
      %865 = vmatprep.subr.mxu0 0.0
      %866 = vmatpush2.msra.mxu0 0.0
      %867 = vmatprep.subr.mxu0 0.0
      %868 = vmatpush2.msra.mxu0 0.0
      %869 = vmatprep.subr.mxu0 0.0
      %870 = vmatpush2.msra.mxu0 0.0
      %871 = vmatprep.subr.mxu0 0.0
      %872 = vmatpush2.msra.mxu0 0.0
      %873 = vmatprep.subr.mxu0 0.0
      %874 = vmatpush2.msra.mxu0 0.0
      %875 = vmatprep.subr.mxu0 0.0
      %876 = vmatpush2.msra.mxu0 0.0
      %877 = vmatprep.mubr.f32.mxu0 0.0
      %878 = vmatmul.mubr.f32.gmra.mxu0 %v802
      %v879 = vpop.f32.mrf.mxu0
      %v880 = vadd.f32 0.0, %v879
      %v881 = vpop.f32.mrf.mxu0
      %882 = vmatprep.mubr.f32.mxu0 0.0
      %883 = vmatmul.mubr.f32.gmra.mxu0 %v805
      %v884 = vpop.f32.mrf.mxu0
      %v885 = vadd.f32 0.0, %v884
      %v886 = vpop.f32.mrf.mxu0
      %887 = vmatprep.mubr.f32.mxu0 0.0
      %888 = vmatmul.mubr.f32.gmra.mxu0 %v808
      %v889 = vpop.f32.mrf.mxu0
      %v890 = vadd.f32 0.0, %v889
      %v891 = vpop.f32.mrf.mxu0
      %892 = vmatprep.mubr.f32.mxu0 0.0
      %893 = vmatmul.mubr.f32.gmra.mxu0 %v811
      %v894 = vpop.f32.mrf.mxu0
      %v895 = vadd.f32 0.0, %v894
      %v896 = vpop.f32.mrf.mxu0
      %897 = vdwg.mxu0
      %v898 = vadd.f32 %v792, %v880
      %v899 = vadd.f32 %v793, %v885
      %v900 = vadd.f32 %v794, %v890
      %v901 = vadd.f32 %v795, %v895
      %s902 = scalar_lea.vmem %s3, 32
      %v903 = vld [vmem:[%s902] sm:$0xff]
      %v904 = vld [vmem:[%s902 + $0x8] sm:$0xff]
      %v905 = vld [vmem:[%s902 + $0x10] sm:$0xff]
      %v906 = vld [vmem:[%s902 + $0x18] sm:$0xff]
      %911 = vrot.lane.b32.xlu0 %v764, 127
      %v912 = vpop.permute.xlu0 %911
      %913 = vrot.lane.b32.xlu0 %v765, 127
      %v914 = vpop.permute.xlu0 %913
      %915 = vrot.lane.b32.xlu0 %v766, 127
      %v916 = vpop.permute.xlu0 %915
      %917 = vrot.lane.b32.xlu0 %v767, 127
      %v918 = vpop.permute.xlu0 %917
      %v924 = vsel %vm800, %v903, 0
      %v927 = vsel %vm800, %v904, 0
      %v930 = vsel %vm800, %v905, 0
      %v933 = vsel %vm800, %v906, 0
      %935 = vmatprep.subr.mxu0 0.0
      %936 = vmatpush1.msra.mxu0 0.0
      %937 = vmatprep.subr.mxu0 0.0
      %938 = vmatpush1.msra.mxu0 0.0
      %939 = vmatprep.subr.mxu0 0.0
      %940 = vmatpush1.msra.mxu0 0.0
      %941 = vmatprep.subr.mxu0 0.0
      %942 = vmatpush1.msra.mxu0 0.0
      %943 = vmatprep.subr.mxu0 0.0
      %944 = vmatpush1.msra.mxu0 0.0
      %945 = vmatprep.subr.mxu0 0.0
      %946 = vmatpush1.msra.mxu0 0.0
      %947 = vmatprep.subr.mxu0 0.0
      %948 = vmatpush1.msra.mxu0 0.0
      %949 = vmatprep.subr.mxu0 0.0
      %950 = vmatpush1.msra.mxu0 0.0
      %951 = vmatprep.subr.mxu0 0.0
      %952 = vmatpush1.msra.mxu0 0.0
      %953 = vmatprep.subr.mxu0 0.0
      %954 = vmatpush1.msra.mxu0 0.0
      %955 = vmatprep.subr.mxu0 0.0
      %956 = vmatpush1.msra.mxu0 0.0
      %957 = vmatprep.subr.mxu0 0.0
      %958 = vmatpush1.msra.mxu0 0.0
      %959 = vmatprep.subr.mxu0 0.0
      %960 = vmatpush1.msra.mxu0 %v918
      %961 = vmatprep.subr.mxu0 0.0
      %962 = vmatpush1.msra.mxu0 %v916
      %963 = vmatprep.subr.mxu0 0.0
      %964 = vmatpush1.msra.mxu0 %v914
      %965 = vmatprep.subr.mxu0 0.0
      %966 = vmatpush1.msra.mxu0 %v912
      %967 = vmatprep.subr.mxu0 0.0
      %968 = vmatpush2.msra.mxu0 0.0
      %969 = vmatprep.subr.mxu0 0.0
      %970 = vmatpush2.msra.mxu0 0.0
      %971 = vmatprep.subr.mxu0 0.0
      %972 = vmatpush2.msra.mxu0 0.0
      %973 = vmatprep.subr.mxu0 0.0
      %974 = vmatpush2.msra.mxu0 0.0
      %975 = vmatprep.subr.mxu0 0.0
      %976 = vmatpush2.msra.mxu0 0.0
      %977 = vmatprep.subr.mxu0 0.0
      %978 = vmatpush2.msra.mxu0 0.0
      %979 = vmatprep.subr.mxu0 0.0
      %980 = vmatpush2.msra.mxu0 0.0
      %981 = vmatprep.subr.mxu0 0.0
      %982 = vmatpush2.msra.mxu0 0.0
      %983 = vmatprep.subr.mxu0 0.0
      %984 = vmatpush2.msra.mxu0 0.0
      %985 = vmatprep.subr.mxu0 0.0
      %986 = vmatpush2.msra.mxu0 0.0
      %987 = vmatprep.subr.mxu0 0.0
      %988 = vmatpush2.msra.mxu0 0.0
      %989 = vmatprep.subr.mxu0 0.0
      %990 = vmatpush2.msra.mxu0 0.0
      %991 = vmatprep.subr.mxu0 0.0
      %992 = vmatpush2.msra.mxu0 0.0
      %993 = vmatprep.subr.mxu0 0.0
      %994 = vmatpush2.msra.mxu0 0.0
      %995 = vmatprep.subr.mxu0 0.0
      %996 = vmatpush2.msra.mxu0 0.0
      %997 = vmatprep.subr.mxu0 0.0
      %998 = vmatpush2.msra.mxu0 0.0
      %999 = vmatprep.mubr.f32.mxu0 0.0
      %1000 = vmatmul.mubr.f32.gmra.mxu0 %v924
      %v1001 = vpop.f32.mrf.mxu0
      %v1002 = vadd.f32 0.0, %v1001
      %v1003 = vpop.f32.mrf.mxu0
      %1004 = vmatprep.mubr.f32.mxu0 0.0
      %1005 = vmatmul.mubr.f32.gmra.mxu0 %v927
      %v1006 = vpop.f32.mrf.mxu0
      %v1007 = vadd.f32 0.0, %v1006
      %v1008 = vpop.f32.mrf.mxu0
      %1009 = vmatprep.mubr.f32.mxu0 0.0
      %1010 = vmatmul.mubr.f32.gmra.mxu0 %v930
      %v1011 = vpop.f32.mrf.mxu0
      %v1012 = vadd.f32 0.0, %v1011
      %v1013 = vpop.f32.mrf.mxu0
      %1014 = vmatprep.mubr.f32.mxu0 0.0
      %1015 = vmatmul.mubr.f32.gmra.mxu0 %v933
      %v1016 = vpop.f32.mrf.mxu0
      %v1017 = vadd.f32 0.0, %v1016
      %v1018 = vpop.f32.mrf.mxu0
      %1019 = vdwg.mxu0
      %v1020 = vadd.f32 %v898, %v1002
      %v1021 = vadd.f32 %v899, %v1007
      %v1022 = vadd.f32 %v900, %v1012
      %v1023 = vadd.f32 %v901, %v1017
      %s1024 = scalar_lea.vmem %s3, 64
      %v1025 = vld [vmem:[%s1024] sm:$0xff]
      %v1026 = vld [vmem:[%s1024 + $0x8] sm:$0xff]
      %v1027 = vld [vmem:[%s1024 + $0x10] sm:$0xff]
      %v1028 = vld [vmem:[%s1024 + $0x18] sm:$0xff]
      %1029 = vrot.lane.b32.xlu0 %v764, 126
      %v1030 = vpop.permute.xlu0 %1029
      %1031 = vrot.lane.b32.xlu0 %v765, 126
      %v1032 = vpop.permute.xlu0 %1031
      %1033 = vrot.lane.b32.xlu0 %v766, 126
      %v1034 = vpop.permute.xlu0 %1033
      %1035 = vrot.lane.b32.xlu0 %v767, 126
      %v1036 = vpop.permute.xlu0 %1035
      %v1042 = vsel %vm800, %v1025, 0
      %v1045 = vsel %vm800, %v1026, 0
      %v1048 = vsel %vm800, %v1027, 0
      %v1051 = vsel %vm800, %v1028, 0
      %1053 = vmatprep.subr.mxu0 0.0
      %1054 = vmatpush1.msra.mxu0 0.0
      %1055 = vmatprep.subr.mxu0 0.0
      %1056 = vmatpush1.msra.mxu0 0.0
      %1057 = vmatprep.subr.mxu0 0.0
      %1058 = vmatpush1.msra.mxu0 0.0
      %1059 = vmatprep.subr.mxu0 0.0
      %1060 = vmatpush1.msra.mxu0 0.0
      %1061 = vmatprep.subr.mxu0 0.0
      %1062 = vmatpush1.msra.mxu0 0.0
      %1063 = vmatprep.subr.mxu0 0.0
      %1064 = vmatpush1.msra.mxu0 0.0
      %1065 = vmatprep.subr.mxu0 0.0
      %1066 = vmatpush1.msra.mxu0 0.0
      %1067 = vmatprep.subr.mxu0 0.0
      %1068 = vmatpush1.msra.mxu0 0.0
      %1069 = vmatprep.subr.mxu0 0.0
      %1070 = vmatpush1.msra.mxu0 0.0
      %1071 = vmatprep.subr.mxu0 0.0
      %1072 = vmatpush1.msra.mxu0 0.0
      %1073 = vmatprep.subr.mxu0 0.0
      %1074 = vmatpush1.msra.mxu0 0.0
      %1075 = vmatprep.subr.mxu0 0.0
      %1076 = vmatpush1.msra.mxu0 0.0
      %1077 = vmatprep.subr.mxu0 0.0
      %1078 = vmatpush1.msra.mxu0 %v1036
      %1079 = vmatprep.subr.mxu0 0.0
      %1080 = vmatpush1.msra.mxu0 %v1034
      %1081 = vmatprep.subr.mxu0 0.0
      %1082 = vmatpush1.msra.mxu0 %v1032
      %1083 = vmatprep.subr.mxu0 0.0
      %1084 = vmatpush1.msra.mxu0 %v1030
      %1085 = vmatprep.subr.mxu0 0.0
      %1086 = vmatpush2.msra.mxu0 0.0
      %1087 = vmatprep.subr.mxu0 0.0
      %1088 = vmatpush2.msra.mxu0 0.0
      %1089 = vmatprep.subr.mxu0 0.0
      %1090 = vmatpush2.msra.mxu0 0.0
      %1091 = vmatprep.subr.mxu0 0.0
      %1092 = vmatpush2.msra.mxu0 0.0
      %1093 = vmatprep.subr.mxu0 0.0
      %1094 = vmatpush2.msra.mxu0 0.0
      %1095 = vmatprep.subr.mxu0 0.0
      %1096 = vmatpush2.msra.mxu0 0.0
      %1097 = vmatprep.subr.mxu0 0.0
      %1098 = vmatpush2.msra.mxu0 0.0
      %1099 = vmatprep.subr.mxu0 0.0
      %1100 = vmatpush2.msra.mxu0 0.0
      %1101 = vmatprep.subr.mxu0 0.0
      %1102 = vmatpush2.msra.mxu0 0.0
      %1103 = vmatprep.subr.mxu0 0.0
      %1104 = vmatpush2.msra.mxu0 0.0
      %1105 = vmatprep.subr.mxu0 0.0
      %1106 = vmatpush2.msra.mxu0 0.0
      %1107 = vmatprep.subr.mxu0 0.0
      %1108 = vmatpush2.msra.mxu0 0.0
      %1109 = vmatprep.subr.mxu0 0.0
      %1110 = vmatpush2.msra.mxu0 0.0
      %1111 = vmatprep.subr.mxu0 0.0
      %1112 = vmatpush2.msra.mxu0 0.0
      %1113 = vmatprep.subr.mxu0 0.0
      %1114 = vmatpush2.msra.mxu0 0.0
      %1115 = vmatprep.subr.mxu0 0.0
      %1116 = vmatpush2.msra.mxu0 0.0
      %1117 = vmatprep.mubr.f32.mxu0 0.0
      %1118 = vmatmul.mubr.f32.gmra.mxu0 %v1042
      %v1119 = vpop.f32.mrf.mxu0
      %v1120 = vadd.f32 0.0, %v1119
      %v1121 = vpop.f32.mrf.mxu0
      %1122 = vmatprep.mubr.f32.mxu0 0.0
      %1123 = vmatmul.mubr.f32.gmra.mxu0 %v1045
      %v1124 = vpop.f32.mrf.mxu0
      %v1125 = vadd.f32 0.0, %v1124
      %v1126 = vpop.f32.mrf.mxu0
      %1127 = vmatprep.mubr.f32.mxu0 0.0
      %1128 = vmatmul.mubr.f32.gmra.mxu0 %v1048
      %v1129 = vpop.f32.mrf.mxu0
      %v1130 = vadd.f32 0.0, %v1129
      %v1131 = vpop.f32.mrf.mxu0
      %1132 = vmatprep.mubr.f32.mxu0 0.0
      %1133 = vmatmul.mubr.f32.gmra.mxu0 %v1051
      %v1134 = vpop.f32.mrf.mxu0
      %v1135 = vadd.f32 0.0, %v1134
      %v1136 = vpop.f32.mrf.mxu0
      %1137 = vdwg.mxu0
      %v1138 = vadd.f32 %v1020, %v1120
      %v1139 = vadd.f32 %v1021, %v1125
      %v1140 = vadd.f32 %v1022, %v1130
      %v1141 = vadd.f32 %v1023, %v1135
      %1142 = vrot.lane.b32.xlu0 %v357, 4
      %v1143 = vpop.permute.xlu0 %1142
      %v1145 = vsel %vm398, 0.0, %v1143
      %vm1146 = vcmask 97280
      %v1147 = vsel %vm1146, %v1145, 0.0
      %v1148 = vld [vmem:[%s6] sm:$0xff]
      %v1149 = vld [vmem:[%s6 + $0x8] sm:$0xff]
      %v1150 = vld [vmem:[%s6 + $0x10] sm:$0xff]
      %v1151 = vld [vmem:[%s6 + $0x18] sm:$0xff]
      %v1152 = vadd.f32 %v1148, 0.0
      %v1153 = vadd.f32 %v1149, 0.0
      %v1154 = vadd.f32 %v1150, 0.0
      %v1155 = vadd.f32 %v1151, 0.0
      %v1156 = vld [vmem:[%s5] sm:$0xff]
      %v1157 = vld [vmem:[%s5 + $0x8] sm:$0xff]
      %v1158 = vld [vmem:[%s5 + $0x10] sm:$0xff]
      %v1159 = vld [vmem:[%s5 + $0x18] sm:$0xff]
      %v1161 = vsel %vm398, %v1156, 0
      %v1164 = vsel %vm398, %v1157, 0
      %v1167 = vsel %vm398, %v1158, 0
      %v1170 = vsel %vm398, %v1159, 0
      %v1173 = vsel %vm411, %v1147, 0
      %1175 = vmatprep.subr.mxu0 0.0
      %1176 = vmatpush1.msra.mxu0 0.0
      %1177 = vmatprep.subr.mxu0 0.0
      %1178 = vmatpush1.msra.mxu0 0.0
      %1179 = vmatprep.subr.mxu0 0.0
      %1180 = vmatpush1.msra.mxu0 0.0
      %1181 = vmatprep.subr.mxu0 0.0
      %1182 = vmatpush1.msra.mxu0 0.0
      %1183 = vmatprep.subr.mxu0 0.0
      %1184 = vmatpush1.msra.mxu0 0.0
      %1185 = vmatprep.subr.mxu0 0.0
      %1186 = vmatpush1.msra.mxu0 0.0
      %1187 = vmatprep.subr.mxu0 0.0
      %1188 = vmatpush1.msra.mxu0 0.0
      %1189 = vmatprep.subr.mxu0 0.0
      %1190 = vmatpush1.msra.mxu0 0.0
      %1191 = vmatprep.subr.mxu0 0.0
      %1192 = vmatpush1.msra.mxu0 0.0
      %1193 = vmatprep.subr.mxu0 0.0
      %1194 = vmatpush1.msra.mxu0 0.0
      %1195 = vmatprep.subr.mxu0 0.0
      %1196 = vmatpush1.msra.mxu0 0.0
      %1197 = vmatprep.subr.mxu0 0.0
      %1198 = vmatpush1.msra.mxu0 0.0
      %1199 = vmatprep.subr.mxu0 0.0
      %1200 = vmatpush1.msra.mxu0 0.0
      %1201 = vmatprep.subr.mxu0 0.0
      %1202 = vmatpush1.msra.mxu0 0.0
      %1203 = vmatprep.subr.mxu0 0.0
      %1204 = vmatpush1.msra.mxu0 0.0
      %1205 = vmatprep.subr.mxu0 0.0
      %1206 = vmatpush1.msra.mxu0 %v1173
      %1207 = vmatprep.subr.mxu0 0.0
      %1208 = vmatpush2.msra.mxu0 0.0
      %1209 = vmatprep.subr.mxu0 0.0
      %1210 = vmatpush2.msra.mxu0 0.0
      %1211 = vmatprep.subr.mxu0 0.0
      %1212 = vmatpush2.msra.mxu0 0.0
      %1213 = vmatprep.subr.mxu0 0.0
      %1214 = vmatpush2.msra.mxu0 0.0
      %1215 = vmatprep.subr.mxu0 0.0
      %1216 = vmatpush2.msra.mxu0 0.0
      %1217 = vmatprep.subr.mxu0 0.0
      %1218 = vmatpush2.msra.mxu0 0.0
      %1219 = vmatprep.subr.mxu0 0.0
      %1220 = vmatpush2.msra.mxu0 0.0
      %1221 = vmatprep.subr.mxu0 0.0
      %1222 = vmatpush2.msra.mxu0 0.0
      %1223 = vmatprep.subr.mxu0 0.0
      %1224 = vmatpush2.msra.mxu0 0.0
      %1225 = vmatprep.subr.mxu0 0.0
      %1226 = vmatpush2.msra.mxu0 0.0
      %1227 = vmatprep.subr.mxu0 0.0
      %1228 = vmatpush2.msra.mxu0 0.0
      %1229 = vmatprep.subr.mxu0 0.0
      %1230 = vmatpush2.msra.mxu0 0.0
      %1231 = vmatprep.subr.mxu0 0.0
      %1232 = vmatpush2.msra.mxu0 0.0
      %1233 = vmatprep.subr.mxu0 0.0
      %1234 = vmatpush2.msra.mxu0 0.0
      %1235 = vmatprep.subr.mxu0 0.0
      %1236 = vmatpush2.msra.mxu0 0.0
      %1237 = vmatprep.subr.mxu0 0.0
      %1238 = vmatpush2.msra.mxu0 0.0
      %1239 = vmatprep.mubr.f32.mxu0 0.0
      %1240 = vmatmul.mubr.f32.gmra.mxu0 %v1161
      %v1241 = vpop.f32.mrf.mxu0
      %v1242 = vadd.f32 0.0, %v1241
      %v1243 = vpop.f32.mrf.mxu0
      %1244 = vmatprep.mubr.f32.mxu0 0.0
      %1245 = vmatmul.mubr.f32.gmra.mxu0 %v1164
      %v1246 = vpop.f32.mrf.mxu0
      %v1247 = vadd.f32 0.0, %v1246
      %v1248 = vpop.f32.mrf.mxu0
      %1249 = vmatprep.mubr.f32.mxu0 0.0
      %1250 = vmatmul.mubr.f32.gmra.mxu0 %v1167
      %v1251 = vpop.f32.mrf.mxu0
      %v1252 = vadd.f32 0.0, %v1251
      %v1253 = vpop.f32.mrf.mxu0
      %1254 = vmatprep.mubr.f32.mxu0 0.0
      %1255 = vmatmul.mubr.f32.gmra.mxu0 %v1170
      %v1256 = vpop.f32.mrf.mxu0
      %v1257 = vadd.f32 0.0, %v1256
      %v1258 = vpop.f32.mrf.mxu0
      %1259 = vdwg.mxu0
      %v1260 = vadd.f32 %v1152, %v1242
      %v1261 = vadd.f32 %v1153, %v1247
      %v1262 = vadd.f32 %v1154, %v1252
      %v1263 = vadd.f32 %v1155, %v1257
      %s1264 = scalar_lea.vmem %s5, 32
      %v1265 = vld [vmem:[%s1264] sm:$0xff]
      %v1266 = vld [vmem:[%s1264 + $0x8] sm:$0xff]
      %v1267 = vld [vmem:[%s1264 + $0x10] sm:$0xff]
      %v1268 = vld [vmem:[%s1264 + $0x18] sm:$0xff]
      %1269 = vrot.lane.b32.xlu0 %v1147, 127
      %v1270 = vpop.permute.xlu0 %1269
      %v1272 = vsel %vm398, %v1265, 0
      %v1275 = vsel %vm398, %v1266, 0
      %v1278 = vsel %vm398, %v1267, 0
      %v1281 = vsel %vm398, %v1268, 0
      %v1283 = vsel %vm411, %v1270, 0
      %1285 = vmatprep.subr.mxu0 0.0
      %1286 = vmatpush1.msra.mxu0 0.0
      %1287 = vmatprep.subr.mxu0 0.0
      %1288 = vmatpush1.msra.mxu0 0.0
      %1289 = vmatprep.subr.mxu0 0.0
      %1290 = vmatpush1.msra.mxu0 0.0
      %1291 = vmatprep.subr.mxu0 0.0
      %1292 = vmatpush1.msra.mxu0 0.0
      %1293 = vmatprep.subr.mxu0 0.0
      %1294 = vmatpush1.msra.mxu0 0.0
      %1295 = vmatprep.subr.mxu0 0.0
      %1296 = vmatpush1.msra.mxu0 0.0
      %1297 = vmatprep.subr.mxu0 0.0
      %1298 = vmatpush1.msra.mxu0 0.0
      %1299 = vmatprep.subr.mxu0 0.0
      %1300 = vmatpush1.msra.mxu0 0.0
      %1301 = vmatprep.subr.mxu0 0.0
      %1302 = vmatpush1.msra.mxu0 0.0
      %1303 = vmatprep.subr.mxu0 0.0
      %1304 = vmatpush1.msra.mxu0 0.0
      %1305 = vmatprep.subr.mxu0 0.0
      %1306 = vmatpush1.msra.mxu0 0.0
      %1307 = vmatprep.subr.mxu0 0.0
      %1308 = vmatpush1.msra.mxu0 0.0
      %1309 = vmatprep.subr.mxu0 0.0
      %1310 = vmatpush1.msra.mxu0 0.0
      %1311 = vmatprep.subr.mxu0 0.0
      %1312 = vmatpush1.msra.mxu0 0.0
      %1313 = vmatprep.subr.mxu0 0.0
      %1314 = vmatpush1.msra.mxu0 0.0
      %1315 = vmatprep.subr.mxu0 0.0
      %1316 = vmatpush1.msra.mxu0 %v1283
      %1317 = vmatprep.subr.mxu0 0.0
      %1318 = vmatpush2.msra.mxu0 0.0
      %1319 = vmatprep.subr.mxu0 0.0
      %1320 = vmatpush2.msra.mxu0 0.0
      %1321 = vmatprep.subr.mxu0 0.0
      %1322 = vmatpush2.msra.mxu0 0.0
      %1323 = vmatprep.subr.mxu0 0.0
      %1324 = vmatpush2.msra.mxu0 0.0
      %1325 = vmatprep.subr.mxu0 0.0
      %1326 = vmatpush2.msra.mxu0 0.0
      %1327 = vmatprep.subr.mxu0 0.0
      %1328 = vmatpush2.msra.mxu0 0.0
      %1329 = vmatprep.subr.mxu0 0.0
      %1330 = vmatpush2.msra.mxu0 0.0
      %1331 = vmatprep.subr.mxu0 0.0
      %1332 = vmatpush2.msra.mxu0 0.0
      %1333 = vmatprep.subr.mxu0 0.0
      %1334 = vmatpush2.msra.mxu0 0.0
      %1335 = vmatprep.subr.mxu0 0.0
      %1336 = vmatpush2.msra.mxu0 0.0
      %1337 = vmatprep.subr.mxu0 0.0
      %1338 = vmatpush2.msra.mxu0 0.0
      %1339 = vmatprep.subr.mxu0 0.0
      %1340 = vmatpush2.msra.mxu0 0.0
      %1341 = vmatprep.subr.mxu0 0.0
      %1342 = vmatpush2.msra.mxu0 0.0
      %1343 = vmatprep.subr.mxu0 0.0
      %1344 = vmatpush2.msra.mxu0 0.0
      %1345 = vmatprep.subr.mxu0 0.0
      %1346 = vmatpush2.msra.mxu0 0.0
      %1347 = vmatprep.subr.mxu0 0.0
      %1348 = vmatpush2.msra.mxu0 0.0
      %1349 = vmatprep.mubr.f32.mxu0 0.0
      %1350 = vmatmul.mubr.f32.gmra.mxu0 %v1272
      %v1351 = vpop.f32.mrf.mxu0
      %v1352 = vadd.f32 0.0, %v1351
      %v1353 = vpop.f32.mrf.mxu0
      %1354 = vmatprep.mubr.f32.mxu0 0.0
      %1355 = vmatmul.mubr.f32.gmra.mxu0 %v1275
      %v1356 = vpop.f32.mrf.mxu0
      %v1357 = vadd.f32 0.0, %v1356
      %v1358 = vpop.f32.mrf.mxu0
      %1359 = vmatprep.mubr.f32.mxu0 0.0
      %1360 = vmatmul.mubr.f32.gmra.mxu0 %v1278
      %v1361 = vpop.f32.mrf.mxu0
      %v1362 = vadd.f32 0.0, %v1361
      %v1363 = vpop.f32.mrf.mxu0
      %1364 = vmatprep.mubr.f32.mxu0 0.0
      %1365 = vmatmul.mubr.f32.gmra.mxu0 %v1281
      %v1366 = vpop.f32.mrf.mxu0
      %v1367 = vadd.f32 0.0, %v1366
      %v1368 = vpop.f32.mrf.mxu0
      %1369 = vdwg.mxu0
      %v1370 = vadd.f32 %v1260, %v1352
      %v1371 = vadd.f32 %v1261, %v1357
      %v1372 = vadd.f32 %v1262, %v1362
      %v1373 = vadd.f32 %v1263, %v1367
      %s1374 = scalar_lea.vmem %s5, 64
      %v1375 = vld [vmem:[%s1374] sm:$0xff]
      %v1376 = vld [vmem:[%s1374 + $0x8] sm:$0xff]
      %v1377 = vld [vmem:[%s1374 + $0x10] sm:$0xff]
      %v1378 = vld [vmem:[%s1374 + $0x18] sm:$0xff]
      %1379 = vrot.lane.b32.xlu0 %v1147, 126
      %v1380 = vpop.permute.xlu0 %1379
      %v1382 = vsel %vm398, %v1375, 0
      %v1385 = vsel %vm398, %v1376, 0
      %v1388 = vsel %vm398, %v1377, 0
      %v1391 = vsel %vm398, %v1378, 0
      %v1393 = vsel %vm411, %v1380, 0
      %1395 = vmatprep.subr.mxu0 0.0
      %1396 = vmatpush1.msra.mxu0 0.0
      %1397 = vmatprep.subr.mxu0 0.0
      %1398 = vmatpush1.msra.mxu0 0.0
      %1399 = vmatprep.subr.mxu0 0.0
      %1400 = vmatpush1.msra.mxu0 0.0
      %1401 = vmatprep.subr.mxu0 0.0
      %1402 = vmatpush1.msra.mxu0 0.0
      %1403 = vmatprep.subr.mxu0 0.0
      %1404 = vmatpush1.msra.mxu0 0.0
      %1405 = vmatprep.subr.mxu0 0.0
      %1406 = vmatpush1.msra.mxu0 0.0
      %1407 = vmatprep.subr.mxu0 0.0
      %1408 = vmatpush1.msra.mxu0 0.0
      %1409 = vmatprep.subr.mxu0 0.0
      %1410 = vmatpush1.msra.mxu0 0.0
      %1411 = vmatprep.subr.mxu0 0.0
      %1412 = vmatpush1.msra.mxu0 0.0
      %1413 = vmatprep.subr.mxu0 0.0
      %1414 = vmatpush1.msra.mxu0 0.0
      %1415 = vmatprep.subr.mxu0 0.0
      %1416 = vmatpush1.msra.mxu0 0.0
      %1417 = vmatprep.subr.mxu0 0.0
      %1418 = vmatpush1.msra.mxu0 0.0
      %1419 = vmatprep.subr.mxu0 0.0
      %1420 = vmatpush1.msra.mxu0 0.0
      %1421 = vmatprep.subr.mxu0 0.0
      %1422 = vmatpush1.msra.mxu0 0.0
      %1423 = vmatprep.subr.mxu0 0.0
      %1424 = vmatpush1.msra.mxu0 0.0
      %1425 = vmatprep.subr.mxu0 0.0
      %1426 = vmatpush1.msra.mxu0 %v1393
      %1427 = vmatprep.subr.mxu0 0.0
      %1428 = vmatpush2.msra.mxu0 0.0
      %1429 = vmatprep.subr.mxu0 0.0
      %1430 = vmatpush2.msra.mxu0 0.0
      %1431 = vmatprep.subr.mxu0 0.0
      %1432 = vmatpush2.msra.mxu0 0.0
      %1433 = vmatprep.subr.mxu0 0.0
      %1434 = vmatpush2.msra.mxu0 0.0
      %1435 = vmatprep.subr.mxu0 0.0
      %1436 = vmatpush2.msra.mxu0 0.0
      %1437 = vmatprep.subr.mxu0 0.0
      %1438 = vmatpush2.msra.mxu0 0.0
      %1439 = vmatprep.subr.mxu0 0.0
      %1440 = vmatpush2.msra.mxu0 0.0
      %1441 = vmatprep.subr.mxu0 0.0
      %1442 = vmatpush2.msra.mxu0 0.0
      %1443 = vmatprep.subr.mxu0 0.0
      %1444 = vmatpush2.msra.mxu0 0.0
      %1445 = vmatprep.subr.mxu0 0.0
      %1446 = vmatpush2.msra.mxu0 0.0
      %1447 = vmatprep.subr.mxu0 0.0
      %1448 = vmatpush2.msra.mxu0 0.0
      %1449 = vmatprep.subr.mxu0 0.0
      %1450 = vmatpush2.msra.mxu0 0.0
      %1451 = vmatprep.subr.mxu0 0.0
      %1452 = vmatpush2.msra.mxu0 0.0
      %1453 = vmatprep.subr.mxu0 0.0
      %1454 = vmatpush2.msra.mxu0 0.0
      %1455 = vmatprep.subr.mxu0 0.0
      %1456 = vmatpush2.msra.mxu0 0.0
      %1457 = vmatprep.subr.mxu0 0.0
      %1458 = vmatpush2.msra.mxu0 0.0
      %1459 = vmatprep.mubr.f32.mxu0 0.0
      %1460 = vmatmul.mubr.f32.gmra.mxu0 %v1382
      %v1461 = vpop.f32.mrf.mxu0
      %v1462 = vadd.f32 0.0, %v1461
      %v1463 = vpop.f32.mrf.mxu0
      %1464 = vmatprep.mubr.f32.mxu0 0.0
      %1465 = vmatmul.mubr.f32.gmra.mxu0 %v1385
      %v1466 = vpop.f32.mrf.mxu0
      %v1467 = vadd.f32 0.0, %v1466
      %v1468 = vpop.f32.mrf.mxu0
      %1469 = vmatprep.mubr.f32.mxu0 0.0
      %1470 = vmatmul.mubr.f32.gmra.mxu0 %v1388
      %v1471 = vpop.f32.mrf.mxu0
      %v1472 = vadd.f32 0.0, %v1471
      %v1473 = vpop.f32.mrf.mxu0
      %1474 = vmatprep.mubr.f32.mxu0 0.0
      %1475 = vmatmul.mubr.f32.gmra.mxu0 %v1391
      %v1476 = vpop.f32.mrf.mxu0
      %v1477 = vadd.f32 0.0, %v1476
      %v1478 = vpop.f32.mrf.mxu0
      %1479 = vdwg.mxu0
      %v1480 = vadd.f32 %v1370, %v1462
      %v1481 = vadd.f32 %v1371, %v1467
      %v1482 = vadd.f32 %v1372, %v1472
      %v1483 = vadd.f32 %v1373, %v1477
      %s1484 = scalar_lea.vmem %s5, 96
      %v1485 = vld [vmem:[%s1484] sm:$0xff]
      %v1486 = vld [vmem:[%s1484 + $0x8] sm:$0xff]
      %v1487 = vld [vmem:[%s1484 + $0x10] sm:$0xff]
      %v1488 = vld [vmem:[%s1484 + $0x18] sm:$0xff]
      %1489 = vrot.lane.b32.xlu0 %v1147, 125
      %v1490 = vpop.permute.xlu0 %1489
      %v1492 = vsel %vm398, %v1485, 0
      %v1495 = vsel %vm398, %v1486, 0
      %v1498 = vsel %vm398, %v1487, 0
      %v1501 = vsel %vm398, %v1488, 0
      %v1503 = vsel %vm411, %v1490, 0
      %1505 = vmatprep.subr.mxu0 0.0
      %1506 = vmatpush1.msra.mxu0 0.0
      %1507 = vmatprep.subr.mxu0 0.0
      %1508 = vmatpush1.msra.mxu0 0.0
      %1509 = vmatprep.subr.mxu0 0.0
      %1510 = vmatpush1.msra.mxu0 0.0
      %1511 = vmatprep.subr.mxu0 0.0
      %1512 = vmatpush1.msra.mxu0 0.0
      %1513 = vmatprep.subr.mxu0 0.0
      %1514 = vmatpush1.msra.mxu0 0.0
      %1515 = vmatprep.subr.mxu0 0.0
      %1516 = vmatpush1.msra.mxu0 0.0
      %1517 = vmatprep.subr.mxu0 0.0
      %1518 = vmatpush1.msra.mxu0 0.0
      %1519 = vmatprep.subr.mxu0 0.0
      %1520 = vmatpush1.msra.mxu0 0.0
      %1521 = vmatprep.subr.mxu0 0.0
      %1522 = vmatpush1.msra.mxu0 0.0
      %1523 = vmatprep.subr.mxu0 0.0
      %1524 = vmatpush1.msra.mxu0 0.0
      %1525 = vmatprep.subr.mxu0 0.0
      %1526 = vmatpush1.msra.mxu0 0.0
      %1527 = vmatprep.subr.mxu0 0.0
      %1528 = vmatpush1.msra.mxu0 0.0
      %1529 = vmatprep.subr.mxu0 0.0
      %1530 = vmatpush1.msra.mxu0 0.0
      %1531 = vmatprep.subr.mxu0 0.0
      %1532 = vmatpush1.msra.mxu0 0.0
      %1533 = vmatprep.subr.mxu0 0.0
      %1534 = vmatpush1.msra.mxu0 0.0
      %1535 = vmatprep.subr.mxu0 0.0
      %1536 = vmatpush1.msra.mxu0 %v1503
      %1537 = vmatprep.subr.mxu0 0.0
      %1538 = vmatpush2.msra.mxu0 0.0
      %1539 = vmatprep.subr.mxu0 0.0
      %1540 = vmatpush2.msra.mxu0 0.0
      %1541 = vmatprep.subr.mxu0 0.0
      %1542 = vmatpush2.msra.mxu0 0.0
      %1543 = vmatprep.subr.mxu0 0.0
      %1544 = vmatpush2.msra.mxu0 0.0
      %1545 = vmatprep.subr.mxu0 0.0
      %1546 = vmatpush2.msra.mxu0 0.0
      %1547 = vmatprep.subr.mxu0 0.0
      %1548 = vmatpush2.msra.mxu0 0.0
      %1549 = vmatprep.subr.mxu0 0.0
      %1550 = vmatpush2.msra.mxu0 0.0
      %1551 = vmatprep.subr.mxu0 0.0
      %1552 = vmatpush2.msra.mxu0 0.0
      %1553 = vmatprep.subr.mxu0 0.0
      %1554 = vmatpush2.msra.mxu0 0.0
      %1555 = vmatprep.subr.mxu0 0.0
      %1556 = vmatpush2.msra.mxu0 0.0
      %1557 = vmatprep.subr.mxu0 0.0
      %1558 = vmatpush2.msra.mxu0 0.0
      %1559 = vmatprep.subr.mxu0 0.0
      %1560 = vmatpush2.msra.mxu0 0.0
      %1561 = vmatprep.subr.mxu0 0.0
      %1562 = vmatpush2.msra.mxu0 0.0
      %1563 = vmatprep.subr.mxu0 0.0
      %1564 = vmatpush2.msra.mxu0 0.0
      %1565 = vmatprep.subr.mxu0 0.0
      %1566 = vmatpush2.msra.mxu0 0.0
      %1567 = vmatprep.subr.mxu0 0.0
      %1568 = vmatpush2.msra.mxu0 0.0
      %1569 = vmatprep.mubr.f32.mxu0 0.0
      %1570 = vmatmul.mubr.f32.gmra.mxu0 %v1492
      %v1571 = vpop.f32.mrf.mxu0
      %v1572 = vadd.f32 0.0, %v1571
      %v1573 = vpop.f32.mrf.mxu0
      %1574 = vmatprep.mubr.f32.mxu0 0.0
      %1575 = vmatmul.mubr.f32.gmra.mxu0 %v1495
      %v1576 = vpop.f32.mrf.mxu0
      %v1577 = vadd.f32 0.0, %v1576
      %v1578 = vpop.f32.mrf.mxu0
      %1579 = vmatprep.mubr.f32.mxu0 0.0
      %1580 = vmatmul.mubr.f32.gmra.mxu0 %v1498
      %v1581 = vpop.f32.mrf.mxu0
      %v1582 = vadd.f32 0.0, %v1581
      %v1583 = vpop.f32.mrf.mxu0
      %1584 = vmatprep.mubr.f32.mxu0 0.0
      %1585 = vmatmul.mubr.f32.gmra.mxu0 %v1501
      %v1586 = vpop.f32.mrf.mxu0
      %v1587 = vadd.f32 0.0, %v1586
      %v1588 = vpop.f32.mrf.mxu0
      %1589 = vdwg.mxu0
      %v1590 = vadd.f32 %v1480, %v1572
      %v1591 = vadd.f32 %v1481, %v1577
      %v1592 = vadd.f32 %v1482, %v1582
      %v1593 = vadd.f32 %v1483, %v1587
      %s1594 = scalar_lea.vmem %s5, 128
      %v1595 = vld [vmem:[%s1594] sm:$0xff]
      %v1596 = vld [vmem:[%s1594 + $0x8] sm:$0xff]
      %v1597 = vld [vmem:[%s1594 + $0x10] sm:$0xff]
      %v1598 = vld [vmem:[%s1594 + $0x18] sm:$0xff]
      %1599 = vrot.lane.b32.xlu0 %v1147, 124
      %v1600 = vpop.permute.xlu0 %1599
      %v1602 = vsel %vm398, %v1595, 0
      %v1605 = vsel %vm398, %v1596, 0
      %v1608 = vsel %vm398, %v1597, 0
      %v1611 = vsel %vm398, %v1598, 0
      %v1613 = vsel %vm411, %v1600, 0
      %1615 = vmatprep.subr.mxu0 0.0
      %1616 = vmatpush1.msra.mxu0 0.0
      %1617 = vmatprep.subr.mxu0 0.0
      %1618 = vmatpush1.msra.mxu0 0.0
      %1619 = vmatprep.subr.mxu0 0.0
      %1620 = vmatpush1.msra.mxu0 0.0
      %1621 = vmatprep.subr.mxu0 0.0
      %1622 = vmatpush1.msra.mxu0 0.0
      %1623 = vmatprep.subr.mxu0 0.0
      %1624 = vmatpush1.msra.mxu0 0.0
      %1625 = vmatprep.subr.mxu0 0.0
      %1626 = vmatpush1.msra.mxu0 0.0
      %1627 = vmatprep.subr.mxu0 0.0
      %1628 = vmatpush1.msra.mxu0 0.0
      %1629 = vmatprep.subr.mxu0 0.0
      %1630 = vmatpush1.msra.mxu0 0.0
      %1631 = vmatprep.subr.mxu0 0.0
      %1632 = vmatpush1.msra.mxu0 0.0
      %1633 = vmatprep.subr.mxu0 0.0
      %1634 = vmatpush1.msra.mxu0 0.0
      %1635 = vmatprep.subr.mxu0 0.0
      %1636 = vmatpush1.msra.mxu0 0.0
      %1637 = vmatprep.subr.mxu0 0.0
      %1638 = vmatpush1.msra.mxu0 0.0
      %1639 = vmatprep.subr.mxu0 0.0
      %1640 = vmatpush1.msra.mxu0 0.0
      %1641 = vmatprep.subr.mxu0 0.0
      %1642 = vmatpush1.msra.mxu0 0.0
      %1643 = vmatprep.subr.mxu0 0.0
      %1644 = vmatpush1.msra.mxu0 0.0
      %1645 = vmatprep.subr.mxu0 0.0
      %1646 = vmatpush1.msra.mxu0 %v1613
      %1647 = vmatprep.subr.mxu0 0.0
      %1648 = vmatpush2.msra.mxu0 0.0
      %1649 = vmatprep.subr.mxu0 0.0
      %1650 = vmatpush2.msra.mxu0 0.0
      %1651 = vmatprep.subr.mxu0 0.0
      %1652 = vmatpush2.msra.mxu0 0.0
      %1653 = vmatprep.subr.mxu0 0.0
      %1654 = vmatpush2.msra.mxu0 0.0
      %1655 = vmatprep.subr.mxu0 0.0
      %1656 = vmatpush2.msra.mxu0 0.0
      %1657 = vmatprep.subr.mxu0 0.0
      %1658 = vmatpush2.msra.mxu0 0.0
      %1659 = vmatprep.subr.mxu0 0.0
      %1660 = vmatpush2.msra.mxu0 0.0
      %1661 = vmatprep.subr.mxu0 0.0
      %1662 = vmatpush2.msra.mxu0 0.0
      %1663 = vmatprep.subr.mxu0 0.0
      %1664 = vmatpush2.msra.mxu0 0.0
      %1665 = vmatprep.subr.mxu0 0.0
      %1666 = vmatpush2.msra.mxu0 0.0
      %1667 = vmatprep.subr.mxu0 0.0
      %1668 = vmatpush2.msra.mxu0 0.0
      %1669 = vmatprep.subr.mxu0 0.0
      %1670 = vmatpush2.msra.mxu0 0.0
      %1671 = vmatprep.subr.mxu0 0.0
      %1672 = vmatpush2.msra.mxu0 0.0
      %1673 = vmatprep.subr.mxu0 0.0
      %1674 = vmatpush2.msra.mxu0 0.0
      %1675 = vmatprep.subr.mxu0 0.0
      %1676 = vmatpush2.msra.mxu0 0.0
      %1677 = vmatprep.subr.mxu0 0.0
      %1678 = vmatpush2.msra.mxu0 0.0
      %1679 = vmatprep.mubr.f32.mxu0 0.0
      %1680 = vmatmul.mubr.f32.gmra.mxu0 %v1602
      %v1681 = vpop.f32.mrf.mxu0
      %v1682 = vadd.f32 0.0, %v1681
      %v1683 = vpop.f32.mrf.mxu0
      %1684 = vmatprep.mubr.f32.mxu0 0.0
      %1685 = vmatmul.mubr.f32.gmra.mxu0 %v1605
      %v1686 = vpop.f32.mrf.mxu0
      %v1687 = vadd.f32 0.0, %v1686
      %v1688 = vpop.f32.mrf.mxu0
      %1689 = vmatprep.mubr.f32.mxu0 0.0
      %1690 = vmatmul.mubr.f32.gmra.mxu0 %v1608
      %v1691 = vpop.f32.mrf.mxu0
      %v1692 = vadd.f32 0.0, %v1691
      %v1693 = vpop.f32.mrf.mxu0
      %1694 = vmatprep.mubr.f32.mxu0 0.0
      %1695 = vmatmul.mubr.f32.gmra.mxu0 %v1611
      %v1696 = vpop.f32.mrf.mxu0
      %v1697 = vadd.f32 0.0, %v1696
      %v1698 = vpop.f32.mrf.mxu0
      %1699 = vdwg.mxu0
      %v1700 = vadd.f32 %v1590, %v1682
      %v1701 = vadd.f32 %v1591, %v1687
      %v1702 = vadd.f32 %v1592, %v1692
      %v1703 = vadd.f32 %v1593, %v1697
      %s1704 = scalar_lea.vmem %s5, 160
      %v1705 = vld [vmem:[%s1704] sm:$0xff]
      %v1706 = vld [vmem:[%s1704 + $0x8] sm:$0xff]
      %v1707 = vld [vmem:[%s1704 + $0x10] sm:$0xff]
      %v1708 = vld [vmem:[%s1704 + $0x18] sm:$0xff]
      %1709 = vrot.lane.b32.xlu0 %v1147, 123
      %v1710 = vpop.permute.xlu0 %1709
      %v1712 = vsel %vm398, %v1705, 0
      %v1715 = vsel %vm398, %v1706, 0
      %v1718 = vsel %vm398, %v1707, 0
      %v1721 = vsel %vm398, %v1708, 0
      %v1723 = vsel %vm411, %v1710, 0
      %1725 = vmatprep.subr.mxu0 0.0
      %1726 = vmatpush1.msra.mxu0 0.0
      %1727 = vmatprep.subr.mxu0 0.0
      %1728 = vmatpush1.msra.mxu0 0.0
      %1729 = vmatprep.subr.mxu0 0.0
      %1730 = vmatpush1.msra.mxu0 0.0
      %1731 = vmatprep.subr.mxu0 0.0
      %1732 = vmatpush1.msra.mxu0 0.0
      %1733 = vmatprep.subr.mxu0 0.0
      %1734 = vmatpush1.msra.mxu0 0.0
      %1735 = vmatprep.subr.mxu0 0.0
      %1736 = vmatpush1.msra.mxu0 0.0
      %1737 = vmatprep.subr.mxu0 0.0
      %1738 = vmatpush1.msra.mxu0 0.0
      %1739 = vmatprep.subr.mxu0 0.0
      %1740 = vmatpush1.msra.mxu0 0.0
      %1741 = vmatprep.subr.mxu0 0.0
      %1742 = vmatpush1.msra.mxu0 0.0
      %1743 = vmatprep.subr.mxu0 0.0
      %1744 = vmatpush1.msra.mxu0 0.0
      %1745 = vmatprep.subr.mxu0 0.0
      %1746 = vmatpush1.msra.mxu0 0.0
      %1747 = vmatprep.subr.mxu0 0.0
      %1748 = vmatpush1.msra.mxu0 0.0
      %1749 = vmatprep.subr.mxu0 0.0
      %1750 = vmatpush1.msra.mxu0 0.0
      %1751 = vmatprep.subr.mxu0 0.0
      %1752 = vmatpush1.msra.mxu0 0.0
      %1753 = vmatprep.subr.mxu0 0.0
      %1754 = vmatpush1.msra.mxu0 0.0
      %1755 = vmatprep.subr.mxu0 0.0
      %1756 = vmatpush1.msra.mxu0 %v1723
      %1757 = vmatprep.subr.mxu0 0.0
      %1758 = vmatpush2.msra.mxu0 0.0
      %1759 = vmatprep.subr.mxu0 0.0
      %1760 = vmatpush2.msra.mxu0 0.0
      %1761 = vmatprep.subr.mxu0 0.0
      %1762 = vmatpush2.msra.mxu0 0.0
      %1763 = vmatprep.subr.mxu0 0.0
      %1764 = vmatpush2.msra.mxu0 0.0
      %1765 = vmatprep.subr.mxu0 0.0
      %1766 = vmatpush2.msra.mxu0 0.0
      %1767 = vmatprep.subr.mxu0 0.0
      %1768 = vmatpush2.msra.mxu0 0.0
      %1769 = vmatprep.subr.mxu0 0.0
      %1770 = vmatpush2.msra.mxu0 0.0
      %1771 = vmatprep.subr.mxu0 0.0
      %1772 = vmatpush2.msra.mxu0 0.0
      %1773 = vmatprep.subr.mxu0 0.0
      %1774 = vmatpush2.msra.mxu0 0.0
      %1775 = vmatprep.subr.mxu0 0.0
      %1776 = vmatpush2.msra.mxu0 0.0
      %1777 = vmatprep.subr.mxu0 0.0
      %1778 = vmatpush2.msra.mxu0 0.0
      %1779 = vmatprep.subr.mxu0 0.0
      %1780 = vmatpush2.msra.mxu0 0.0
      %1781 = vmatprep.subr.mxu0 0.0
      %1782 = vmatpush2.msra.mxu0 0.0
      %1783 = vmatprep.subr.mxu0 0.0
      %1784 = vmatpush2.msra.mxu0 0.0
      %1785 = vmatprep.subr.mxu0 0.0
      %1786 = vmatpush2.msra.mxu0 0.0
      %1787 = vmatprep.subr.mxu0 0.0
      %1788 = vmatpush2.msra.mxu0 0.0
      %1789 = vmatprep.mubr.f32.mxu0 0.0
      %1790 = vmatmul.mubr.f32.gmra.mxu0 %v1712
      %v1791 = vpop.f32.mrf.mxu0
      %v1792 = vadd.f32 0.0, %v1791
      %v1793 = vpop.f32.mrf.mxu0
      %1794 = vmatprep.mubr.f32.mxu0 0.0
      %1795 = vmatmul.mubr.f32.gmra.mxu0 %v1715
      %v1796 = vpop.f32.mrf.mxu0
      %v1797 = vadd.f32 0.0, %v1796
      %v1798 = vpop.f32.mrf.mxu0
      %1799 = vmatprep.mubr.f32.mxu0 0.0
      %1800 = vmatmul.mubr.f32.gmra.mxu0 %v1718
      %v1801 = vpop.f32.mrf.mxu0
      %v1802 = vadd.f32 0.0, %v1801
      %v1803 = vpop.f32.mrf.mxu0
      %1804 = vmatprep.mubr.f32.mxu0 0.0
      %1805 = vmatmul.mubr.f32.gmra.mxu0 %v1721
      %v1806 = vpop.f32.mrf.mxu0
      %v1807 = vadd.f32 0.0, %v1806
      %v1808 = vpop.f32.mrf.mxu0
      %1809 = vdwg.mxu0
      %v1810 = vadd.f32 %v1700, %v1792
      %v1811 = vadd.f32 %v1701, %v1797
      %v1812 = vadd.f32 %v1702, %v1802
      %v1813 = vadd.f32 %v1703, %v1807
      %s1814 = scalar_lea.vmem %s5, 192
      %v1815 = vld [vmem:[%s1814] sm:$0xff]
      %v1816 = vld [vmem:[%s1814 + $0x8] sm:$0xff]
      %v1817 = vld [vmem:[%s1814 + $0x10] sm:$0xff]
      %v1818 = vld [vmem:[%s1814 + $0x18] sm:$0xff]
      %1819 = vrot.lane.b32.xlu0 %v1147, 122
      %v1820 = vpop.permute.xlu0 %1819
      %v1822 = vsel %vm398, %v1815, 0
      %v1825 = vsel %vm398, %v1816, 0
      %v1828 = vsel %vm398, %v1817, 0
      %v1831 = vsel %vm398, %v1818, 0
      %v1833 = vsel %vm411, %v1820, 0
      %1835 = vmatprep.subr.mxu0 0.0
      %1836 = vmatpush1.msra.mxu0 0.0
      %1837 = vmatprep.subr.mxu0 0.0
      %1838 = vmatpush1.msra.mxu0 0.0
      %1839 = vmatprep.subr.mxu0 0.0
      %1840 = vmatpush1.msra.mxu0 0.0
      %1841 = vmatprep.subr.mxu0 0.0
      %1842 = vmatpush1.msra.mxu0 0.0
      %1843 = vmatprep.subr.mxu0 0.0
      %1844 = vmatpush1.msra.mxu0 0.0
      %1845 = vmatprep.subr.mxu0 0.0
      %1846 = vmatpush1.msra.mxu0 0.0
      %1847 = vmatprep.subr.mxu0 0.0
      %1848 = vmatpush1.msra.mxu0 0.0
      %1849 = vmatprep.subr.mxu0 0.0
      %1850 = vmatpush1.msra.mxu0 0.0
      %1851 = vmatprep.subr.mxu0 0.0
      %1852 = vmatpush1.msra.mxu0 0.0
      %1853 = vmatprep.subr.mxu0 0.0
      %1854 = vmatpush1.msra.mxu0 0.0
      %1855 = vmatprep.subr.mxu0 0.0
      %1856 = vmatpush1.msra.mxu0 0.0
      %1857 = vmatprep.subr.mxu0 0.0
      %1858 = vmatpush1.msra.mxu0 0.0
      %1859 = vmatprep.subr.mxu0 0.0
      %1860 = vmatpush1.msra.mxu0 0.0
      %1861 = vmatprep.subr.mxu0 0.0
      %1862 = vmatpush1.msra.mxu0 0.0
      %1863 = vmatprep.subr.mxu0 0.0
      %1864 = vmatpush1.msra.mxu0 0.0
      %1865 = vmatprep.subr.mxu0 0.0
      %1866 = vmatpush1.msra.mxu0 %v1833
      %1867 = vmatprep.subr.mxu0 0.0
      %1868 = vmatpush2.msra.mxu0 0.0
      %1869 = vmatprep.subr.mxu0 0.0
      %1870 = vmatpush2.msra.mxu0 0.0
      %1871 = vmatprep.subr.mxu0 0.0
      %1872 = vmatpush2.msra.mxu0 0.0
      %1873 = vmatprep.subr.mxu0 0.0
      %1874 = vmatpush2.msra.mxu0 0.0
      %1875 = vmatprep.subr.mxu0 0.0
      %1876 = vmatpush2.msra.mxu0 0.0
      %1877 = vmatprep.subr.mxu0 0.0
      %1878 = vmatpush2.msra.mxu0 0.0
      %1879 = vmatprep.subr.mxu0 0.0
      %1880 = vmatpush2.msra.mxu0 0.0
      %1881 = vmatprep.subr.mxu0 0.0
      %1882 = vmatpush2.msra.mxu0 0.0
      %1883 = vmatprep.subr.mxu0 0.0
      %1884 = vmatpush2.msra.mxu0 0.0
      %1885 = vmatprep.subr.mxu0 0.0
      %1886 = vmatpush2.msra.mxu0 0.0
      %1887 = vmatprep.subr.mxu0 0.0
      %1888 = vmatpush2.msra.mxu0 0.0
      %1889 = vmatprep.subr.mxu0 0.0
      %1890 = vmatpush2.msra.mxu0 0.0
      %1891 = vmatprep.subr.mxu0 0.0
      %1892 = vmatpush2.msra.mxu0 0.0
      %1893 = vmatprep.subr.mxu0 0.0
      %1894 = vmatpush2.msra.mxu0 0.0
      %1895 = vmatprep.subr.mxu0 0.0
      %1896 = vmatpush2.msra.mxu0 0.0
      %1897 = vmatprep.subr.mxu0 0.0
      %1898 = vmatpush2.msra.mxu0 0.0
      %1899 = vmatprep.mubr.f32.mxu0 0.0
      %1900 = vmatmul.mubr.f32.gmra.mxu0 %v1822
      %v1901 = vpop.f32.mrf.mxu0
      %v1902 = vadd.f32 0.0, %v1901
      %v1903 = vpop.f32.mrf.mxu0
      %1904 = vmatprep.mubr.f32.mxu0 0.0
      %1905 = vmatmul.mubr.f32.gmra.mxu0 %v1825
      %v1906 = vpop.f32.mrf.mxu0
      %v1907 = vadd.f32 0.0, %v1906
      %v1908 = vpop.f32.mrf.mxu0
      %1909 = vmatprep.mubr.f32.mxu0 0.0
      %1910 = vmatmul.mubr.f32.gmra.mxu0 %v1828
      %v1911 = vpop.f32.mrf.mxu0
      %v1912 = vadd.f32 0.0, %v1911
      %v1913 = vpop.f32.mrf.mxu0
      %1914 = vmatprep.mubr.f32.mxu0 0.0
      %1915 = vmatmul.mubr.f32.gmra.mxu0 %v1831
      %v1916 = vpop.f32.mrf.mxu0
      %v1917 = vadd.f32 0.0, %v1916
      %v1918 = vpop.f32.mrf.mxu0
      %1919 = vdwg.mxu0
      %v1920 = vadd.f32 %v1810, %v1902
      %v1921 = vadd.f32 %v1811, %v1907
      %v1922 = vadd.f32 %v1812, %v1912
      %v1923 = vadd.f32 %v1813, %v1917
      %s1924 = scalar_lea.vmem %s5, 224
      %v1925 = vld [vmem:[%s1924] sm:$0xff]
      %v1926 = vld [vmem:[%s1924 + $0x8] sm:$0xff]
      %v1927 = vld [vmem:[%s1924 + $0x10] sm:$0xff]
      %v1928 = vld [vmem:[%s1924 + $0x18] sm:$0xff]
      %1929 = vrot.lane.b32.xlu0 %v1147, 121
      %v1930 = vpop.permute.xlu0 %1929
      %v1932 = vsel %vm398, %v1925, 0
      %v1935 = vsel %vm398, %v1926, 0
      %v1938 = vsel %vm398, %v1927, 0
      %v1941 = vsel %vm398, %v1928, 0
      %v1943 = vsel %vm411, %v1930, 0
      %1945 = vmatprep.subr.mxu0 0.0
      %1946 = vmatpush1.msra.mxu0 0.0
      %1947 = vmatprep.subr.mxu0 0.0
      %1948 = vmatpush1.msra.mxu0 0.0
      %1949 = vmatprep.subr.mxu0 0.0
      %1950 = vmatpush1.msra.mxu0 0.0
      %1951 = vmatprep.subr.mxu0 0.0
      %1952 = vmatpush1.msra.mxu0 0.0
      %1953 = vmatprep.subr.mxu0 0.0
      %1954 = vmatpush1.msra.mxu0 0.0
      %1955 = vmatprep.subr.mxu0 0.0
      %1956 = vmatpush1.msra.mxu0 0.0
      %1957 = vmatprep.subr.mxu0 0.0
      %1958 = vmatpush1.msra.mxu0 0.0
      %1959 = vmatprep.subr.mxu0 0.0
      %1960 = vmatpush1.msra.mxu0 0.0
      %1961 = vmatprep.subr.mxu0 0.0
      %1962 = vmatpush1.msra.mxu0 0.0
      %1963 = vmatprep.subr.mxu0 0.0
      %1964 = vmatpush1.msra.mxu0 0.0
      %1965 = vmatprep.subr.mxu0 0.0
      %1966 = vmatpush1.msra.mxu0 0.0
      %1967 = vmatprep.subr.mxu0 0.0
      %1968 = vmatpush1.msra.mxu0 0.0
      %1969 = vmatprep.subr.mxu0 0.0
      %1970 = vmatpush1.msra.mxu0 0.0
      %1971 = vmatprep.subr.mxu0 0.0
      %1972 = vmatpush1.msra.mxu0 0.0
      %1973 = vmatprep.subr.mxu0 0.0
      %1974 = vmatpush1.msra.mxu0 0.0
      %1975 = vmatprep.subr.mxu0 0.0
      %1976 = vmatpush1.msra.mxu0 %v1943
      %1977 = vmatprep.subr.mxu0 0.0
      %1978 = vmatpush2.msra.mxu0 0.0
      %1979 = vmatprep.subr.mxu0 0.0
      %1980 = vmatpush2.msra.mxu0 0.0
      %1981 = vmatprep.subr.mxu0 0.0
      %1982 = vmatpush2.msra.mxu0 0.0
      %1983 = vmatprep.subr.mxu0 0.0
      %1984 = vmatpush2.msra.mxu0 0.0
      %1985 = vmatprep.subr.mxu0 0.0
      %1986 = vmatpush2.msra.mxu0 0.0
      %1987 = vmatprep.subr.mxu0 0.0
      %1988 = vmatpush2.msra.mxu0 0.0
      %1989 = vmatprep.subr.mxu0 0.0
      %1990 = vmatpush2.msra.mxu0 0.0
      %1991 = vmatprep.subr.mxu0 0.0
      %1992 = vmatpush2.msra.mxu0 0.0
      %1993 = vmatprep.subr.mxu0 0.0
      %1994 = vmatpush2.msra.mxu0 0.0
      %1995 = vmatprep.subr.mxu0 0.0
      %1996 = vmatpush2.msra.mxu0 0.0
      %1997 = vmatprep.subr.mxu0 0.0
      %1998 = vmatpush2.msra.mxu0 0.0
      %1999 = vmatprep.subr.mxu0 0.0
      %2000 = vmatpush2.msra.mxu0 0.0
      %2001 = vmatprep.subr.mxu0 0.0
      %2002 = vmatpush2.msra.mxu0 0.0
      %2003 = vmatprep.subr.mxu0 0.0
      %2004 = vmatpush2.msra.mxu0 0.0
      %2005 = vmatprep.subr.mxu0 0.0
      %2006 = vmatpush2.msra.mxu0 0.0
      %2007 = vmatprep.subr.mxu0 0.0
      %2008 = vmatpush2.msra.mxu0 0.0
      %2009 = vmatprep.mubr.f32.mxu0 0.0
      %2010 = vmatmul.mubr.f32.gmra.mxu0 %v1932
      %v2011 = vpop.f32.mrf.mxu0
      %v2012 = vadd.f32 0.0, %v2011
      %v2013 = vpop.f32.mrf.mxu0
      %2014 = vmatprep.mubr.f32.mxu0 0.0
      %2015 = vmatmul.mubr.f32.gmra.mxu0 %v1935
      %v2016 = vpop.f32.mrf.mxu0
      %v2017 = vadd.f32 0.0, %v2016
      %v2018 = vpop.f32.mrf.mxu0
      %2019 = vmatprep.mubr.f32.mxu0 0.0
      %2020 = vmatmul.mubr.f32.gmra.mxu0 %v1938
      %v2021 = vpop.f32.mrf.mxu0
      %v2022 = vadd.f32 0.0, %v2021
      %v2023 = vpop.f32.mrf.mxu0
      %2024 = vmatprep.mubr.f32.mxu0 0.0
      %2025 = vmatmul.mubr.f32.gmra.mxu0 %v1941
      %v2026 = vpop.f32.mrf.mxu0
      %v2027 = vadd.f32 0.0, %v2026
      %v2028 = vpop.f32.mrf.mxu0
      %2029 = vdwg.mxu0
      %v2030 = vadd.f32 %v1920, %v2012
      %v2031 = vadd.f32 %v1921, %v2017
      %v2032 = vadd.f32 %v1922, %v2022
      %v2033 = vadd.f32 %v1923, %v2027
      %s2034 = scalar_lea.vmem %s5, 256
      %v2035 = vld [vmem:[%s2034] sm:$0xff]
      %v2036 = vld [vmem:[%s2034 + $0x8] sm:$0xff]
      %v2037 = vld [vmem:[%s2034 + $0x10] sm:$0xff]
      %v2038 = vld [vmem:[%s2034 + $0x18] sm:$0xff]
      %2039 = vrot.lane.b32.xlu0 %v1147, 120
      %v2040 = vpop.permute.xlu0 %2039
      %v2042 = vsel %vm398, %v2035, 0
      %v2045 = vsel %vm398, %v2036, 0
      %v2048 = vsel %vm398, %v2037, 0
      %v2051 = vsel %vm398, %v2038, 0
      %v2053 = vsel %vm411, %v2040, 0
      %2055 = vmatprep.subr.mxu0 0.0
      %2056 = vmatpush1.msra.mxu0 0.0
      %2057 = vmatprep.subr.mxu0 0.0
      %2058 = vmatpush1.msra.mxu0 0.0
      %2059 = vmatprep.subr.mxu0 0.0
      %2060 = vmatpush1.msra.mxu0 0.0
      %2061 = vmatprep.subr.mxu0 0.0
      %2062 = vmatpush1.msra.mxu0 0.0
      %2063 = vmatprep.subr.mxu0 0.0
      %2064 = vmatpush1.msra.mxu0 0.0
      %2065 = vmatprep.subr.mxu0 0.0
      %2066 = vmatpush1.msra.mxu0 0.0
      %2067 = vmatprep.subr.mxu0 0.0
      %2068 = vmatpush1.msra.mxu0 0.0
      %2069 = vmatprep.subr.mxu0 0.0
      %2070 = vmatpush1.msra.mxu0 0.0
      %2071 = vmatprep.subr.mxu0 0.0
      %2072 = vmatpush1.msra.mxu0 0.0
      %2073 = vmatprep.subr.mxu0 0.0
      %2074 = vmatpush1.msra.mxu0 0.0
      %2075 = vmatprep.subr.mxu0 0.0
      %2076 = vmatpush1.msra.mxu0 0.0
      %2077 = vmatprep.subr.mxu0 0.0
      %2078 = vmatpush1.msra.mxu0 0.0
      %2079 = vmatprep.subr.mxu0 0.0
      %2080 = vmatpush1.msra.mxu0 0.0
      %2081 = vmatprep.subr.mxu0 0.0
      %2082 = vmatpush1.msra.mxu0 0.0
      %2083 = vmatprep.subr.mxu0 0.0
      %2084 = vmatpush1.msra.mxu0 0.0
      %2085 = vmatprep.subr.mxu0 0.0
      %2086 = vmatpush1.msra.mxu0 %v2053
      %2087 = vmatprep.subr.mxu0 0.0
      %2088 = vmatpush2.msra.mxu0 0.0
      %2089 = vmatprep.subr.mxu0 0.0
      %2090 = vmatpush2.msra.mxu0 0.0
      %2091 = vmatprep.subr.mxu0 0.0
      %2092 = vmatpush2.msra.mxu0 0.0
      %2093 = vmatprep.subr.mxu0 0.0
      %2094 = vmatpush2.msra.mxu0 0.0
      %2095 = vmatprep.subr.mxu0 0.0
      %2096 = vmatpush2.msra.mxu0 0.0
      %2097 = vmatprep.subr.mxu0 0.0
      %2098 = vmatpush2.msra.mxu0 0.0
      %2099 = vmatprep.subr.mxu0 0.0
      %2100 = vmatpush2.msra.mxu0 0.0
      %2101 = vmatprep.subr.mxu0 0.0
      %2102 = vmatpush2.msra.mxu0 0.0
      %2103 = vmatprep.subr.mxu0 0.0
      %2104 = vmatpush2.msra.mxu0 0.0
      %2105 = vmatprep.subr.mxu0 0.0
      %2106 = vmatpush2.msra.mxu0 0.0
      %2107 = vmatprep.subr.mxu0 0.0
      %2108 = vmatpush2.msra.mxu0 0.0
      %2109 = vmatprep.subr.mxu0 0.0
      %2110 = vmatpush2.msra.mxu0 0.0
      %2111 = vmatprep.subr.mxu0 0.0
      %2112 = vmatpush2.msra.mxu0 0.0
      %2113 = vmatprep.subr.mxu0 0.0
      %2114 = vmatpush2.msra.mxu0 0.0
      %2115 = vmatprep.subr.mxu0 0.0
      %2116 = vmatpush2.msra.mxu0 0.0
      %2117 = vmatprep.subr.mxu0 0.0
      %2118 = vmatpush2.msra.mxu0 0.0
      %2119 = vmatprep.mubr.f32.mxu0 0.0
      %2120 = vmatmul.mubr.f32.gmra.mxu0 %v2042
      %v2121 = vpop.f32.mrf.mxu0
      %v2122 = vadd.f32 0.0, %v2121
      %v2123 = vpop.f32.mrf.mxu0
      %2124 = vmatprep.mubr.f32.mxu0 0.0
      %2125 = vmatmul.mubr.f32.gmra.mxu0 %v2045
      %v2126 = vpop.f32.mrf.mxu0
      %v2127 = vadd.f32 0.0, %v2126
      %v2128 = vpop.f32.mrf.mxu0
      %2129 = vmatprep.mubr.f32.mxu0 0.0
      %2130 = vmatmul.mubr.f32.gmra.mxu0 %v2048
      %v2131 = vpop.f32.mrf.mxu0
      %v2132 = vadd.f32 0.0, %v2131
      %v2133 = vpop.f32.mrf.mxu0
      %2134 = vmatprep.mubr.f32.mxu0 0.0
      %2135 = vmatmul.mubr.f32.gmra.mxu0 %v2051
      %v2136 = vpop.f32.mrf.mxu0
      %v2137 = vadd.f32 0.0, %v2136
      %v2138 = vpop.f32.mrf.mxu0
      %2139 = vdwg.mxu0
      %v2140 = vadd.f32 %v2030, %v2122
      %v2141 = vadd.f32 %v2031, %v2127
      %v2142 = vadd.f32 %v2032, %v2132
      %v2143 = vadd.f32 %v2033, %v2137
      %s2144 = scalar_lea.vmem %s5, 288
      %v2145 = vld [vmem:[%s2144] sm:$0xff]
      %v2146 = vld [vmem:[%s2144 + $0x8] sm:$0xff]
      %v2147 = vld [vmem:[%s2144 + $0x10] sm:$0xff]
      %v2148 = vld [vmem:[%s2144 + $0x18] sm:$0xff]
      %2149 = vrot.lane.b32.xlu0 %v1147, 119
      %v2150 = vpop.permute.xlu0 %2149
      %v2152 = vsel %vm398, %v2145, 0
      %v2155 = vsel %vm398, %v2146, 0
      %v2158 = vsel %vm398, %v2147, 0
      %v2161 = vsel %vm398, %v2148, 0
      %v2163 = vsel %vm411, %v2150, 0
      %2165 = vmatprep.subr.mxu0 0.0
      %2166 = vmatpush1.msra.mxu0 0.0
      %2167 = vmatprep.subr.mxu0 0.0
      %2168 = vmatpush1.msra.mxu0 0.0
      %2169 = vmatprep.subr.mxu0 0.0
      %2170 = vmatpush1.msra.mxu0 0.0
      %2171 = vmatprep.subr.mxu0 0.0
      %2172 = vmatpush1.msra.mxu0 0.0
      %2173 = vmatprep.subr.mxu0 0.0
      %2174 = vmatpush1.msra.mxu0 0.0
      %2175 = vmatprep.subr.mxu0 0.0
      %2176 = vmatpush1.msra.mxu0 0.0
      %2177 = vmatprep.subr.mxu0 0.0
      %2178 = vmatpush1.msra.mxu0 0.0
      %2179 = vmatprep.subr.mxu0 0.0
      %2180 = vmatpush1.msra.mxu0 0.0
      %2181 = vmatprep.subr.mxu0 0.0
      %2182 = vmatpush1.msra.mxu0 0.0
      %2183 = vmatprep.subr.mxu0 0.0
      %2184 = vmatpush1.msra.mxu0 0.0
      %2185 = vmatprep.subr.mxu0 0.0
      %2186 = vmatpush1.msra.mxu0 0.0
      %2187 = vmatprep.subr.mxu0 0.0
      %2188 = vmatpush1.msra.mxu0 0.0
      %2189 = vmatprep.subr.mxu0 0.0
      %2190 = vmatpush1.msra.mxu0 0.0
      %2191 = vmatprep.subr.mxu0 0.0
      %2192 = vmatpush1.msra.mxu0 0.0
      %2193 = vmatprep.subr.mxu0 0.0
      %2194 = vmatpush1.msra.mxu0 0.0
      %2195 = vmatprep.subr.mxu0 0.0
      %2196 = vmatpush1.msra.mxu0 %v2163
      %2197 = vmatprep.subr.mxu0 0.0
      %2198 = vmatpush2.msra.mxu0 0.0
      %2199 = vmatprep.subr.mxu0 0.0
      %2200 = vmatpush2.msra.mxu0 0.0
      %2201 = vmatprep.subr.mxu0 0.0
      %2202 = vmatpush2.msra.mxu0 0.0
      %2203 = vmatprep.subr.mxu0 0.0
      %2204 = vmatpush2.msra.mxu0 0.0
      %2205 = vmatprep.subr.mxu0 0.0
      %2206 = vmatpush2.msra.mxu0 0.0
      %2207 = vmatprep.subr.mxu0 0.0
      %2208 = vmatpush2.msra.mxu0 0.0
      %2209 = vmatprep.subr.mxu0 0.0
      %2210 = vmatpush2.msra.mxu0 0.0
      %2211 = vmatprep.subr.mxu0 0.0
      %2212 = vmatpush2.msra.mxu0 0.0
      %2213 = vmatprep.subr.mxu0 0.0
      %2214 = vmatpush2.msra.mxu0 0.0
      %2215 = vmatprep.subr.mxu0 0.0
      %2216 = vmatpush2.msra.mxu0 0.0
      %2217 = vmatprep.subr.mxu0 0.0
      %2218 = vmatpush2.msra.mxu0 0.0
      %2219 = vmatprep.subr.mxu0 0.0
      %2220 = vmatpush2.msra.mxu0 0.0
      %2221 = vmatprep.subr.mxu0 0.0
      %2222 = vmatpush2.msra.mxu0 0.0
      %2223 = vmatprep.subr.mxu0 0.0
      %2224 = vmatpush2.msra.mxu0 0.0
      %2225 = vmatprep.subr.mxu0 0.0
      %2226 = vmatpush2.msra.mxu0 0.0
      %2227 = vmatprep.subr.mxu0 0.0
      %2228 = vmatpush2.msra.mxu0 0.0
      %2229 = vmatprep.mubr.f32.mxu0 0.0
      %2230 = vmatmul.mubr.f32.gmra.mxu0 %v2152
      %v2231 = vpop.f32.mrf.mxu0
      %v2232 = vadd.f32 0.0, %v2231
      %v2233 = vpop.f32.mrf.mxu0
      %2234 = vmatprep.mubr.f32.mxu0 0.0
      %2235 = vmatmul.mubr.f32.gmra.mxu0 %v2155
      %v2236 = vpop.f32.mrf.mxu0
      %v2237 = vadd.f32 0.0, %v2236
      %v2238 = vpop.f32.mrf.mxu0
      %2239 = vmatprep.mubr.f32.mxu0 0.0
      %2240 = vmatmul.mubr.f32.gmra.mxu0 %v2158
      %v2241 = vpop.f32.mrf.mxu0
      %v2242 = vadd.f32 0.0, %v2241
      %v2243 = vpop.f32.mrf.mxu0
      %2244 = vmatprep.mubr.f32.mxu0 0.0
      %2245 = vmatmul.mubr.f32.gmra.mxu0 %v2161
      %v2246 = vpop.f32.mrf.mxu0
      %v2247 = vadd.f32 0.0, %v2246
      %v2248 = vpop.f32.mrf.mxu0
      %2249 = vdwg.mxu0
      %v2250 = vadd.f32 %v2140, %v2232
      %v2251 = vadd.f32 %v2141, %v2237
      %v2252 = vadd.f32 %v2142, %v2242
      %v2253 = vadd.f32 %v2143, %v2247
      %s2254 = scalar_lea.vmem %s5, 320
      %v2255 = vld [vmem:[%s2254] sm:$0xff]
      %v2256 = vld [vmem:[%s2254 + $0x8] sm:$0xff]
      %v2257 = vld [vmem:[%s2254 + $0x10] sm:$0xff]
      %v2258 = vld [vmem:[%s2254 + $0x18] sm:$0xff]
      %2259 = vrot.lane.b32.xlu0 %v1147, 118
      %v2260 = vpop.permute.xlu0 %2259
      %v2262 = vsel %vm398, %v2255, 0
      %v2265 = vsel %vm398, %v2256, 0
      %v2268 = vsel %vm398, %v2257, 0
      %v2271 = vsel %vm398, %v2258, 0
      %v2273 = vsel %vm411, %v2260, 0
      %2275 = vmatprep.subr.mxu0 0.0
      %2276 = vmatpush1.msra.mxu0 0.0
      %2277 = vmatprep.subr.mxu0 0.0
      %2278 = vmatpush1.msra.mxu0 0.0
      %2279 = vmatprep.subr.mxu0 0.0
      %2280 = vmatpush1.msra.mxu0 0.0
      %2281 = vmatprep.subr.mxu0 0.0
      %2282 = vmatpush1.msra.mxu0 0.0
      %2283 = vmatprep.subr.mxu0 0.0
      %2284 = vmatpush1.msra.mxu0 0.0
      %2285 = vmatprep.subr.mxu0 0.0
      %2286 = vmatpush1.msra.mxu0 0.0
      %2287 = vmatprep.subr.mxu0 0.0
      %2288 = vmatpush1.msra.mxu0 0.0
      %2289 = vmatprep.subr.mxu0 0.0
      %2290 = vmatpush1.msra.mxu0 0.0
      %2291 = vmatprep.subr.mxu0 0.0
      %2292 = vmatpush1.msra.mxu0 0.0
      %2293 = vmatprep.subr.mxu0 0.0
      %2294 = vmatpush1.msra.mxu0 0.0
      %2295 = vmatprep.subr.mxu0 0.0
      %2296 = vmatpush1.msra.mxu0 0.0
      %2297 = vmatprep.subr.mxu0 0.0
      %2298 = vmatpush1.msra.mxu0 0.0
      %2299 = vmatprep.subr.mxu0 0.0
      %2300 = vmatpush1.msra.mxu0 0.0
      %2301 = vmatprep.subr.mxu0 0.0
      %2302 = vmatpush1.msra.mxu0 0.0
      %2303 = vmatprep.subr.mxu0 0.0
      %2304 = vmatpush1.msra.mxu0 0.0
      %2305 = vmatprep.subr.mxu0 0.0
      %2306 = vmatpush1.msra.mxu0 %v2273
      %2307 = vmatprep.subr.mxu0 0.0
      %2308 = vmatpush2.msra.mxu0 0.0
      %2309 = vmatprep.subr.mxu0 0.0
      %2310 = vmatpush2.msra.mxu0 0.0
      %2311 = vmatprep.subr.mxu0 0.0
      %2312 = vmatpush2.msra.mxu0 0.0
      %2313 = vmatprep.subr.mxu0 0.0
      %2314 = vmatpush2.msra.mxu0 0.0
      %2315 = vmatprep.subr.mxu0 0.0
      %2316 = vmatpush2.msra.mxu0 0.0
      %2317 = vmatprep.subr.mxu0 0.0
      %2318 = vmatpush2.msra.mxu0 0.0
      %2319 = vmatprep.subr.mxu0 0.0
      %2320 = vmatpush2.msra.mxu0 0.0
      %2321 = vmatprep.subr.mxu0 0.0
      %2322 = vmatpush2.msra.mxu0 0.0
      %2323 = vmatprep.subr.mxu0 0.0
      %2324 = vmatpush2.msra.mxu0 0.0
      %2325 = vmatprep.subr.mxu0 0.0
      %2326 = vmatpush2.msra.mxu0 0.0
      %2327 = vmatprep.subr.mxu0 0.0
      %2328 = vmatpush2.msra.mxu0 0.0
      %2329 = vmatprep.subr.mxu0 0.0
      %2330 = vmatpush2.msra.mxu0 0.0
      %2331 = vmatprep.subr.mxu0 0.0
      %2332 = vmatpush2.msra.mxu0 0.0
      %2333 = vmatprep.subr.mxu0 0.0
      %2334 = vmatpush2.msra.mxu0 0.0
      %2335 = vmatprep.subr.mxu0 0.0
      %2336 = vmatpush2.msra.mxu0 0.0
      %2337 = vmatprep.subr.mxu0 0.0
      %2338 = vmatpush2.msra.mxu0 0.0
      %2339 = vmatprep.mubr.f32.mxu0 0.0
      %2340 = vmatmul.mubr.f32.gmra.mxu0 %v2262
      %v2341 = vpop.f32.mrf.mxu0
      %v2342 = vadd.f32 0.0, %v2341
      %v2343 = vpop.f32.mrf.mxu0
      %2344 = vmatprep.mubr.f32.mxu0 0.0
      %2345 = vmatmul.mubr.f32.gmra.mxu0 %v2265
      %v2346 = vpop.f32.mrf.mxu0
      %v2347 = vadd.f32 0.0, %v2346
      %v2348 = vpop.f32.mrf.mxu0
      %2349 = vmatprep.mubr.f32.mxu0 0.0
      %2350 = vmatmul.mubr.f32.gmra.mxu0 %v2268
      %v2351 = vpop.f32.mrf.mxu0
      %v2352 = vadd.f32 0.0, %v2351
      %v2353 = vpop.f32.mrf.mxu0
      %2354 = vmatprep.mubr.f32.mxu0 0.0
      %2355 = vmatmul.mubr.f32.gmra.mxu0 %v2271
      %v2356 = vpop.f32.mrf.mxu0
      %v2357 = vadd.f32 0.0, %v2356
      %v2358 = vpop.f32.mrf.mxu0
      %2359 = vdwg.mxu0
      %v2360 = vadd.f32 %v2250, %v2342
      %v2361 = vadd.f32 %v2251, %v2347
      %v2362 = vadd.f32 %v2252, %v2352
      %v2363 = vadd.f32 %v2253, %v2357
      %s2364 = scalar_lea.vmem %s5, 352
      %v2365 = vld [vmem:[%s2364] sm:$0xff]
      %v2366 = vld [vmem:[%s2364 + $0x8] sm:$0xff]
      %v2367 = vld [vmem:[%s2364 + $0x10] sm:$0xff]
      %v2368 = vld [vmem:[%s2364 + $0x18] sm:$0xff]
      %2369 = vrot.lane.b32.xlu0 %v1147, 117
      %v2370 = vpop.permute.xlu0 %2369
      %v2372 = vsel %vm398, %v2365, 0
      %v2375 = vsel %vm398, %v2366, 0
      %v2378 = vsel %vm398, %v2367, 0
      %v2381 = vsel %vm398, %v2368, 0
      %v2383 = vsel %vm411, %v2370, 0
      %2385 = vmatprep.subr.mxu0 0.0
      %2386 = vmatpush1.msra.mxu0 0.0
      %2387 = vmatprep.subr.mxu0 0.0
      %2388 = vmatpush1.msra.mxu0 0.0
      %2389 = vmatprep.subr.mxu0 0.0
      %2390 = vmatpush1.msra.mxu0 0.0
      %2391 = vmatprep.subr.mxu0 0.0
      %2392 = vmatpush1.msra.mxu0 0.0
      %2393 = vmatprep.subr.mxu0 0.0
      %2394 = vmatpush1.msra.mxu0 0.0
      %2395 = vmatprep.subr.mxu0 0.0
      %2396 = vmatpush1.msra.mxu0 0.0
      %2397 = vmatprep.subr.mxu0 0.0
      %2398 = vmatpush1.msra.mxu0 0.0
      %2399 = vmatprep.subr.mxu0 0.0
      %2400 = vmatpush1.msra.mxu0 0.0
      %2401 = vmatprep.subr.mxu0 0.0
      %2402 = vmatpush1.msra.mxu0 0.0
      %2403 = vmatprep.subr.mxu0 0.0
      %2404 = vmatpush1.msra.mxu0 0.0
      %2405 = vmatprep.subr.mxu0 0.0
      %2406 = vmatpush1.msra.mxu0 0.0
      %2407 = vmatprep.subr.mxu0 0.0
      %2408 = vmatpush1.msra.mxu0 0.0
      %2409 = vmatprep.subr.mxu0 0.0
      %2410 = vmatpush1.msra.mxu0 0.0
      %2411 = vmatprep.subr.mxu0 0.0
      %2412 = vmatpush1.msra.mxu0 0.0
      %2413 = vmatprep.subr.mxu0 0.0
      %2414 = vmatpush1.msra.mxu0 0.0
      %2415 = vmatprep.subr.mxu0 0.0
      %2416 = vmatpush1.msra.mxu0 %v2383
      %2417 = vmatprep.subr.mxu0 0.0
      %2418 = vmatpush2.msra.mxu0 0.0
      %2419 = vmatprep.subr.mxu0 0.0
      %2420 = vmatpush2.msra.mxu0 0.0
      %2421 = vmatprep.subr.mxu0 0.0
      %2422 = vmatpush2.msra.mxu0 0.0
      %2423 = vmatprep.subr.mxu0 0.0
      %2424 = vmatpush2.msra.mxu0 0.0
      %2425 = vmatprep.subr.mxu0 0.0
      %2426 = vmatpush2.msra.mxu0 0.0
      %2427 = vmatprep.subr.mxu0 0.0
      %2428 = vmatpush2.msra.mxu0 0.0
      %2429 = vmatprep.subr.mxu0 0.0
      %2430 = vmatpush2.msra.mxu0 0.0
      %2431 = vmatprep.subr.mxu0 0.0
      %2432 = vmatpush2.msra.mxu0 0.0
      %2433 = vmatprep.subr.mxu0 0.0
      %2434 = vmatpush2.msra.mxu0 0.0
      %2435 = vmatprep.subr.mxu0 0.0
      %2436 = vmatpush2.msra.mxu0 0.0
      %2437 = vmatprep.subr.mxu0 0.0
      %2438 = vmatpush2.msra.mxu0 0.0
      %2439 = vmatprep.subr.mxu0 0.0
      %2440 = vmatpush2.msra.mxu0 0.0
      %2441 = vmatprep.subr.mxu0 0.0
      %2442 = vmatpush2.msra.mxu0 0.0
      %2443 = vmatprep.subr.mxu0 0.0
      %2444 = vmatpush2.msra.mxu0 0.0
      %2445 = vmatprep.subr.mxu0 0.0
      %2446 = vmatpush2.msra.mxu0 0.0
      %2447 = vmatprep.subr.mxu0 0.0
      %2448 = vmatpush2.msra.mxu0 0.0
      %2449 = vmatprep.mubr.f32.mxu0 0.0
      %2450 = vmatmul.mubr.f32.gmra.mxu0 %v2372
      %v2451 = vpop.f32.mrf.mxu0
      %v2452 = vadd.f32 0.0, %v2451
      %v2453 = vpop.f32.mrf.mxu0
      %2454 = vmatprep.mubr.f32.mxu0 0.0
      %2455 = vmatmul.mubr.f32.gmra.mxu0 %v2375
      %v2456 = vpop.f32.mrf.mxu0
      %v2457 = vadd.f32 0.0, %v2456
      %v2458 = vpop.f32.mrf.mxu0
      %2459 = vmatprep.mubr.f32.mxu0 0.0
      %2460 = vmatmul.mubr.f32.gmra.mxu0 %v2378
      %v2461 = vpop.f32.mrf.mxu0
      %v2462 = vadd.f32 0.0, %v2461
      %v2463 = vpop.f32.mrf.mxu0
      %2464 = vmatprep.mubr.f32.mxu0 0.0
      %2465 = vmatmul.mubr.f32.gmra.mxu0 %v2381
      %v2466 = vpop.f32.mrf.mxu0
      %v2467 = vadd.f32 0.0, %v2466
      %v2468 = vpop.f32.mrf.mxu0
      %2469 = vdwg.mxu0
      %v2470 = vadd.f32 %v2360, %v2452
      %v2471 = vadd.f32 %v2361, %v2457
      %v2472 = vadd.f32 %v2362, %v2462
      %v2473 = vadd.f32 %v2363, %v2467
      %s2474 = scalar_lea.vmem %s5, 384
      %v2475 = vld [vmem:[%s2474] sm:$0xff]
      %v2476 = vld [vmem:[%s2474 + $0x8] sm:$0xff]
      %v2477 = vld [vmem:[%s2474 + $0x10] sm:$0xff]
      %v2478 = vld [vmem:[%s2474 + $0x18] sm:$0xff]
      %2479 = vrot.lane.b32.xlu0 %v1147, 116
      %v2480 = vpop.permute.xlu0 %2479
      %v2482 = vsel %vm398, %v2475, 0
      %v2485 = vsel %vm398, %v2476, 0
      %v2488 = vsel %vm398, %v2477, 0
      %v2491 = vsel %vm398, %v2478, 0
      %v2493 = vsel %vm411, %v2480, 0
      %2495 = vmatprep.subr.mxu0 0.0
      %2496 = vmatpush1.msra.mxu0 0.0
      %2497 = vmatprep.subr.mxu0 0.0
      %2498 = vmatpush1.msra.mxu0 0.0
      %2499 = vmatprep.subr.mxu0 0.0
      %2500 = vmatpush1.msra.mxu0 0.0
      %2501 = vmatprep.subr.mxu0 0.0
      %2502 = vmatpush1.msra.mxu0 0.0
      %2503 = vmatprep.subr.mxu0 0.0
      %2504 = vmatpush1.msra.mxu0 0.0
      %2505 = vmatprep.subr.mxu0 0.0
      %2506 = vmatpush1.msra.mxu0 0.0
      %2507 = vmatprep.subr.mxu0 0.0
      %2508 = vmatpush1.msra.mxu0 0.0
      %2509 = vmatprep.subr.mxu0 0.0
      %2510 = vmatpush1.msra.mxu0 0.0
      %2511 = vmatprep.subr.mxu0 0.0
      %2512 = vmatpush1.msra.mxu0 0.0
      %2513 = vmatprep.subr.mxu0 0.0
      %2514 = vmatpush1.msra.mxu0 0.0
      %2515 = vmatprep.subr.mxu0 0.0
      %2516 = vmatpush1.msra.mxu0 0.0
      %2517 = vmatprep.subr.mxu0 0.0
      %2518 = vmatpush1.msra.mxu0 0.0
      %2519 = vmatprep.subr.mxu0 0.0
      %2520 = vmatpush1.msra.mxu0 0.0
      %2521 = vmatprep.subr.mxu0 0.0
      %2522 = vmatpush1.msra.mxu0 0.0
      %2523 = vmatprep.subr.mxu0 0.0
      %2524 = vmatpush1.msra.mxu0 0.0
      %2525 = vmatprep.subr.mxu0 0.0
      %2526 = vmatpush1.msra.mxu0 %v2493
      %2527 = vmatprep.subr.mxu0 0.0
      %2528 = vmatpush2.msra.mxu0 0.0
      %2529 = vmatprep.subr.mxu0 0.0
      %2530 = vmatpush2.msra.mxu0 0.0
      %2531 = vmatprep.subr.mxu0 0.0
      %2532 = vmatpush2.msra.mxu0 0.0
      %2533 = vmatprep.subr.mxu0 0.0
      %2534 = vmatpush2.msra.mxu0 0.0
      %2535 = vmatprep.subr.mxu0 0.0
      %2536 = vmatpush2.msra.mxu0 0.0
      %2537 = vmatprep.subr.mxu0 0.0
      %2538 = vmatpush2.msra.mxu0 0.0
      %2539 = vmatprep.subr.mxu0 0.0
      %2540 = vmatpush2.msra.mxu0 0.0
      %2541 = vmatprep.subr.mxu0 0.0
      %2542 = vmatpush2.msra.mxu0 0.0
      %2543 = vmatprep.subr.mxu0 0.0
      %2544 = vmatpush2.msra.mxu0 0.0
      %2545 = vmatprep.subr.mxu0 0.0
      %2546 = vmatpush2.msra.mxu0 0.0
      %2547 = vmatprep.subr.mxu0 0.0
      %2548 = vmatpush2.msra.mxu0 0.0
      %2549 = vmatprep.subr.mxu0 0.0
      %2550 = vmatpush2.msra.mxu0 0.0
      %2551 = vmatprep.subr.mxu0 0.0
      %2552 = vmatpush2.msra.mxu0 0.0
      %2553 = vmatprep.subr.mxu0 0.0
      %2554 = vmatpush2.msra.mxu0 0.0
      %2555 = vmatprep.subr.mxu0 0.0
      %2556 = vmatpush2.msra.mxu0 0.0
      %2557 = vmatprep.subr.mxu0 0.0
      %2558 = vmatpush2.msra.mxu0 0.0
      %2559 = vmatprep.mubr.f32.mxu0 0.0
      %2560 = vmatmul.mubr.f32.gmra.mxu0 %v2482
      %v2561 = vpop.f32.mrf.mxu0
      %v2562 = vadd.f32 0.0, %v2561
      %v2563 = vpop.f32.mrf.mxu0
      %2564 = vmatprep.mubr.f32.mxu0 0.0
      %2565 = vmatmul.mubr.f32.gmra.mxu0 %v2485
      %v2566 = vpop.f32.mrf.mxu0
      %v2567 = vadd.f32 0.0, %v2566
      %v2568 = vpop.f32.mrf.mxu0
      %2569 = vmatprep.mubr.f32.mxu0 0.0
      %2570 = vmatmul.mubr.f32.gmra.mxu0 %v2488
      %v2571 = vpop.f32.mrf.mxu0
      %v2572 = vadd.f32 0.0, %v2571
      %v2573 = vpop.f32.mrf.mxu0
      %2574 = vmatprep.mubr.f32.mxu0 0.0
      %2575 = vmatmul.mubr.f32.gmra.mxu0 %v2491
      %v2576 = vpop.f32.mrf.mxu0
      %v2577 = vadd.f32 0.0, %v2576
      %v2578 = vpop.f32.mrf.mxu0
      %2579 = vdwg.mxu0
      %v2580 = vadd.f32 %v2470, %v2562
      %v2581 = vadd.f32 %v2471, %v2567
      %v2582 = vadd.f32 %v2472, %v2572
      %v2583 = vadd.f32 %v2473, %v2577
      %s2584 = scalar_lea.vmem %s5, 416
      %v2585 = vld [vmem:[%s2584] sm:$0xff]
      %v2586 = vld [vmem:[%s2584 + $0x8] sm:$0xff]
      %v2587 = vld [vmem:[%s2584 + $0x10] sm:$0xff]
      %v2588 = vld [vmem:[%s2584 + $0x18] sm:$0xff]
      %2589 = vrot.lane.b32.xlu0 %v1147, 115
      %v2590 = vpop.permute.xlu0 %2589
      %v2592 = vsel %vm398, %v2585, 0
      %v2595 = vsel %vm398, %v2586, 0
      %v2598 = vsel %vm398, %v2587, 0
      %v2601 = vsel %vm398, %v2588, 0
      %v2603 = vsel %vm411, %v2590, 0
      %2605 = vmatprep.subr.mxu0 0.0
      %2606 = vmatpush1.msra.mxu0 0.0
      %2607 = vmatprep.subr.mxu0 0.0
      %2608 = vmatpush1.msra.mxu0 0.0
      %2609 = vmatprep.subr.mxu0 0.0
      %2610 = vmatpush1.msra.mxu0 0.0
      %2611 = vmatprep.subr.mxu0 0.0
      %2612 = vmatpush1.msra.mxu0 0.0
      %2613 = vmatprep.subr.mxu0 0.0
      %2614 = vmatpush1.msra.mxu0 0.0
      %2615 = vmatprep.subr.mxu0 0.0
      %2616 = vmatpush1.msra.mxu0 0.0
      %2617 = vmatprep.subr.mxu0 0.0
      %2618 = vmatpush1.msra.mxu0 0.0
      %2619 = vmatprep.subr.mxu0 0.0
      %2620 = vmatpush1.msra.mxu0 0.0
      %2621 = vmatprep.subr.mxu0 0.0
      %2622 = vmatpush1.msra.mxu0 0.0
      %2623 = vmatprep.subr.mxu0 0.0
      %2624 = vmatpush1.msra.mxu0 0.0
      %2625 = vmatprep.subr.mxu0 0.0
      %2626 = vmatpush1.msra.mxu0 0.0
      %2627 = vmatprep.subr.mxu0 0.0
      %2628 = vmatpush1.msra.mxu0 0.0
      %2629 = vmatprep.subr.mxu0 0.0
      %2630 = vmatpush1.msra.mxu0 0.0
      %2631 = vmatprep.subr.mxu0 0.0
      %2632 = vmatpush1.msra.mxu0 0.0
      %2633 = vmatprep.subr.mxu0 0.0
      %2634 = vmatpush1.msra.mxu0 0.0
      %2635 = vmatprep.subr.mxu0 0.0
      %2636 = vmatpush1.msra.mxu0 %v2603
      %2637 = vmatprep.subr.mxu0 0.0
      %2638 = vmatpush2.msra.mxu0 0.0
      %2639 = vmatprep.subr.mxu0 0.0
      %2640 = vmatpush2.msra.mxu0 0.0
      %2641 = vmatprep.subr.mxu0 0.0
      %2642 = vmatpush2.msra.mxu0 0.0
      %2643 = vmatprep.subr.mxu0 0.0
      %2644 = vmatpush2.msra.mxu0 0.0
      %2645 = vmatprep.subr.mxu0 0.0
      %2646 = vmatpush2.msra.mxu0 0.0
      %2647 = vmatprep.subr.mxu0 0.0
      %2648 = vmatpush2.msra.mxu0 0.0
      %2649 = vmatprep.subr.mxu0 0.0
      %2650 = vmatpush2.msra.mxu0 0.0
      %2651 = vmatprep.subr.mxu0 0.0
      %2652 = vmatpush2.msra.mxu0 0.0
      %2653 = vmatprep.subr.mxu0 0.0
      %2654 = vmatpush2.msra.mxu0 0.0
      %2655 = vmatprep.subr.mxu0 0.0
      %2656 = vmatpush2.msra.mxu0 0.0
      %2657 = vmatprep.subr.mxu0 0.0
      %2658 = vmatpush2.msra.mxu0 0.0
      %2659 = vmatprep.subr.mxu0 0.0
      %2660 = vmatpush2.msra.mxu0 0.0
      %2661 = vmatprep.subr.mxu0 0.0
      %2662 = vmatpush2.msra.mxu0 0.0
      %2663 = vmatprep.subr.mxu0 0.0
      %2664 = vmatpush2.msra.mxu0 0.0
      %2665 = vmatprep.subr.mxu0 0.0
      %2666 = vmatpush2.msra.mxu0 0.0
      %2667 = vmatprep.subr.mxu0 0.0
      %2668 = vmatpush2.msra.mxu0 0.0
      %2669 = vmatprep.mubr.f32.mxu0 0.0
      %2670 = vmatmul.mubr.f32.gmra.mxu0 %v2592
      %v2671 = vpop.f32.mrf.mxu0
      %v2672 = vadd.f32 0.0, %v2671
      %v2673 = vpop.f32.mrf.mxu0
      %2674 = vmatprep.mubr.f32.mxu0 0.0
      %2675 = vmatmul.mubr.f32.gmra.mxu0 %v2595
      %v2676 = vpop.f32.mrf.mxu0
      %v2677 = vadd.f32 0.0, %v2676
      %v2678 = vpop.f32.mrf.mxu0
      %2679 = vmatprep.mubr.f32.mxu0 0.0
      %2680 = vmatmul.mubr.f32.gmra.mxu0 %v2598
      %v2681 = vpop.f32.mrf.mxu0
      %v2682 = vadd.f32 0.0, %v2681
      %v2683 = vpop.f32.mrf.mxu0
      %2684 = vmatprep.mubr.f32.mxu0 0.0
      %2685 = vmatmul.mubr.f32.gmra.mxu0 %v2601
      %v2686 = vpop.f32.mrf.mxu0
      %v2687 = vadd.f32 0.0, %v2686
      %v2688 = vpop.f32.mrf.mxu0
      %2689 = vdwg.mxu0
      %v2690 = vadd.f32 %v2580, %v2672
      %v2691 = vadd.f32 %v2581, %v2677
      %v2692 = vadd.f32 %v2582, %v2682
      %v2693 = vadd.f32 %v2583, %v2687
      %s2694 = scalar_lea.vmem %s5, 448
      %v2695 = vld [vmem:[%s2694] sm:$0xff]
      %v2696 = vld [vmem:[%s2694 + $0x8] sm:$0xff]
      %v2697 = vld [vmem:[%s2694 + $0x10] sm:$0xff]
      %v2698 = vld [vmem:[%s2694 + $0x18] sm:$0xff]
      %2699 = vrot.lane.b32.xlu0 %v1147, 114
      %v2700 = vpop.permute.xlu0 %2699
      %v2702 = vsel %vm398, %v2695, 0
      %v2705 = vsel %vm398, %v2696, 0
      %v2708 = vsel %vm398, %v2697, 0
      %v2711 = vsel %vm398, %v2698, 0
      %v2713 = vsel %vm411, %v2700, 0
      %2715 = vmatprep.subr.mxu0 0.0
      %2716 = vmatpush1.msra.mxu0 0.0
      %2717 = vmatprep.subr.mxu0 0.0
      %2718 = vmatpush1.msra.mxu0 0.0
      %2719 = vmatprep.subr.mxu0 0.0
      %2720 = vmatpush1.msra.mxu0 0.0
      %2721 = vmatprep.subr.mxu0 0.0
      %2722 = vmatpush1.msra.mxu0 0.0
      %2723 = vmatprep.subr.mxu0 0.0
      %2724 = vmatpush1.msra.mxu0 0.0
      %2725 = vmatprep.subr.mxu0 0.0
      %2726 = vmatpush1.msra.mxu0 0.0
      %2727 = vmatprep.subr.mxu0 0.0
      %2728 = vmatpush1.msra.mxu0 0.0
      %2729 = vmatprep.subr.mxu0 0.0
      %2730 = vmatpush1.msra.mxu0 0.0
      %2731 = vmatprep.subr.mxu0 0.0
      %2732 = vmatpush1.msra.mxu0 0.0
      %2733 = vmatprep.subr.mxu0 0.0
      %2734 = vmatpush1.msra.mxu0 0.0
      %2735 = vmatprep.subr.mxu0 0.0
      %2736 = vmatpush1.msra.mxu0 0.0
      %2737 = vmatprep.subr.mxu0 0.0
      %2738 = vmatpush1.msra.mxu0 0.0
      %2739 = vmatprep.subr.mxu0 0.0
      %2740 = vmatpush1.msra.mxu0 0.0
      %2741 = vmatprep.subr.mxu0 0.0
      %2742 = vmatpush1.msra.mxu0 0.0
      %2743 = vmatprep.subr.mxu0 0.0
      %2744 = vmatpush1.msra.mxu0 0.0
      %2745 = vmatprep.subr.mxu0 0.0
      %2746 = vmatpush1.msra.mxu0 %v2713
      %2747 = vmatprep.subr.mxu0 0.0
      %2748 = vmatpush2.msra.mxu0 0.0
      %2749 = vmatprep.subr.mxu0 0.0
      %2750 = vmatpush2.msra.mxu0 0.0
      %2751 = vmatprep.subr.mxu0 0.0
      %2752 = vmatpush2.msra.mxu0 0.0
      %2753 = vmatprep.subr.mxu0 0.0
      %2754 = vmatpush2.msra.mxu0 0.0
      %2755 = vmatprep.subr.mxu0 0.0
      %2756 = vmatpush2.msra.mxu0 0.0
      %2757 = vmatprep.subr.mxu0 0.0
      %2758 = vmatpush2.msra.mxu0 0.0
      %2759 = vmatprep.subr.mxu0 0.0
      %2760 = vmatpush2.msra.mxu0 0.0
      %2761 = vmatprep.subr.mxu0 0.0
      %2762 = vmatpush2.msra.mxu0 0.0
      %2763 = vmatprep.subr.mxu0 0.0
      %2764 = vmatpush2.msra.mxu0 0.0
      %2765 = vmatprep.subr.mxu0 0.0
      %2766 = vmatpush2.msra.mxu0 0.0
      %2767 = vmatprep.subr.mxu0 0.0
      %2768 = vmatpush2.msra.mxu0 0.0
      %2769 = vmatprep.subr.mxu0 0.0
      %2770 = vmatpush2.msra.mxu0 0.0
      %2771 = vmatprep.subr.mxu0 0.0
      %2772 = vmatpush2.msra.mxu0 0.0
      %2773 = vmatprep.subr.mxu0 0.0
      %2774 = vmatpush2.msra.mxu0 0.0
      %2775 = vmatprep.subr.mxu0 0.0
      %2776 = vmatpush2.msra.mxu0 0.0
      %2777 = vmatprep.subr.mxu0 0.0
      %2778 = vmatpush2.msra.mxu0 0.0
      %2779 = vmatprep.mubr.f32.mxu0 0.0
      %2780 = vmatmul.mubr.f32.gmra.mxu0 %v2702
      %v2781 = vpop.f32.mrf.mxu0
      %v2782 = vadd.f32 0.0, %v2781
      %v2783 = vpop.f32.mrf.mxu0
      %2784 = vmatprep.mubr.f32.mxu0 0.0
      %2785 = vmatmul.mubr.f32.gmra.mxu0 %v2705
      %v2786 = vpop.f32.mrf.mxu0
      %v2787 = vadd.f32 0.0, %v2786
      %v2788 = vpop.f32.mrf.mxu0
      %2789 = vmatprep.mubr.f32.mxu0 0.0
      %2790 = vmatmul.mubr.f32.gmra.mxu0 %v2708
      %v2791 = vpop.f32.mrf.mxu0
      %v2792 = vadd.f32 0.0, %v2791
      %v2793 = vpop.f32.mrf.mxu0
      %2794 = vmatprep.mubr.f32.mxu0 0.0
      %2795 = vmatmul.mubr.f32.gmra.mxu0 %v2711
      %v2796 = vpop.f32.mrf.mxu0
      %v2797 = vadd.f32 0.0, %v2796
      %v2798 = vpop.f32.mrf.mxu0
      %2799 = vdwg.mxu0
      %v2800 = vadd.f32 %v2690, %v2782
      %v2801 = vadd.f32 %v2691, %v2787
      %v2802 = vadd.f32 %v2692, %v2792
      %v2803 = vadd.f32 %v2693, %v2797
      %s2804 = scalar_lea.vmem %s5, 480
      %v2805 = vld [vmem:[%s2804] sm:$0xff]
      %v2806 = vld [vmem:[%s2804 + $0x8] sm:$0xff]
      %v2807 = vld [vmem:[%s2804 + $0x10] sm:$0xff]
      %v2808 = vld [vmem:[%s2804 + $0x18] sm:$0xff]
      %2809 = vrot.lane.b32.xlu0 %v1147, 113
      %v2810 = vpop.permute.xlu0 %2809
      %v2812 = vsel %vm398, %v2805, 0
      %v2815 = vsel %vm398, %v2806, 0
      %v2818 = vsel %vm398, %v2807, 0
      %v2821 = vsel %vm398, %v2808, 0
      %v2823 = vsel %vm411, %v2810, 0
      %2825 = vmatprep.subr.mxu0 0.0
      %2826 = vmatpush1.msra.mxu0 0.0
      %2827 = vmatprep.subr.mxu0 0.0
      %2828 = vmatpush1.msra.mxu0 0.0
      %2829 = vmatprep.subr.mxu0 0.0
      %2830 = vmatpush1.msra.mxu0 0.0
      %2831 = vmatprep.subr.mxu0 0.0
      %2832 = vmatpush1.msra.mxu0 0.0
      %2833 = vmatprep.subr.mxu0 0.0
      %2834 = vmatpush1.msra.mxu0 0.0
      %2835 = vmatprep.subr.mxu0 0.0
      %2836 = vmatpush1.msra.mxu0 0.0
      %2837 = vmatprep.subr.mxu0 0.0
      %2838 = vmatpush1.msra.mxu0 0.0
      %2839 = vmatprep.subr.mxu0 0.0
      %2840 = vmatpush1.msra.mxu0 0.0
      %2841 = vmatprep.subr.mxu0 0.0
      %2842 = vmatpush1.msra.mxu0 0.0
      %2843 = vmatprep.subr.mxu0 0.0
      %2844 = vmatpush1.msra.mxu0 0.0
      %2845 = vmatprep.subr.mxu0 0.0
      %2846 = vmatpush1.msra.mxu0 0.0
      %2847 = vmatprep.subr.mxu0 0.0
      %2848 = vmatpush1.msra.mxu0 0.0
      %2849 = vmatprep.subr.mxu0 0.0
      %2850 = vmatpush1.msra.mxu0 0.0
      %2851 = vmatprep.subr.mxu0 0.0
      %2852 = vmatpush1.msra.mxu0 0.0
      %2853 = vmatprep.subr.mxu0 0.0
      %2854 = vmatpush1.msra.mxu0 0.0
      %2855 = vmatprep.subr.mxu0 0.0
      %2856 = vmatpush1.msra.mxu0 %v2823
      %2857 = vmatprep.subr.mxu0 0.0
      %2858 = vmatpush2.msra.mxu0 0.0
      %2859 = vmatprep.subr.mxu0 0.0
      %2860 = vmatpush2.msra.mxu0 0.0
      %2861 = vmatprep.subr.mxu0 0.0
      %2862 = vmatpush2.msra.mxu0 0.0
      %2863 = vmatprep.subr.mxu0 0.0
      %2864 = vmatpush2.msra.mxu0 0.0
      %2865 = vmatprep.subr.mxu0 0.0
      %2866 = vmatpush2.msra.mxu0 0.0
      %2867 = vmatprep.subr.mxu0 0.0
      %2868 = vmatpush2.msra.mxu0 0.0
      %2869 = vmatprep.subr.mxu0 0.0
      %2870 = vmatpush2.msra.mxu0 0.0
      %2871 = vmatprep.subr.mxu0 0.0
      %2872 = vmatpush2.msra.mxu0 0.0
      %2873 = vmatprep.subr.mxu0 0.0
      %2874 = vmatpush2.msra.mxu0 0.0
      %2875 = vmatprep.subr.mxu0 0.0
      %2876 = vmatpush2.msra.mxu0 0.0
      %2877 = vmatprep.subr.mxu0 0.0
      %2878 = vmatpush2.msra.mxu0 0.0
      %2879 = vmatprep.subr.mxu0 0.0
      %2880 = vmatpush2.msra.mxu0 0.0
      %2881 = vmatprep.subr.mxu0 0.0
      %2882 = vmatpush2.msra.mxu0 0.0
      %2883 = vmatprep.subr.mxu0 0.0
      %2884 = vmatpush2.msra.mxu0 0.0
      %2885 = vmatprep.subr.mxu0 0.0
      %2886 = vmatpush2.msra.mxu0 0.0
      %2887 = vmatprep.subr.mxu0 0.0
      %2888 = vmatpush2.msra.mxu0 0.0
      %2889 = vmatprep.mubr.f32.mxu0 0.0
      %2890 = vmatmul.mubr.f32.gmra.mxu0 %v2812
      %v2891 = vpop.f32.mrf.mxu0
      %v2892 = vadd.f32 0.0, %v2891
      %v2893 = vpop.f32.mrf.mxu0
      %2894 = vmatprep.mubr.f32.mxu0 0.0
      %2895 = vmatmul.mubr.f32.gmra.mxu0 %v2815
      %v2896 = vpop.f32.mrf.mxu0
      %v2897 = vadd.f32 0.0, %v2896
      %v2898 = vpop.f32.mrf.mxu0
      %2899 = vmatprep.mubr.f32.mxu0 0.0
      %2900 = vmatmul.mubr.f32.gmra.mxu0 %v2818
      %v2901 = vpop.f32.mrf.mxu0
      %v2902 = vadd.f32 0.0, %v2901
      %v2903 = vpop.f32.mrf.mxu0
      %2904 = vmatprep.mubr.f32.mxu0 0.0
      %2905 = vmatmul.mubr.f32.gmra.mxu0 %v2821
      %v2906 = vpop.f32.mrf.mxu0
      %v2907 = vadd.f32 0.0, %v2906
      %v2908 = vpop.f32.mrf.mxu0
      %2909 = vdwg.mxu0
      %v2910 = vadd.f32 %v2800, %v2892
      %v2911 = vadd.f32 %v2801, %v2897
      %v2912 = vadd.f32 %v2802, %v2902
      %v2913 = vadd.f32 %v2803, %v2907
      %2915 = vset.pattern.permute.xlu0 0
      %2916 = vperm.xlu0 %2915, %v2910
      %v2917 = vpop.permute.xlu0 %2916
      %2920 = vset.pattern.permute.xlu0 0
      %2921 = vperm.xlu0 %2920, %v2911
      %v2922 = vpop.permute.xlu0 %2921
      %2925 = vset.pattern.permute.xlu0 0
      %2926 = vperm.xlu0 %2925, %v2912
      %v2927 = vpop.permute.xlu0 %2926
      %2930 = vset.pattern.permute.xlu0 0
      %2931 = vperm.xlu0 %2930, %v2913
      %v2932 = vpop.permute.xlu0 %2931
      %v2934 = vadd.f32 %v1138, %v2917
      %v2935 = vadd.f32 %v1139, %v2922
      %v2936 = vadd.f32 %v1140, %v2927
      %v2937 = vadd.f32 %v1141, %v2932
      %v2938 = vld [vmem:[%s7] sm:$0xff]
      %v2939 = vld [vmem:[%s7 + $0x8] sm:$0xff]
      %v2940 = vld [vmem:[%s7 + $0x10] sm:$0xff]
      %v2941 = vld [vmem:[%s7 + $0x18] sm:$0xff]
      %v2942 = vld [vmem:[%s8] sm:$0xff]
      %v2943 = vld [vmem:[%s8 + $0x8] sm:$0xff]
      %v2944 = vld [vmem:[%s8 + $0x10] sm:$0xff]
      %v2945 = vld [vmem:[%s8 + $0x18] sm:$0xff]
      %v2946 = vmul.f32 %v2938, %v2938
      %v2947 = vmul.f32 %v2939, %v2939
      %v2948 = vmul.f32 %v2940, %v2940
      %v2949 = vmul.f32 %v2941, %v2941
      %v2950 = vsel %vm800, %v2946, 0.0
      %2951 = vadd.xlane.f32.xlu0 %v2950
      %v2952 = vpop.xlane.xlu0 %2951
      %v2953 = vsel %vm800, %v2947, 0.0
      %2954 = vadd.xlane.f32.xlu0 %v2953
      %v2955 = vpop.xlane.xlu0 %2954
      %v2956 = vsel %vm800, %v2948, 0.0
      %2957 = vadd.xlane.f32.xlu0 %v2956
      %v2958 = vpop.xlane.xlu0 %2957
      %v2959 = vsel %vm800, %v2949, 0.0
      %2960 = vadd.xlane.f32.xlu0 %v2959
      %v2961 = vpop.xlane.xlu0 %2960
      %v2962 = vrsqrt.pop %v2952
      %v2963 = vmul.f32 %v2952, %v2962
      %vm2964 = vcmp.eq.f32.partialorder %v2952, inf
      %v2965 = vsel %vm2964, %v2952, %v2963
      %vm2966 = vcmp.eq.f32.partialorder %v2952, 0.0
      %v2967 = vand.u32 %v2952, 2147483648
      %v2968 = vsel %vm2966, %v2967, %v2965
      %v2969 = vrsqrt.pop %v2955
      %v2970 = vmul.f32 %v2955, %v2969
      %vm2971 = vcmp.eq.f32.partialorder %v2955, inf
      %v2972 = vsel %vm2971, %v2955, %v2970
      %vm2973 = vcmp.eq.f32.partialorder %v2955, 0.0
      %v2974 = vand.u32 %v2955, 2147483648
      %v2975 = vsel %vm2973, %v2974, %v2972
      %v2976 = vrsqrt.pop %v2958
      %v2977 = vmul.f32 %v2958, %v2976
      %vm2978 = vcmp.eq.f32.partialorder %v2958, inf
      %v2979 = vsel %vm2978, %v2958, %v2977
      %vm2980 = vcmp.eq.f32.partialorder %v2958, 0.0
      %v2981 = vand.u32 %v2958, 2147483648
      %v2982 = vsel %vm2980, %v2981, %v2979
      %v2983 = vrsqrt.pop %v2961
      %v2984 = vmul.f32 %v2961, %v2983
      %vm2985 = vcmp.eq.f32.partialorder %v2961, inf
      %v2986 = vsel %vm2985, %v2961, %v2984
      %vm2987 = vcmp.eq.f32.partialorder %v2961, 0.0
      %v2988 = vand.u32 %v2961, 2147483648
      %v2989 = vsel %vm2987, %v2988, %v2986
      %v2990 = vrcp.pop %v2968
      %v2991 = vmul.f32 %v2942, %v2990
      %v2992 = vrcp.pop %v2975
      %v2993 = vmul.f32 %v2943, %v2992
      %v2994 = vrcp.pop %v2982
      %v2995 = vmul.f32 %v2944, %v2994
      %v2996 = vrcp.pop %v2989
      %v2997 = vmul.f32 %v2945, %v2996
      %2999 = vset.pattern.permute.xlu0 0
      %3000 = vperm.xlu0 %2999, %v2991
      %v3001 = vpop.permute.xlu0 %3000
      %3004 = vset.pattern.permute.xlu0 0
      %3005 = vperm.xlu0 %3004, %v2993
      %v3006 = vpop.permute.xlu0 %3005
      %3009 = vset.pattern.permute.xlu0 0
      %3010 = vperm.xlu0 %3009, %v2995
      %v3011 = vpop.permute.xlu0 %3010
      %3014 = vset.pattern.permute.xlu0 0
      %3015 = vperm.xlu0 %3014, %v2997
      %v3016 = vpop.permute.xlu0 %3015
      %v3018 = vmul.f32 %v2938, %v3001
      %v3019 = vmul.f32 %v2939, %v3006
      %v3020 = vmul.f32 %v2940, %v3011
      %v3021 = vmul.f32 %v2941, %v3016
      %v3022 = vld [vmem:[%s9] sm:$0xff]
      %v3023 = vld [vmem:[%s9 + $0x8] sm:$0xff]
      %v3024 = vld [vmem:[%s9 + $0x10] sm:$0xff]
      %v3025 = vld [vmem:[%s9 + $0x18] sm:$0xff]
      %3027 = vset.pattern.permute.xlu0 0
      %3028 = vperm.xlu0 %3027, %v3022
      %v3029 = vpop.permute.xlu0 %3028
      %3032 = vset.pattern.permute.xlu0 0
      %3033 = vperm.xlu0 %3032, %v3023
      %v3034 = vpop.permute.xlu0 %3033
      %3037 = vset.pattern.permute.xlu0 0
      %3038 = vperm.xlu0 %3037, %v3024
      %v3039 = vpop.permute.xlu0 %3038
      %3042 = vset.pattern.permute.xlu0 0
      %3043 = vperm.xlu0 %3042, %v3025
      %v3044 = vpop.permute.xlu0 %3043
      %v3047 = vsel %vm800, %v3018, 0
      %v3050 = vsel %vm800, %v3019, 0
      %v3053 = vsel %vm800, %v3020, 0
      %v3056 = vsel %vm800, %v3021, 0
      %3058 = vmatprep.subr.mxu0 0.0
      %3059 = vmatpush1.msra.mxu0 0.0
      %3060 = vmatprep.subr.mxu0 0.0
      %3061 = vmatpush1.msra.mxu0 0.0
      %3062 = vmatprep.subr.mxu0 0.0
      %3063 = vmatpush1.msra.mxu0 0.0
      %3064 = vmatprep.subr.mxu0 0.0
      %3065 = vmatpush1.msra.mxu0 0.0
      %3066 = vmatprep.subr.mxu0 0.0
      %3067 = vmatpush1.msra.mxu0 0.0
      %3068 = vmatprep.subr.mxu0 0.0
      %3069 = vmatpush1.msra.mxu0 0.0
      %3070 = vmatprep.subr.mxu0 0.0
      %3071 = vmatpush1.msra.mxu0 0.0
      %3072 = vmatprep.subr.mxu0 0.0
      %3073 = vmatpush1.msra.mxu0 0.0
      %3074 = vmatprep.subr.mxu0 0.0
      %3075 = vmatpush1.msra.mxu0 0.0
      %3076 = vmatprep.subr.mxu0 0.0
      %3077 = vmatpush1.msra.mxu0 0.0
      %3078 = vmatprep.subr.mxu0 0.0
      %3079 = vmatpush1.msra.mxu0 0.0
      %3080 = vmatprep.subr.mxu0 0.0
      %3081 = vmatpush1.msra.mxu0 0.0
      %3082 = vmatprep.subr.mxu0 0.0
      %3083 = vmatpush1.msra.mxu0 %v2937
      %3084 = vmatprep.subr.mxu0 0.0
      %3085 = vmatpush1.msra.mxu0 %v2936
      %3086 = vmatprep.subr.mxu0 0.0
      %3087 = vmatpush1.msra.mxu0 %v2935
      %3088 = vmatprep.subr.mxu0 0.0
      %3089 = vmatpush1.msra.mxu0 %v2934
      %3090 = vmatprep.subr.mxu0 0.0
      %3091 = vmatpush2.msra.mxu0 0.0
      %3092 = vmatprep.subr.mxu0 0.0
      %3093 = vmatpush2.msra.mxu0 0.0
      %3094 = vmatprep.subr.mxu0 0.0
      %3095 = vmatpush2.msra.mxu0 0.0
      %3096 = vmatprep.subr.mxu0 0.0
      %3097 = vmatpush2.msra.mxu0 0.0
      %3098 = vmatprep.subr.mxu0 0.0
      %3099 = vmatpush2.msra.mxu0 0.0
      %3100 = vmatprep.subr.mxu0 0.0
      %3101 = vmatpush2.msra.mxu0 0.0
      %3102 = vmatprep.subr.mxu0 0.0
      %3103 = vmatpush2.msra.mxu0 0.0
      %3104 = vmatprep.subr.mxu0 0.0
      %3105 = vmatpush2.msra.mxu0 0.0
      %3106 = vmatprep.subr.mxu0 0.0
      %3107 = vmatpush2.msra.mxu0 0.0
      %3108 = vmatprep.subr.mxu0 0.0
      %3109 = vmatpush2.msra.mxu0 0.0
      %3110 = vmatprep.subr.mxu0 0.0
      %3111 = vmatpush2.msra.mxu0 0.0
      %3112 = vmatprep.subr.mxu0 0.0
      %3113 = vmatpush2.msra.mxu0 0.0
      %3114 = vmatprep.subr.mxu0 0.0
      %3115 = vmatpush2.msra.mxu0 0.0
      %3116 = vmatprep.subr.mxu0 0.0
      %3117 = vmatpush2.msra.mxu0 0.0
      %3118 = vmatprep.subr.mxu0 0.0
      %3119 = vmatpush2.msra.mxu0 0.0
      %3120 = vmatprep.subr.mxu0 0.0
      %3121 = vmatpush2.msra.mxu0 0.0
      %3122 = vmatprep.mubr.f32.mxu0 0.0
      %3123 = vmatmul.mubr.f32.gmra.mxu0 %v3047
      %v3124 = vpop.f32.mrf.mxu0
      %v3125 = vadd.f32 %v3029, %v3124
      %v3126 = vpop.f32.mrf.mxu0
      %3127 = vmatprep.mubr.f32.mxu0 0.0
      %3128 = vmatmul.mubr.f32.gmra.mxu0 %v3050
      %v3129 = vpop.f32.mrf.mxu0
      %v3130 = vadd.f32 %v3034, %v3129
      %v3131 = vpop.f32.mrf.mxu0
      %3132 = vmatprep.mubr.f32.mxu0 0.0
      %3133 = vmatmul.mubr.f32.gmra.mxu0 %v3053
      %v3134 = vpop.f32.mrf.mxu0
      %v3135 = vadd.f32 %v3039, %v3134
      %v3136 = vpop.f32.mrf.mxu0
      %3137 = vmatprep.mubr.f32.mxu0 0.0
      %3138 = vmatmul.mubr.f32.gmra.mxu0 %v3056
      %v3139 = vpop.f32.mrf.mxu0
      %v3140 = vadd.f32 %v3044, %v3139
      %v3141 = vpop.f32.mrf.mxu0
      %3142 = vdwg.mxu0
      %vm3143 = vcmp.gt.f32.partialorder %v3125, 0.0
      %vm3144 = vcmp.gt.f32.partialorder %v3130, 0.0
      %vm3145 = vcmp.gt.f32.partialorder %v3135, 0.0
      %vm3146 = vcmp.gt.f32.partialorder %v3140, 0.0
      %v3147 = vmul.f32 %v3125, 1.442695
      %v3148 = vpow.pop %v3147
      %v3149 = vmul.f32 %v3130, 1.442695
      %v3150 = vpow.pop %v3149
      %v3151 = vmul.f32 %v3135, 1.442695
      %v3152 = vpow.pop %v3151
      %v3153 = vmul.f32 %v3140, 1.442695
      %v3154 = vpow.pop %v3153
      %v3155 = vsub.f32 %v3148, 1.0
      %v3156 = vsub.f32 %v3150, 1.0
      %v3157 = vsub.f32 %v3152, 1.0
      %v3158 = vsub.f32 %v3154, 1.0
      %v3159 = vsel %vm3143, %v3125, %v3155
      %v3160 = vsel %vm3144, %v3130, %v3156
      %v3161 = vsel %vm3145, %v3135, %v3157
      %v3162 = vsel %vm3146, %v3140, %v3158
      %vm3163 = vcmask 64512
      %3164 = vst.msk [vmem:[%s356] sm:$0xff] %vm3163, %v3159
      %3165 = vst.msk [vmem:[%s356 + $0x8] sm:$0xff] %vm3163, %v3160
      %3166 = vst.msk [vmem:[%s356 + $0x10] sm:$0xff] %vm3163, %v3161
      %3167 = vst.msk [vmem:[%s356 + $0x18] sm:$0xff] %vm3163, %v3162
      %p3168 = scmp.lt.s32.totalorder %s21, 1
      %s3169 = scalar_select %p3168, %s21, 1
      %s3170 = smul.addr %s3169, 4
      %s3171 = smul.addr %s3170, 8
      %s3172 = scalar_lea.vmem %s10, %s3171
      // Predicated region
      $region61: #{tpu_custom_call.1} parent=59 // pred_check
        %p3173 = pneg %p254
      $region62: #{tpu_custom_call.1} parent=59 // pred_check_branch
        %3175 = sbr.rel (%p3173) target = $region64
      $region63: #{tpu_custom_call.1} parent=59 // pred_region
        _
      $region64: #{tpu_custom_call.1} parent=59 // pred_fallthru
        _
    $region60: #{tpu_custom_call.1} parent=5 // pred_fallthru
      _
    %p3176 = scmp.le.s32.totalorder 2, %s16
    // Predicated region
    $region65: #{tpu_custom_call.1} parent=5 // pred_check
      %p3177 = pneg %p3176
    $region66: #{tpu_custom_call.1} parent=5 // pred_check_branch
      %3179 = sbr.rel (%p3177) target = $region68
    $region67: #{tpu_custom_call.1} parent=5 // pred_region
      %s3180 = ssub.s32 %s16, 2
      // Predicated region
      $region69: #{tpu_custom_call.1} parent=67 // pred_check
        %p3181 = pneg %p260
      $region70: #{tpu_custom_call.1} parent=67 // pred_check_branch
        %3183 = sbr.rel (%p3181) target = $region72
      $region71: #{tpu_custom_call.1} parent=67 // pred_region
        %p3184 = scmp.lt.s32.totalorder %s22, 1
        %s3185 = scalar_select %p3184, %s22, 1
        %s3186 = smul.addr %s3185, 4
        %s3187 = smul.addr %s3186, 8
        %s3188 = scalar_lea.vmem %s10, %s3187
      $region72: #{tpu_custom_call.1} parent=67 // pred_fallthru
        _
    $region68: #{tpu_custom_call.1} parent=5 // pred_fallthru
      _
  $region6: #{tpu_custom_call.1} parent=0 // loop_footer
    %s20 = sadd.s32 1, %s16
  $region7: #{tpu_custom_call.1} parent=0 // loop_footer_branch
    %15 = sbr.rel target = $region3
  $region8: #{tpu_custom_call.1} parent=0 // loop_exit
    _

</llo_original>
